<compile_context>
chip_gen: v6e
topology: v6e:2x2x1
jax: 0.10.0
libtpu: 0.0.40
codegen_flags: <defaults>
</compile_context>

<pallas_src>
import functools

import jax
import jax.numpy as jnp
from jax.experimental import pallas as pl
from jax.experimental.pallas import tpu as pltpu


def _round_up(n, m):
    return ((n + m - 1) // m) * m


def standard_nn_kernel(x_ref, w1_ref, b1_ref, w2_ref, b2_ref, o_ref):
    # fc1: (TB, D) @ (D, Hp) on the MXU, f32 accumulation; bias + ReLU in f32.
    h = jnp.dot(x_ref[...], w1_ref[...],
                preferred_element_type=jnp.float32) + b1_ref[...]
    h = jnp.maximum(h, 0.0)                                   # (TB, Hp)

    # fc2: output width is 1, so instead of an (Hp, 1) MXU matmul (1/128 MXU
    # output columns + masked 1-wide stores) do a VPU multiply + lane reduction
    # and store the result lane-dense as a (1, TB) row.
    z = jnp.sum(h * w2_ref[...], axis=-1)                     # (TB,)
    z = jnp.reshape(z, (1, z.shape[0])) + b2_ref[0]           # (1, TB)
    o_ref[...] = jax.nn.sigmoid(z).astype(o_ref.dtype)


@functools.partial(jax.jit, static_argnames=("tb", "io_dtype"))
def standard_nn_forward(x, w1, b1, w2, b2, *, tb=512, io_dtype=None):
    """sigmoid(relu(x @ w1 + b1) @ w2 + b2), identical to StandardNN.forward.

    x: (B, D)   w1: (D, H)   b1: (H,)/(1, H)   w2: (H, 1)   b2: scalar/(1,)/(1,1)
    """
    B, D = x.shape
    H = w1.shape[1]
    Hp = _round_up(H, 128)          # full-lane hidden width (MXU granule)
    Bp = _round_up(B, tb)
    n_tiles = Bp // tb

    # Zero padding is numerically inert: padded w1 columns + zero b1 entries
    # give relu(0) = 0, and the matching w2 entries are zero so fc2 is unchanged.
    x_p = jnp.zeros((Bp, D), jnp.float32).at[:B, :].set(x.astype(jnp.float32))
    w1_p = jnp.zeros((D, Hp), jnp.float32).at[:, :H].set(w1.astype(jnp.float32))
    b1_p = jnp.zeros((1, Hp), jnp.float32).at[:, :H].set(
        jnp.reshape(b1, (1, H)).astype(jnp.float32))
    w2_p = jnp.zeros((1, Hp), jnp.float32).at[:, :H].set(
        jnp.reshape(w2, (1, H)).astype(jnp.float32))
    b2_p = jnp.reshape(b2, (1,)).astype(jnp.float32)

    if io_dtype is not None:        # e.g. jnp.bfloat16 on v6e/v7x (mem-bound)
        x_p = x_p.astype(io_dtype)
        w1_p = w1_p.astype(io_dtype)
    in_dsize = jnp.dtype(x_p.dtype).itemsize

    out = pl.pallas_call(
        standard_nn_kernel,
        out_shape=jax.ShapeDtypeStruct((1, Bp), jnp.float32),
        grid_spec=pl.GridSpec(
            grid=(n_tiles,),
            in_specs=[
                pl.BlockSpec((tb, D), lambda i: (i, 0)),     # x: batch-tiled
                pl.BlockSpec((D, Hp), lambda i: (0, 0)),     # w1: VMEM-resident
                pl.BlockSpec((1, Hp), lambda i: (0, 0)),     # b1: VMEM-resident
                pl.BlockSpec((1, Hp), lambda i: (0, 0)),     # w2 row: resident
                pl.BlockSpec(memory_space=pltpu.SMEM),       # b2: scalar in SMEM
            ],
            out_specs=pl.BlockSpec((1, tb), lambda i: (0, i)),  # lane-dense out
        ),
        compiler_params=pltpu.CompilerParams(
            # "parallel" batch axis -> sharded across both TCs on v7x; harmless
            # on v5e/v6e.  VMEM use (double-buffered x/out tiles + resident
            # weights) is a few hundred KiB, far under the 64 MiB v7x budget,
            # so no vmem_limit_bytes override is needed.
            dimension_semantics=("parallel",)),
        cost_estimate=pl.CostEstimate(
            flops=2 * Bp * D * Hp + 2 * Bp * Hp,
            transcendentals=Bp,
            bytes_accessed=(Bp * D + D * Hp + 2 * Hp) * in_dsize + Bp * 4),
    )(x_p, w1_p, b1_p, w2_p, b2_p)

    return out.reshape(Bp)[:B].reshape(B, 1)


def standard_nn_reference(x, w1, b1, w2, b2):
    h = jnp.maximum(jnp.dot(x, w1) + jnp.reshape(b1, (1, -1)), 0.0)
    return jax.nn.sigmoid(jnp.dot(h, w2) + jnp.reshape(b2, (1, 1)))


if __name__ == "__main__":
    # Shapes consistent with StandardNN: batch=8, input_dim=32, hidden_dim=50.
    # (At this tiny size plain jnp-in-jit would match the kernel; the Pallas
    # structure pays off once the batch is large enough to pipeline.)
    B, D, H = 8, 32, 50
    key = jax.random.PRNGKey(0)
    kx, kw1, kb1, kw2, kb2 = jax.random.split(key, 5)

    x = jax.random.normal(kx, (B, D), dtype=jnp.float32)

    # nn.Linear-style uniform(-1/sqrt(fan_in), 1/sqrt(fan_in)) init.
    lim1 = 1.0 / jnp.sqrt(jnp.float32(D))
    lim2 = 1.0 / jnp.sqrt(jnp.float32(H))
    w1 = jax.random.uniform(kw1, (D, H), jnp.float32, -lim1, lim1)
    b1 = jax.random.uniform(kb1, (H,), jnp.float32, -lim1, lim1)
    w2 = jax.random.uniform(kw2, (H, 1), jnp.float32, -lim2, lim2)
    b2 = jax.random.uniform(kb2, (1,), jnp.float32, -lim2, lim2)

    out = standard_nn_forward(x, w1, b1, w2, b2)
    out = jax.block_until_ready(out)

    ref = standard_nn_reference(x, w1, b1, w2, b2)
    assert out.shape == (B, 1)
    assert jnp.allclose(out, ref, atol=1e-5, rtol=1e-5), (
        f"max abs err = {jnp.max(jnp.abs(out - ref))}")

    print("KERNEL_OK")
</pallas_src>

<mosaic_0001>
module attributes {stable_mosaic.version = 11 : i64} {
  func.func @standard_nn_kernel(%arg0: i32, %arg1: memref<512x32xf32, #tpu.memory_space<vmem>>, %arg2: memref<32x128xf32, #tpu.memory_space<vmem>>, %arg3: memref<1x128xf32, #tpu.memory_space<vmem>>, %arg4: memref<1x128xf32, #tpu.memory_space<vmem>>, %arg5: memref<1xf32, #tpu.memory_space<smem>>, %arg6: memref<1x512xf32, #tpu.memory_space<vmem>>) attributes {dimension_semantics = [#tpu.dimension_semantics<parallel>], iteration_bounds = array<i64: 1>, scalar_prefetch = 0 : i64, scratch_operands = 0 : i64, tpu.core_type = #tpu.core_type<tc>, window_params = [{transform_indices = @transform_0, window_bounds = array<i64: 512, 32>}, {pipeline_mode = #tpu.pipeline_mode<synchronous>, transform_indices = @transform_1, window_bounds = array<i64: 32, 128>}, {pipeline_mode = #tpu.pipeline_mode<synchronous>, transform_indices = @transform_2, window_bounds = array<i64: 1, 128>}, {pipeline_mode = #tpu.pipeline_mode<synchronous>, transform_indices = @transform_3, window_bounds = array<i64: 1, 128>}, {transform_indices = @transform_4, window_bounds = array<i64: 1>}, {transform_indices = @transform_5, window_bounds = array<i64: 1, 512>}]} {
    %c0 = arith.constant 0 : index
    %c0_0 = arith.constant 0 : index
    %0 = vector.load %arg1[%c0, %c0_0] : memref<512x32xf32, #tpu.memory_space<vmem>>, vector<512x32xf32>
    %c0_1 = arith.constant 0 : index
    %c0_2 = arith.constant 0 : index
    %1 = vector.load %arg2[%c0_1, %c0_2] : memref<32x128xf32, #tpu.memory_space<vmem>>, vector<32x128xf32>
    %cst = arith.constant dense<0.000000e+00> : vector<512x128xf32>
    %2 = tpu.matmul %0, %1, %cst {dimension_numbers = #tpu.dot_dimension_numbers<[1], [0], [0], [1], [0, 0, 1, 1], [], []>} : vector<512x32xf32>, vector<32x128xf32>, vector<512x128xf32> -> vector<512x128xf32>
    %c0_3 = arith.constant 0 : index
    %c0_4 = arith.constant 0 : index
    %3 = vector.load %arg3[%c0_3, %c0_4] : memref<1x128xf32, #tpu.memory_space<vmem>>, vector<1x128xf32>
    %4 = vector.broadcast %3 : vector<1x128xf32> to vector<512x128xf32>
    %5 = arith.addf %2, %4 : vector<512x128xf32>
    %cst_5 = arith.constant 0.000000e+00 : f32
    %6 = vector.broadcast %cst_5 : f32 to vector<512x128xf32>
    %7 = arith.maximumf %5, %6 : vector<512x128xf32>
    %c0_6 = arith.constant 0 : index
    %c0_7 = arith.constant 0 : index
    %8 = vector.load %arg4[%c0_6, %c0_7] : memref<1x128xf32, #tpu.memory_space<vmem>>, vector<1x128xf32>
    %9 = vector.broadcast %8 : vector<1x128xf32> to vector<512x128xf32>
    %10 = arith.mulf %7, %9 : vector<512x128xf32>
    %cst_8 = arith.constant dense<0.000000e+00> : vector<512xf32>
    %11 = vector.multi_reduction <add>, %10, %cst_8 [1] : vector<512x128xf32> to vector<512xf32>
    %12 = vector.shape_cast %11 : vector<512xf32> to vector<1x512xf32>
    %c0_9 = arith.constant 0 : index
    %13 = memref.load %arg5[%c0_9] : memref<1xf32, #tpu.memory_space<smem>>
    %14 = vector.broadcast %13 : f32 to vector<1x512xf32>
    %15 = arith.addf %12, %14 : vector<1x512xf32>
    %16 = arith.negf %15 : vector<1x512xf32>
    %17 = math.exp %16 : vector<1x512xf32>
    %cst_10 = arith.constant 1.000000e+00 : f32
    %18 = vector.broadcast %cst_10 : f32 to vector<1x512xf32>
    %19 = arith.addf %18, %17 : vector<1x512xf32>
    %20 = arith.divf %18, %19 : vector<1x512xf32>
    %c0_11 = arith.constant 0 : index
    %c0_12 = arith.constant 0 : index
    %21 = vector.load %arg6[%c0_11, %c0_12] : memref<1x512xf32, #tpu.memory_space<vmem>>, vector<1x512xf32>
    tpu.vector_store %arg6[%c0_11, %c0_12], %20 {strides = array<i32>} : memref<1x512xf32, #tpu.memory_space<vmem>>, vector<1x512xf32>,
    return
  }
  func.func @transform_0(%arg0: i32) -> (i32, i32) {
    %c0_i32 = arith.constant 0 : i32
    %c0_i32_0 = arith.constant 0 : i32
    return %arg0, %c0_i32 : i32, i32
  }
  func.func @transform_1(%arg0: i32) -> (i32, i32) {
    %c0_i32 = arith.constant 0 : i32
    %c0_i32_0 = arith.constant 0 : i32
    %c0_i32_1 = arith.constant 0 : i32
    return %c0_i32, %c0_i32_0 : i32, i32
  }
  func.func @transform_2(%arg0: i32) -> (i32, i32) {
    %c0_i32 = arith.constant 0 : i32
    %c0_i32_0 = arith.constant 0 : i32
    %c0_i32_1 = arith.constant 0 : i32
    return %c0_i32, %c0_i32_0 : i32, i32
  }
  func.func @transform_3(%arg0: i32) -> (i32, i32) {
    %c0_i32 = arith.constant 0 : i32
    %c0_i32_0 = arith.constant 0 : i32
    %c0_i32_1 = arith.constant 0 : i32
    return %c0_i32, %c0_i32_0 : i32, i32
  }
  func.func @transform_4(%arg0: i32) -> i32 {
    %c0_i32 = arith.constant 0 : i32
    %c0_i32_0 = arith.constant 0 : i32
    return %c0_i32 : i32
  }
  func.func @transform_5(%arg0: i32) -> (i32, i32) {
    %c0_i32 = arith.constant 0 : i32
    %c0_i32_0 = arith.constant 0 : i32
    return %c0_i32, %arg0 : i32, i32
  }
}

</mosaic_0001>

<llo_original>
// kernel: standard_nn_forward.1
$region0: #{standard_nn_forward.1}
  #allocation0 [shape = 'u32[]', space=smem, size = 0x4, offset = 0x4, fixed_abs, tag = 'smem constant byte address 0x4 - core index']
  #allocation1 [shape = 'u32[144,128]{1,0:T(1,128)}', space=vmem, size = 0x12000, scoped, tag = 'internal scratch']
  #allocation2 [shape = 'f32[1]{0:T(128)S(6)}', space=smem, size = 0x200, scoped, tag = 'scoped memory for standard_nn_forward.1']
  %s0 = inlined_call_operand.vmem [shape: f32[512,32], index: 0, kind: input, shape index: {}]
  %s1 = inlined_call_operand.vmem [shape: f32[32,128], index: 1, kind: input, shape index: {}]
  %s2 = inlined_call_operand.vmem [shape: f32[1,128], index: 2, kind: input, shape index: {}]
  %s3 = inlined_call_operand.vmem [shape: f32[1,128], index: 3, kind: input, shape index: {}]
  %s4 = inlined_call_operand.<no memory space> [shape: f32[1], index: 4, kind: input, shape index: {}]
  %s5 = inlined_call_operand.vmem [shape: f32[1,512], index: 5, kind: output, shape index: {}]
  %s6 = sld [smem:[#allocation0]]
  $region30: #{standard_nn_forward.1} parent=0
    _
  %s8 = ssub.s32 1, %s6
  %s9 = scalar_select 0, %s8, %s6
  %10 = sst [smem:[#allocation2]] %s4
  // Predicated region
  $region2: #{standard_nn_forward.1} parent=0 // pred_check
    _
  $region3: #{standard_nn_forward.1} parent=0 // pred_check_branch
    %12 = sbr.rel (0) target = $region5
  $region4: #{standard_nn_forward.1} parent=0 // pred_region
    _
  $region5: #{standard_nn_forward.1} parent=0 // pred_fallthru
    _
  // Predicated region
  $region6: #{standard_nn_forward.1} parent=0 // pred_check
    _
  $region7: #{standard_nn_forward.1} parent=0 // pred_check_branch
    %14 = sbr.rel (0) target = $region9
  $region8: #{standard_nn_forward.1} parent=0 // pred_region
    _
  $region9: #{standard_nn_forward.1} parent=0 // pred_fallthru
    _
  // Predicated region
  $region10: #{standard_nn_forward.1} parent=0 // pred_check
    _
  $region11: #{standard_nn_forward.1} parent=0 // pred_check_branch
    %16 = sbr.rel (0) target = $region13
  $region12: #{standard_nn_forward.1} parent=0 // pred_region
    _
  $region13: #{standard_nn_forward.1} parent=0 // pred_fallthru
    _
  // Predicated region
  $region14: #{standard_nn_forward.1} parent=0 // pred_check
    _
  $region15: #{standard_nn_forward.1} parent=0 // pred_check_branch
    %18 = sbr.rel (0) target = $region17
  $region16: #{standard_nn_forward.1} parent=0 // pred_region
    _
  $region17: #{standard_nn_forward.1} parent=0 // pred_fallthru
    _
  // Predicated region
  $region18: #{standard_nn_forward.1} parent=0 // pred_check
    _
  $region19: #{standard_nn_forward.1} parent=0 // pred_check_branch
    %20 = sbr.rel (0) target = $region21
  $region20: #{standard_nn_forward.1} parent=0 // pred_region
    _
  $region21: #{standard_nn_forward.1} parent=0 // pred_fallthru
    _
  %v21 = vld [vmem:[%s0] sm:$0xff]
  %v22 = vld [vmem:[%s0 + $0x8] sm:$0xff]
  %v23 = vld [vmem:[%s0 + $0x10] sm:$0xff]
  %v24 = vld [vmem:[%s0 + $0x18] sm:$0xff]
  %v25 = vld [vmem:[%s0 + $0x20] sm:$0xff]
  %v26 = vld [vmem:[%s0 + $0x28] sm:$0xff]
  %v27 = vld [vmem:[%s0 + $0x30] sm:$0xff]
  %v28 = vld [vmem:[%s0 + $0x38] sm:$0xff]
  %v29 = vld [vmem:[%s0 + $0x40] sm:$0xff]
  %v30 = vld [vmem:[%s0 + $0x48] sm:$0xff]
  %v31 = vld [vmem:[%s0 + $0x50] sm:$0xff]
  %v32 = vld [vmem:[%s0 + $0x58] sm:$0xff]
  %v33 = vld [vmem:[%s0 + $0x60] sm:$0xff]
  %v34 = vld [vmem:[%s0 + $0x68] sm:$0xff]
  %v35 = vld [vmem:[%s0 + $0x70] sm:$0xff]
  %v36 = vld [vmem:[%s0 + $0x78] sm:$0xff]
  %v37 = vld [vmem:[%s0 + $0x80] sm:$0xff]
  %v38 = vld [vmem:[%s0 + $0x88] sm:$0xff]
  %v39 = vld [vmem:[%s0 + $0x90] sm:$0xff]
  %v40 = vld [vmem:[%s0 + $0x98] sm:$0xff]
  %v41 = vld [vmem:[%s0 + $0xa0] sm:$0xff]
  %v42 = vld [vmem:[%s0 + $0xa8] sm:$0xff]
  %v43 = vld [vmem:[%s0 + $0xb0] sm:$0xff]
  %v44 = vld [vmem:[%s0 + $0xb8] sm:$0xff]
  %v45 = vld [vmem:[%s0 + $0xc0] sm:$0xff]
  %v46 = vld [vmem:[%s0 + $0xc8] sm:$0xff]
  %v47 = vld [vmem:[%s0 + $0xd0] sm:$0xff]
  %v48 = vld [vmem:[%s0 + $0xd8] sm:$0xff]
  %v49 = vld [vmem:[%s0 + $0xe0] sm:$0xff]
  %v50 = vld [vmem:[%s0 + $0xe8] sm:$0xff]
  %v51 = vld [vmem:[%s0 + $0xf0] sm:$0xff]
  %v52 = vld [vmem:[%s0 + $0xf8] sm:$0xff]
  %v53 = vld [vmem:[%s0 + $0x100] sm:$0xff]
  %v54 = vld [vmem:[%s0 + $0x108] sm:$0xff]
  %v55 = vld [vmem:[%s0 + $0x110] sm:$0xff]
  %v56 = vld [vmem:[%s0 + $0x118] sm:$0xff]
  %v57 = vld [vmem:[%s0 + $0x120] sm:$0xff]
  %v58 = vld [vmem:[%s0 + $0x128] sm:$0xff]
  %v59 = vld [vmem:[%s0 + $0x130] sm:$0xff]
  %v60 = vld [vmem:[%s0 + $0x138] sm:$0xff]
  %v61 = vld [vmem:[%s0 + $0x140] sm:$0xff]
  %v62 = vld [vmem:[%s0 + $0x148] sm:$0xff]
  %v63 = vld [vmem:[%s0 + $0x150] sm:$0xff]
  %v64 = vld [vmem:[%s0 + $0x158] sm:$0xff]
  %v65 = vld [vmem:[%s0 + $0x160] sm:$0xff]
  %v66 = vld [vmem:[%s0 + $0x168] sm:$0xff]
  %v67 = vld [vmem:[%s0 + $0x170] sm:$0xff]
  %v68 = vld [vmem:[%s0 + $0x178] sm:$0xff]
  %v69 = vld [vmem:[%s0 + $0x180] sm:$0xff]
  %v70 = vld [vmem:[%s0 + $0x188] sm:$0xff]
  %v71 = vld [vmem:[%s0 + $0x190] sm:$0xff]
  %v72 = vld [vmem:[%s0 + $0x198] sm:$0xff]
  %v73 = vld [vmem:[%s0 + $0x1a0] sm:$0xff]
  %v74 = vld [vmem:[%s0 + $0x1a8] sm:$0xff]
  %v75 = vld [vmem:[%s0 + $0x1b0] sm:$0xff]
  %v76 = vld [vmem:[%s0 + $0x1b8] sm:$0xff]
  %v77 = vld [vmem:[%s0 + $0x1c0] sm:$0xff]
  %v78 = vld [vmem:[%s0 + $0x1c8] sm:$0xff]
  %v79 = vld [vmem:[%s0 + $0x1d0] sm:$0xff]
  %v80 = vld [vmem:[%s0 + $0x1d8] sm:$0xff]
  %v81 = vld [vmem:[%s0 + $0x1e0] sm:$0xff]
  %v82 = vld [vmem:[%s0 + $0x1e8] sm:$0xff]
  %v83 = vld [vmem:[%s0 + $0x1f0] sm:$0xff]
  %v84 = vld [vmem:[%s0 + $0x1f8] sm:$0xff]
  %v85 = vld [vmem:[%s1] sm:$0xff]
  %v86 = vld [vmem:[%s1 + $0x8] sm:$0xff]
  %v87 = vld [vmem:[%s1 + $0x10] sm:$0xff]
  %v88 = vld [vmem:[%s1 + $0x18] sm:$0xff]
  %v89 = vld [vmem:[%s2] sm:$0x1]
  %v91 = vlaneseq
  %v92 = vshrl.u32 %v91, 7
  %v93 = vsub.s32 0, %v92
  %v94 = vrot.slane %v89, %v93
  %vm96 = vcmask 261120
  %v98 = vsel %vm96, %v21, 0
  %v101 = vsel %vm96, %v22, 0
  %v104 = vsel %vm96, %v23, 0
  %v107 = vsel %vm96, %v24, 0
  %v110 = vsel %vm96, %v25, 0
  %v113 = vsel %vm96, %v26, 0
  %v116 = vsel %vm96, %v27, 0
  %v119 = vsel %vm96, %v28, 0
  %v122 = vsel %vm96, %v29, 0
  %v125 = vsel %vm96, %v30, 0
  %v128 = vsel %vm96, %v31, 0
  %v131 = vsel %vm96, %v32, 0
  %v134 = vsel %vm96, %v33, 0
  %v137 = vsel %vm96, %v34, 0
  %v140 = vsel %vm96, %v35, 0
  %v143 = vsel %vm96, %v36, 0
  %v146 = vsel %vm96, %v37, 0
  %v149 = vsel %vm96, %v38, 0
  %v152 = vsel %vm96, %v39, 0
  %v155 = vsel %vm96, %v40, 0
  %v158 = vsel %vm96, %v41, 0
  %v161 = vsel %vm96, %v42, 0
  %v164 = vsel %vm96, %v43, 0
  %v167 = vsel %vm96, %v44, 0
  %v170 = vsel %vm96, %v45, 0
  %v173 = vsel %vm96, %v46, 0
  %v176 = vsel %vm96, %v47, 0
  %v179 = vsel %vm96, %v48, 0
  %v182 = vsel %vm96, %v49, 0
  %v185 = vsel %vm96, %v50, 0
  %v188 = vsel %vm96, %v51, 0
  %v191 = vsel %vm96, %v52, 0
  %v194 = vsel %vm96, %v53, 0
  %v197 = vsel %vm96, %v54, 0
  %v200 = vsel %vm96, %v55, 0
  %v203 = vsel %vm96, %v56, 0
  %v206 = vsel %vm96, %v57, 0
  %v209 = vsel %vm96, %v58, 0
  %v212 = vsel %vm96, %v59, 0
  %v215 = vsel %vm96, %v60, 0
  %v218 = vsel %vm96, %v61, 0
  %v221 = vsel %vm96, %v62, 0
  %v224 = vsel %vm96, %v63, 0
  %v227 = vsel %vm96, %v64, 0
  %v230 = vsel %vm96, %v65, 0
  %v233 = vsel %vm96, %v66, 0
  %v236 = vsel %vm96, %v67, 0
  %v239 = vsel %vm96, %v68, 0
  %v242 = vsel %vm96, %v69, 0
  %v245 = vsel %vm96, %v70, 0
  %v248 = vsel %vm96, %v71, 0
  %v251 = vsel %vm96, %v72, 0
  %v254 = vsel %vm96, %v73, 0
  %v257 = vsel %vm96, %v74, 0
  %v260 = vsel %vm96, %v75, 0
  %v263 = vsel %vm96, %v76, 0
  %v266 = vsel %vm96, %v77, 0
  %v269 = vsel %vm96, %v78, 0
  %v272 = vsel %vm96, %v79, 0
  %v275 = vsel %vm96, %v80, 0
  %v278 = vsel %vm96, %v81, 0
  %v281 = vsel %vm96, %v82, 0
  %v284 = vsel %vm96, %v83, 0
  %v287 = vsel %vm96, %v84, 0
  %289 = vmatprep.subr.mxu0 0.0
  %290 = vmatpush1.msra.mxu0 0.0
  %291 = vmatprep.subr.mxu0 0.0
  %292 = vmatpush1.msra.mxu0 0.0
  %293 = vmatprep.subr.mxu0 0.0
  %294 = vmatpush1.msra.mxu0 0.0
  %295 = vmatprep.subr.mxu0 0.0
  %296 = vmatpush1.msra.mxu0 0.0
  %297 = vmatprep.subr.mxu0 0.0
  %298 = vmatpush1.msra.mxu0 0.0
  %299 = vmatprep.subr.mxu0 0.0
  %300 = vmatpush1.msra.mxu0 0.0
  %301 = vmatprep.subr.mxu0 0.0
  %302 = vmatpush1.msra.mxu0 0.0
  %303 = vmatprep.subr.mxu0 0.0
  %304 = vmatpush1.msra.mxu0 0.0
  %305 = vmatprep.subr.mxu0 0.0
  %306 = vmatpush1.msra.mxu0 0.0
  %307 = vmatprep.subr.mxu0 0.0
  %308 = vmatpush1.msra.mxu0 0.0
  %309 = vmatprep.subr.mxu0 0.0
  %310 = vmatpush1.msra.mxu0 0.0
  %311 = vmatprep.subr.mxu0 0.0
  %312 = vmatpush1.msra.mxu0 0.0
  %313 = vmatprep.subr.mxu0 0.0
  %314 = vmatpush1.msra.mxu0 %v88
  %315 = vmatprep.subr.mxu0 0.0
  %316 = vmatpush1.msra.mxu0 %v87
  %317 = vmatprep.subr.mxu0 0.0
  %318 = vmatpush1.msra.mxu0 %v86
  %319 = vmatprep.subr.mxu0 0.0
  %320 = vmatpush1.msra.mxu0 %v85
  %321 = vmatprep.subr.mxu0 0.0
  %322 = vmatpush2.msra.mxu0 0.0
  %323 = vmatprep.subr.mxu0 0.0
  %324 = vmatpush2.msra.mxu0 0.0
  %325 = vmatprep.subr.mxu0 0.0
  %326 = vmatpush2.msra.mxu0 0.0
  %327 = vmatprep.subr.mxu0 0.0
  %328 = vmatpush2.msra.mxu0 0.0
  %329 = vmatprep.subr.mxu0 0.0
  %330 = vmatpush2.msra.mxu0 0.0
  %331 = vmatprep.subr.mxu0 0.0
  %332 = vmatpush2.msra.mxu0 0.0
  %333 = vmatprep.subr.mxu0 0.0
  %334 = vmatpush2.msra.mxu0 0.0
  %335 = vmatprep.subr.mxu0 0.0
  %336 = vmatpush2.msra.mxu0 0.0
  %337 = vmatprep.subr.mxu0 0.0
  %338 = vmatpush2.msra.mxu0 0.0
  %339 = vmatprep.subr.mxu0 0.0
  %340 = vmatpush2.msra.mxu0 0.0
  %341 = vmatprep.subr.mxu0 0.0
  %342 = vmatpush2.msra.mxu0 0.0
  %343 = vmatprep.subr.mxu0 0.0
  %344 = vmatpush2.msra.mxu0 0.0
  %345 = vmatprep.subr.mxu0 0.0
  %346 = vmatpush2.msra.mxu0 0.0
  %347 = vmatprep.subr.mxu0 0.0
  %348 = vmatpush2.msra.mxu0 0.0
  %349 = vmatprep.subr.mxu0 0.0
  %350 = vmatpush2.msra.mxu0 0.0
  %351 = vmatprep.subr.mxu0 0.0
  %352 = vmatpush2.msra.mxu0 0.0
  %353 = vmatprep.mubr.f32.mxu0 0.0
  %354 = vmatmul.mubr.f32.gmra.mxu0 %v98
  %v355 = vpop.f32.mrf.mxu0
  %v356 = vadd.f32 %v94, %v355
  %v357 = vpop.f32.mrf.mxu0
  %358 = vmatprep.mubr.f32.mxu0 0.0
  %359 = vmatmul.mubr.f32.gmra.mxu0 %v101
  %v360 = vpop.f32.mrf.mxu0
  %v361 = vadd.f32 %v94, %v360
  %v362 = vpop.f32.mrf.mxu0
  %363 = vmatprep.mubr.f32.mxu0 0.0
  %364 = vmatmul.mubr.f32.gmra.mxu0 %v104
  %v365 = vpop.f32.mrf.mxu0
  %v366 = vadd.f32 %v94, %v365
  %v367 = vpop.f32.mrf.mxu0
  %368 = vmatprep.mubr.f32.mxu0 0.0
  %369 = vmatmul.mubr.f32.gmra.mxu0 %v107
  %v370 = vpop.f32.mrf.mxu0
  %v371 = vadd.f32 %v94, %v370
  %v372 = vpop.f32.mrf.mxu0
  %373 = vmatprep.mubr.f32.mxu0 0.0
  %374 = vmatmul.mubr.f32.gmra.mxu0 %v110
  %v375 = vpop.f32.mrf.mxu0
  %v376 = vadd.f32 %v94, %v375
  %v377 = vpop.f32.mrf.mxu0
  %378 = vmatprep.mubr.f32.mxu0 0.0
  %379 = vmatmul.mubr.f32.gmra.mxu0 %v113
  %v380 = vpop.f32.mrf.mxu0
  %v381 = vadd.f32 %v94, %v380
  %v382 = vpop.f32.mrf.mxu0
  %383 = vmatprep.mubr.f32.mxu0 0.0
  %384 = vmatmul.mubr.f32.gmra.mxu0 %v116
  %v385 = vpop.f32.mrf.mxu0
  %v386 = vadd.f32 %v94, %v385
  %v387 = vpop.f32.mrf.mxu0
  %388 = vmatprep.mubr.f32.mxu0 0.0
  %389 = vmatmul.mubr.f32.gmra.mxu0 %v119
  %v390 = vpop.f32.mrf.mxu0
  %v391 = vadd.f32 %v94, %v390
  %v392 = vpop.f32.mrf.mxu0
  %393 = vmatprep.mubr.f32.mxu0 0.0
  %394 = vmatmul.mubr.f32.gmra.mxu0 %v122
  %v395 = vpop.f32.mrf.mxu0
  %v396 = vadd.f32 %v94, %v395
  %v397 = vpop.f32.mrf.mxu0
  %398 = vmatprep.mubr.f32.mxu0 0.0
  %399 = vmatmul.mubr.f32.gmra.mxu0 %v125
  %v400 = vpop.f32.mrf.mxu0
  %v401 = vadd.f32 %v94, %v400
  %v402 = vpop.f32.mrf.mxu0
  %403 = vmatprep.mubr.f32.mxu0 0.0
  %404 = vmatmul.mubr.f32.gmra.mxu0 %v128
  %v405 = vpop.f32.mrf.mxu0
  %v406 = vadd.f32 %v94, %v405
  %v407 = vpop.f32.mrf.mxu0
  %408 = vmatprep.mubr.f32.mxu0 0.0
  %409 = vmatmul.mubr.f32.gmra.mxu0 %v131
  %v410 = vpop.f32.mrf.mxu0
  %v411 = vadd.f32 %v94, %v410
  %v412 = vpop.f32.mrf.mxu0
  %413 = vmatprep.mubr.f32.mxu0 0.0
  %414 = vmatmul.mubr.f32.gmra.mxu0 %v134
  %v415 = vpop.f32.mrf.mxu0
  %v416 = vadd.f32 %v94, %v415
  %v417 = vpop.f32.mrf.mxu0
  %418 = vmatprep.mubr.f32.mxu0 0.0
  %419 = vmatmul.mubr.f32.gmra.mxu0 %v137
  %v420 = vpop.f32.mrf.mxu0
  %v421 = vadd.f32 %v94, %v420
  %v422 = vpop.f32.mrf.mxu0
  %423 = vmatprep.mubr.f32.mxu0 0.0
  %424 = vmatmul.mubr.f32.gmra.mxu0 %v140
  %v425 = vpop.f32.mrf.mxu0
  %v426 = vadd.f32 %v94, %v425
  %v427 = vpop.f32.mrf.mxu0
  %428 = vmatprep.mubr.f32.mxu0 0.0
  %429 = vmatmul.mubr.f32.gmra.mxu0 %v143
  %v430 = vpop.f32.mrf.mxu0
  %v431 = vadd.f32 %v94, %v430
  %v432 = vpop.f32.mrf.mxu0
  %433 = vmatprep.mubr.f32.mxu0 0.0
  %434 = vmatmul.mubr.f32.gmra.mxu0 %v146
  %v435 = vpop.f32.mrf.mxu0
  %v436 = vadd.f32 %v94, %v435
  %v437 = vpop.f32.mrf.mxu0
  %438 = vmatprep.mubr.f32.mxu0 0.0
  %439 = vmatmul.mubr.f32.gmra.mxu0 %v149
  %v440 = vpop.f32.mrf.mxu0
  %v441 = vadd.f32 %v94, %v440
  %v442 = vpop.f32.mrf.mxu0
  %443 = vmatprep.mubr.f32.mxu0 0.0
  %444 = vmatmul.mubr.f32.gmra.mxu0 %v152
  %v445 = vpop.f32.mrf.mxu0
  %v446 = vadd.f32 %v94, %v445
  %v447 = vpop.f32.mrf.mxu0
  %448 = vmatprep.mubr.f32.mxu0 0.0
  %449 = vmatmul.mubr.f32.gmra.mxu0 %v155
  %v450 = vpop.f32.mrf.mxu0
  %v451 = vadd.f32 %v94, %v450
  %v452 = vpop.f32.mrf.mxu0
  %453 = vmatprep.mubr.f32.mxu0 0.0
  %454 = vmatmul.mubr.f32.gmra.mxu0 %v158
  %v455 = vpop.f32.mrf.mxu0
  %v456 = vadd.f32 %v94, %v455
  %v457 = vpop.f32.mrf.mxu0
  %458 = vmatprep.mubr.f32.mxu0 0.0
  %459 = vmatmul.mubr.f32.gmra.mxu0 %v161
  %v460 = vpop.f32.mrf.mxu0
  %v461 = vadd.f32 %v94, %v460
  %v462 = vpop.f32.mrf.mxu0
  %463 = vmatprep.mubr.f32.mxu0 0.0
  %464 = vmatmul.mubr.f32.gmra.mxu0 %v164
  %v465 = vpop.f32.mrf.mxu0
  %v466 = vadd.f32 %v94, %v465
  %v467 = vpop.f32.mrf.mxu0
  %468 = vmatprep.mubr.f32.mxu0 0.0
  %469 = vmatmul.mubr.f32.gmra.mxu0 %v167
  %v470 = vpop.f32.mrf.mxu0
  %v471 = vadd.f32 %v94, %v470
  %v472 = vpop.f32.mrf.mxu0
  %473 = vmatprep.mubr.f32.mxu0 0.0
  %474 = vmatmul.mubr.f32.gmra.mxu0 %v170
  %v475 = vpop.f32.mrf.mxu0
  %v476 = vadd.f32 %v94, %v475
  %v477 = vpop.f32.mrf.mxu0
  %478 = vmatprep.mubr.f32.mxu0 0.0
  %479 = vmatmul.mubr.f32.gmra.mxu0 %v173
  %v480 = vpop.f32.mrf.mxu0
  %v481 = vadd.f32 %v94, %v480
  %v482 = vpop.f32.mrf.mxu0
  %483 = vmatprep.mubr.f32.mxu0 0.0
  %484 = vmatmul.mubr.f32.gmra.mxu0 %v176
  %v485 = vpop.f32.mrf.mxu0
  %v486 = vadd.f32 %v94, %v485
  %v487 = vpop.f32.mrf.mxu0
  %488 = vmatprep.mubr.f32.mxu0 0.0
  %489 = vmatmul.mubr.f32.gmra.mxu0 %v179
  %v490 = vpop.f32.mrf.mxu0
  %v491 = vadd.f32 %v94, %v490
  %v492 = vpop.f32.mrf.mxu0
  %493 = vmatprep.mubr.f32.mxu0 0.0
  %494 = vmatmul.mubr.f32.gmra.mxu0 %v182
  %v495 = vpop.f32.mrf.mxu0
  %v496 = vadd.f32 %v94, %v495
  %v497 = vpop.f32.mrf.mxu0
  %498 = vmatprep.mubr.f32.mxu0 0.0
  %499 = vmatmul.mubr.f32.gmra.mxu0 %v185
  %v500 = vpop.f32.mrf.mxu0
  %v501 = vadd.f32 %v94, %v500
  %v502 = vpop.f32.mrf.mxu0
  %503 = vmatprep.mubr.f32.mxu0 0.0
  %504 = vmatmul.mubr.f32.gmra.mxu0 %v188
  %v505 = vpop.f32.mrf.mxu0
  %v506 = vadd.f32 %v94, %v505
  %v507 = vpop.f32.mrf.mxu0
  %508 = vmatprep.mubr.f32.mxu0 0.0
  %509 = vmatmul.mubr.f32.gmra.mxu0 %v191
  %v510 = vpop.f32.mrf.mxu0
  %v511 = vadd.f32 %v94, %v510
  %v512 = vpop.f32.mrf.mxu0
  %513 = vmatprep.mubr.f32.mxu0 0.0
  %514 = vmatmul.mubr.f32.gmra.mxu0 %v194
  %v515 = vpop.f32.mrf.mxu0
  %v516 = vadd.f32 %v94, %v515
  %v517 = vpop.f32.mrf.mxu0
  %518 = vmatprep.mubr.f32.mxu0 0.0
  %519 = vmatmul.mubr.f32.gmra.mxu0 %v197
  %v520 = vpop.f32.mrf.mxu0
  %v521 = vadd.f32 %v94, %v520
  %v522 = vpop.f32.mrf.mxu0
  %523 = vmatprep.mubr.f32.mxu0 0.0
  %524 = vmatmul.mubr.f32.gmra.mxu0 %v200
  %v525 = vpop.f32.mrf.mxu0
  %v526 = vadd.f32 %v94, %v525
  %v527 = vpop.f32.mrf.mxu0
  %528 = vmatprep.mubr.f32.mxu0 0.0
  %529 = vmatmul.mubr.f32.gmra.mxu0 %v203
  %v530 = vpop.f32.mrf.mxu0
  %v531 = vadd.f32 %v94, %v530
  %v532 = vpop.f32.mrf.mxu0
  %533 = vmatprep.mubr.f32.mxu0 0.0
  %534 = vmatmul.mubr.f32.gmra.mxu0 %v206
  %v535 = vpop.f32.mrf.mxu0
  %v536 = vadd.f32 %v94, %v535
  %v537 = vpop.f32.mrf.mxu0
  %538 = vmatprep.mubr.f32.mxu0 0.0
  %539 = vmatmul.mubr.f32.gmra.mxu0 %v209
  %v540 = vpop.f32.mrf.mxu0
  %v541 = vadd.f32 %v94, %v540
  %v542 = vpop.f32.mrf.mxu0
  %543 = vmatprep.mubr.f32.mxu0 0.0
  %544 = vmatmul.mubr.f32.gmra.mxu0 %v212
  %v545 = vpop.f32.mrf.mxu0
  %v546 = vadd.f32 %v94, %v545
  %v547 = vpop.f32.mrf.mxu0
  %548 = vmatprep.mubr.f32.mxu0 0.0
  %549 = vmatmul.mubr.f32.gmra.mxu0 %v215
  %v550 = vpop.f32.mrf.mxu0
  %v551 = vadd.f32 %v94, %v550
  %v552 = vpop.f32.mrf.mxu0
  %553 = vmatprep.mubr.f32.mxu0 0.0
  %554 = vmatmul.mubr.f32.gmra.mxu0 %v218
  %v555 = vpop.f32.mrf.mxu0
  %v556 = vadd.f32 %v94, %v555
  %v557 = vpop.f32.mrf.mxu0
  %558 = vmatprep.mubr.f32.mxu0 0.0
  %559 = vmatmul.mubr.f32.gmra.mxu0 %v221
  %v560 = vpop.f32.mrf.mxu0
  %v561 = vadd.f32 %v94, %v560
  %v562 = vpop.f32.mrf.mxu0
  %563 = vmatprep.mubr.f32.mxu0 0.0
  %564 = vmatmul.mubr.f32.gmra.mxu0 %v224
  %v565 = vpop.f32.mrf.mxu0
  %v566 = vadd.f32 %v94, %v565
  %v567 = vpop.f32.mrf.mxu0
  %568 = vmatprep.mubr.f32.mxu0 0.0
  %569 = vmatmul.mubr.f32.gmra.mxu0 %v227
  %v570 = vpop.f32.mrf.mxu0
  %v571 = vadd.f32 %v94, %v570
  %v572 = vpop.f32.mrf.mxu0
  %573 = vmatprep.mubr.f32.mxu0 0.0
  %574 = vmatmul.mubr.f32.gmra.mxu0 %v230
  %v575 = vpop.f32.mrf.mxu0
  %v576 = vadd.f32 %v94, %v575
  %v577 = vpop.f32.mrf.mxu0
  %578 = vmatprep.mubr.f32.mxu0 0.0
  %579 = vmatmul.mubr.f32.gmra.mxu0 %v233
  %v580 = vpop.f32.mrf.mxu0
  %v581 = vadd.f32 %v94, %v580
  %v582 = vpop.f32.mrf.mxu0
  %583 = vmatprep.mubr.f32.mxu0 0.0
  %584 = vmatmul.mubr.f32.gmra.mxu0 %v236
  %v585 = vpop.f32.mrf.mxu0
  %v586 = vadd.f32 %v94, %v585
  %v587 = vpop.f32.mrf.mxu0
  %588 = vmatprep.mubr.f32.mxu0 0.0
  %589 = vmatmul.mubr.f32.gmra.mxu0 %v239
  %v590 = vpop.f32.mrf.mxu0
  %v591 = vadd.f32 %v94, %v590
  %v592 = vpop.f32.mrf.mxu0
  %593 = vmatprep.mubr.f32.mxu0 0.0
  %594 = vmatmul.mubr.f32.gmra.mxu0 %v242
  %v595 = vpop.f32.mrf.mxu0
  %v596 = vadd.f32 %v94, %v595
  %v597 = vpop.f32.mrf.mxu0
  %598 = vmatprep.mubr.f32.mxu0 0.0
  %599 = vmatmul.mubr.f32.gmra.mxu0 %v245
  %v600 = vpop.f32.mrf.mxu0
  %v601 = vadd.f32 %v94, %v600
  %v602 = vpop.f32.mrf.mxu0
  %603 = vmatprep.mubr.f32.mxu0 0.0
  %604 = vmatmul.mubr.f32.gmra.mxu0 %v248
  %v605 = vpop.f32.mrf.mxu0
  %v606 = vadd.f32 %v94, %v605
  %v607 = vpop.f32.mrf.mxu0
  %608 = vmatprep.mubr.f32.mxu0 0.0
  %609 = vmatmul.mubr.f32.gmra.mxu0 %v251
  %v610 = vpop.f32.mrf.mxu0
  %v611 = vadd.f32 %v94, %v610
  %v612 = vpop.f32.mrf.mxu0
  %613 = vmatprep.mubr.f32.mxu0 0.0
  %614 = vmatmul.mubr.f32.gmra.mxu0 %v254
  %v615 = vpop.f32.mrf.mxu0
  %v616 = vadd.f32 %v94, %v615
  %v617 = vpop.f32.mrf.mxu0
  %618 = vmatprep.mubr.f32.mxu0 0.0
  %619 = vmatmul.mubr.f32.gmra.mxu0 %v257
  %v620 = vpop.f32.mrf.mxu0
  %v621 = vadd.f32 %v94, %v620
  %v622 = vpop.f32.mrf.mxu0
  %623 = vmatprep.mubr.f32.mxu0 0.0
  %624 = vmatmul.mubr.f32.gmra.mxu0 %v260
  %v625 = vpop.f32.mrf.mxu0
  %v626 = vadd.f32 %v94, %v625
  %v627 = vpop.f32.mrf.mxu0
  %628 = vmatprep.mubr.f32.mxu0 0.0
  %629 = vmatmul.mubr.f32.gmra.mxu0 %v263
  %v630 = vpop.f32.mrf.mxu0
  %v631 = vadd.f32 %v94, %v630
  %v632 = vpop.f32.mrf.mxu0
  %633 = vmatprep.mubr.f32.mxu0 0.0
  %634 = vmatmul.mubr.f32.gmra.mxu0 %v266
  %v635 = vpop.f32.mrf.mxu0
  %v636 = vadd.f32 %v94, %v635
  %v637 = vpop.f32.mrf.mxu0
  %638 = vmatprep.mubr.f32.mxu0 0.0
  %639 = vmatmul.mubr.f32.gmra.mxu0 %v269
  %v640 = vpop.f32.mrf.mxu0
  %v641 = vadd.f32 %v94, %v640
  %v642 = vpop.f32.mrf.mxu0
  %643 = vmatprep.mubr.f32.mxu0 0.0
  %644 = vmatmul.mubr.f32.gmra.mxu0 %v272
  %v645 = vpop.f32.mrf.mxu0
  %v646 = vadd.f32 %v94, %v645
  %v647 = vpop.f32.mrf.mxu0
  %648 = vmatprep.mubr.f32.mxu0 0.0
  %649 = vmatmul.mubr.f32.gmra.mxu0 %v275
  %v650 = vpop.f32.mrf.mxu0
  %v651 = vadd.f32 %v94, %v650
  %v652 = vpop.f32.mrf.mxu0
  %653 = vmatprep.mubr.f32.mxu0 0.0
  %654 = vmatmul.mubr.f32.gmra.mxu0 %v278
  %v655 = vpop.f32.mrf.mxu0
  %v656 = vadd.f32 %v94, %v655
  %v657 = vpop.f32.mrf.mxu0
  %658 = vmatprep.mubr.f32.mxu0 0.0
  %659 = vmatmul.mubr.f32.gmra.mxu0 %v281
  %v660 = vpop.f32.mrf.mxu0
  %v661 = vadd.f32 %v94, %v660
  %v662 = vpop.f32.mrf.mxu0
  %663 = vmatprep.mubr.f32.mxu0 0.0
  %664 = vmatmul.mubr.f32.gmra.mxu0 %v284
  %v665 = vpop.f32.mrf.mxu0
  %v666 = vadd.f32 %v94, %v665
  %v667 = vpop.f32.mrf.mxu0
  %668 = vmatprep.mubr.f32.mxu0 0.0
  %669 = vmatmul.mubr.f32.gmra.mxu0 %v287
  %v670 = vpop.f32.mrf.mxu0
  %v671 = vadd.f32 %v94, %v670
  %v672 = vpop.f32.mrf.mxu0
  %673 = vdwg.mxu0
  %v674 = vmax.f32 %v356, 0.0
  %v675 = vmax.f32 %v361, 0.0
  %v676 = vmax.f32 %v366, 0.0
  %v677 = vmax.f32 %v371, 0.0
  %v678 = vmax.f32 %v376, 0.0
  %v679 = vmax.f32 %v381, 0.0
  %v680 = vmax.f32 %v386, 0.0
  %v681 = vmax.f32 %v391, 0.0
  %v682 = vmax.f32 %v396, 0.0
  %v683 = vmax.f32 %v401, 0.0
  %v684 = vmax.f32 %v406, 0.0
  %v685 = vmax.f32 %v411, 0.0
  %v686 = vmax.f32 %v416, 0.0
  %v687 = vmax.f32 %v421, 0.0
  %v688 = vmax.f32 %v426, 0.0
  %v689 = vmax.f32 %v431, 0.0
  %v690 = vmax.f32 %v436, 0.0
  %v691 = vmax.f32 %v441, 0.0
  %v692 = vmax.f32 %v446, 0.0
  %v693 = vmax.f32 %v451, 0.0
  %v694 = vmax.f32 %v456, 0.0
  %v695 = vmax.f32 %v461, 0.0
  %v696 = vmax.f32 %v466, 0.0
  %v697 = vmax.f32 %v471, 0.0
  %v698 = vmax.f32 %v476, 0.0
  %v699 = vmax.f32 %v481, 0.0
  %v700 = vmax.f32 %v486, 0.0
  %v701 = vmax.f32 %v491, 0.0
  %v702 = vmax.f32 %v496, 0.0
  %v703 = vmax.f32 %v501, 0.0
  %v704 = vmax.f32 %v506, 0.0
  %v705 = vmax.f32 %v511, 0.0
  %v706 = vmax.f32 %v516, 0.0
  %v707 = vmax.f32 %v521, 0.0
  %v708 = vmax.f32 %v526, 0.0
  %v709 = vmax.f32 %v531, 0.0
  %v710 = vmax.f32 %v536, 0.0
  %v711 = vmax.f32 %v541, 0.0
  %v712 = vmax.f32 %v546, 0.0
  %v713 = vmax.f32 %v551, 0.0
  %v714 = vmax.f32 %v556, 0.0
  %v715 = vmax.f32 %v561, 0.0
  %v716 = vmax.f32 %v566, 0.0
  %v717 = vmax.f32 %v571, 0.0
  %v718 = vmax.f32 %v576, 0.0
  %v719 = vmax.f32 %v581, 0.0
  %v720 = vmax.f32 %v586, 0.0
  %v721 = vmax.f32 %v591, 0.0
  %v722 = vmax.f32 %v596, 0.0
  %v723 = vmax.f32 %v601, 0.0
  %v724 = vmax.f32 %v606, 0.0
  %v725 = vmax.f32 %v611, 0.0
  %v726 = vmax.f32 %v616, 0.0
  %v727 = vmax.f32 %v621, 0.0
  %v728 = vmax.f32 %v626, 0.0
  %v729 = vmax.f32 %v631, 0.0
  %v730 = vmax.f32 %v636, 0.0
  %v731 = vmax.f32 %v641, 0.0
  %v732 = vmax.f32 %v646, 0.0
  %v733 = vmax.f32 %v651, 0.0
  %v734 = vmax.f32 %v656, 0.0
  %v735 = vmax.f32 %v661, 0.0
  %v736 = vmax.f32 %v666, 0.0
  %v737 = vmax.f32 %v671, 0.0
  %v738 = vld [vmem:[%s3] sm:$0x1]
  %v740 = vlaneseq
  %v741 = vshrl.u32 %v740, 7
  %v742 = vsub.s32 0, %v741
  %v743 = vrot.slane %v738, %v742
  %v745 = vmul.f32 %v674, %v743
  %v746 = vmul.f32 %v675, %v743
  %v747 = vmul.f32 %v676, %v743
  %v748 = vmul.f32 %v677, %v743
  %v749 = vmul.f32 %v678, %v743
  %v750 = vmul.f32 %v679, %v743
  %v751 = vmul.f32 %v680, %v743
  %v752 = vmul.f32 %v681, %v743
  %v753 = vmul.f32 %v682, %v743
  %v754 = vmul.f32 %v683, %v743
  %v755 = vmul.f32 %v684, %v743
  %v756 = vmul.f32 %v685, %v743
  %v757 = vmul.f32 %v686, %v743
  %v758 = vmul.f32 %v687, %v743
  %v759 = vmul.f32 %v688, %v743
  %v760 = vmul.f32 %v689, %v743
  %v761 = vmul.f32 %v690, %v743
  %v762 = vmul.f32 %v691, %v743
  %v763 = vmul.f32 %v692, %v743
  %v764 = vmul.f32 %v693, %v743
  %v765 = vmul.f32 %v694, %v743
  %v766 = vmul.f32 %v695, %v743
  %v767 = vmul.f32 %v696, %v743
  %v768 = vmul.f32 %v697, %v743
  %v769 = vmul.f32 %v698, %v743
  %v770 = vmul.f32 %v699, %v743
  %v771 = vmul.f32 %v700, %v743
  %v772 = vmul.f32 %v701, %v743
  %v773 = vmul.f32 %v702, %v743
  %v774 = vmul.f32 %v703, %v743
  %v775 = vmul.f32 %v704, %v743
  %v776 = vmul.f32 %v705, %v743
  %v777 = vmul.f32 %v706, %v743
  %v778 = vmul.f32 %v707, %v743
  %v779 = vmul.f32 %v708, %v743
  %v780 = vmul.f32 %v709, %v743
  %v781 = vmul.f32 %v710, %v743
  %v782 = vmul.f32 %v711, %v743
  %v783 = vmul.f32 %v712, %v743
  %v784 = vmul.f32 %v713, %v743
  %v785 = vmul.f32 %v714, %v743
  %v786 = vmul.f32 %v715, %v743
  %v787 = vmul.f32 %v716, %v743
  %v788 = vmul.f32 %v717, %v743
  %v789 = vmul.f32 %v718, %v743
  %v790 = vmul.f32 %v719, %v743
  %v791 = vmul.f32 %v720, %v743
  %v792 = vmul.f32 %v721, %v743
  %v793 = vmul.f32 %v722, %v743
  %v794 = vmul.f32 %v723, %v743
  %v795 = vmul.f32 %v724, %v743
  %v796 = vmul.f32 %v725, %v743
  %v797 = vmul.f32 %v726, %v743
  %v798 = vmul.f32 %v727, %v743
  %v799 = vmul.f32 %v728, %v743
  %v800 = vmul.f32 %v729, %v743
  %v801 = vmul.f32 %v730, %v743
  %v802 = vmul.f32 %v731, %v743
  %v803 = vmul.f32 %v732, %v743
  %v804 = vmul.f32 %v733, %v743
  %v805 = vmul.f32 %v734, %v743
  %v806 = vmul.f32 %v735, %v743
  %v807 = vmul.f32 %v736, %v743
  %v808 = vmul.f32 %v737, %v743
  %809 = vadd.xlane.f32.xlu0 %v745
  %v810 = vpop.xlane.xlu0 %809
  %811 = vadd.xlane.f32.xlu0 %v746
  %v812 = vpop.xlane.xlu0 %811
  %813 = vadd.xlane.f32.xlu0 %v747
  %v814 = vpop.xlane.xlu0 %813
  %815 = vadd.xlane.f32.xlu0 %v748
  %v816 = vpop.xlane.xlu0 %815
  %817 = vadd.xlane.f32.xlu0 %v749
  %v818 = vpop.xlane.xlu0 %817
  %819 = vadd.xlane.f32.xlu0 %v750
  %v820 = vpop.xlane.xlu0 %819
  %821 = vadd.xlane.f32.xlu0 %v751
  %v822 = vpop.xlane.xlu0 %821
  %823 = vadd.xlane.f32.xlu0 %v752
  %v824 = vpop.xlane.xlu0 %823
  %825 = vadd.xlane.f32.xlu0 %v753
  %v826 = vpop.xlane.xlu0 %825
  %827 = vadd.xlane.f32.xlu0 %v754
  %v828 = vpop.xlane.xlu0 %827
  %829 = vadd.xlane.f32.xlu0 %v755
  %v830 = vpop.xlane.xlu0 %829
  %831 = vadd.xlane.f32.xlu0 %v756
  %v832 = vpop.xlane.xlu0 %831
  %833 = vadd.xlane.f32.xlu0 %v757
  %v834 = vpop.xlane.xlu0 %833
  %835 = vadd.xlane.f32.xlu0 %v758
  %v836 = vpop.xlane.xlu0 %835
  %837 = vadd.xlane.f32.xlu0 %v759
  %v838 = vpop.xlane.xlu0 %837
  %839 = vadd.xlane.f32.xlu0 %v760
  %v840 = vpop.xlane.xlu0 %839
  %841 = vadd.xlane.f32.xlu0 %v761
  %v842 = vpop.xlane.xlu0 %841
  %843 = vadd.xlane.f32.xlu0 %v762
  %v844 = vpop.xlane.xlu0 %843
  %845 = vadd.xlane.f32.xlu0 %v763
  %v846 = vpop.xlane.xlu0 %845
  %847 = vadd.xlane.f32.xlu0 %v764
  %v848 = vpop.xlane.xlu0 %847
  %849 = vadd.xlane.f32.xlu0 %v765
  %v850 = vpop.xlane.xlu0 %849
  %851 = vadd.xlane.f32.xlu0 %v766
  %v852 = vpop.xlane.xlu0 %851
  %853 = vadd.xlane.f32.xlu0 %v767
  %v854 = vpop.xlane.xlu0 %853
  %855 = vadd.xlane.f32.xlu0 %v768
  %v856 = vpop.xlane.xlu0 %855
  %857 = vadd.xlane.f32.xlu0 %v769
  %v858 = vpop.xlane.xlu0 %857
  %859 = vadd.xlane.f32.xlu0 %v770
  %v860 = vpop.xlane.xlu0 %859
  %861 = vadd.xlane.f32.xlu0 %v771
  %v862 = vpop.xlane.xlu0 %861
  %863 = vadd.xlane.f32.xlu0 %v772
  %v864 = vpop.xlane.xlu0 %863
  %865 = vadd.xlane.f32.xlu0 %v773
  %v866 = vpop.xlane.xlu0 %865
  %867 = vadd.xlane.f32.xlu0 %v774
  %v868 = vpop.xlane.xlu0 %867
  %869 = vadd.xlane.f32.xlu0 %v775
  %v870 = vpop.xlane.xlu0 %869
  %871 = vadd.xlane.f32.xlu0 %v776
  %v872 = vpop.xlane.xlu0 %871
  %873 = vadd.xlane.f32.xlu0 %v777
  %v874 = vpop.xlane.xlu0 %873
  %875 = vadd.xlane.f32.xlu0 %v778
  %v876 = vpop.xlane.xlu0 %875
  %877 = vadd.xlane.f32.xlu0 %v779
  %v878 = vpop.xlane.xlu0 %877
  %879 = vadd.xlane.f32.xlu0 %v780
  %v880 = vpop.xlane.xlu0 %879
  %881 = vadd.xlane.f32.xlu0 %v781
  %v882 = vpop.xlane.xlu0 %881
  %883 = vadd.xlane.f32.xlu0 %v782
  %v884 = vpop.xlane.xlu0 %883
  %885 = vadd.xlane.f32.xlu0 %v783
  %v886 = vpop.xlane.xlu0 %885
  %887 = vadd.xlane.f32.xlu0 %v784
  %v888 = vpop.xlane.xlu0 %887
  %889 = vadd.xlane.f32.xlu0 %v785
  %v890 = vpop.xlane.xlu0 %889
  %891 = vadd.xlane.f32.xlu0 %v786
  %v892 = vpop.xlane.xlu0 %891
  %893 = vadd.xlane.f32.xlu0 %v787
  %v894 = vpop.xlane.xlu0 %893
  %895 = vadd.xlane.f32.xlu0 %v788
  %v896 = vpop.xlane.xlu0 %895
  %897 = vadd.xlane.f32.xlu0 %v789
  %v898 = vpop.xlane.xlu0 %897
  %899 = vadd.xlane.f32.xlu0 %v790
  %v900 = vpop.xlane.xlu0 %899
  %901 = vadd.xlane.f32.xlu0 %v791
  %v902 = vpop.xlane.xlu0 %901
  %903 = vadd.xlane.f32.xlu0 %v792
  %v904 = vpop.xlane.xlu0 %903
  %905 = vadd.xlane.f32.xlu0 %v793
  %v906 = vpop.xlane.xlu0 %905
  %907 = vadd.xlane.f32.xlu0 %v794
  %v908 = vpop.xlane.xlu0 %907
  %909 = vadd.xlane.f32.xlu0 %v795
  %v910 = vpop.xlane.xlu0 %909
  %911 = vadd.xlane.f32.xlu0 %v796
  %v912 = vpop.xlane.xlu0 %911
  %913 = vadd.xlane.f32.xlu0 %v797
  %v914 = vpop.xlane.xlu0 %913
  %915 = vadd.xlane.f32.xlu0 %v798
  %v916 = vpop.xlane.xlu0 %915
  %917 = vadd.xlane.f32.xlu0 %v799
  %v918 = vpop.xlane.xlu0 %917
  %919 = vadd.xlane.f32.xlu0 %v800
  %v920 = vpop.xlane.xlu0 %919
  %921 = vadd.xlane.f32.xlu0 %v801
  %v922 = vpop.xlane.xlu0 %921
  %923 = vadd.xlane.f32.xlu0 %v802
  %v924 = vpop.xlane.xlu0 %923
  %925 = vadd.xlane.f32.xlu0 %v803
  %v926 = vpop.xlane.xlu0 %925
  %927 = vadd.xlane.f32.xlu0 %v804
  %v928 = vpop.xlane.xlu0 %927
  %929 = vadd.xlane.f32.xlu0 %v805
  %v930 = vpop.xlane.xlu0 %929
  %931 = vadd.xlane.f32.xlu0 %v806
  %v932 = vpop.xlane.xlu0 %931
  %933 = vadd.xlane.f32.xlu0 %v807
  %v934 = vpop.xlane.xlu0 %933
  %935 = vadd.xlane.f32.xlu0 %v808
  %v936 = vpop.xlane.xlu0 %935
  %s937 = sld [smem:[#allocation2]]
  %v938 = vstv %s937
  %v939 = vadd.f32 %v810, %v938
  %v940 = vadd.f32 %v812, %v938
  %v941 = vadd.f32 %v814, %v938
  %v942 = vadd.f32 %v816, %v938
  %v943 = vadd.f32 %v818, %v938
  %v944 = vadd.f32 %v820, %v938
  %v945 = vadd.f32 %v822, %v938
  %v946 = vadd.f32 %v824, %v938
  %v947 = vadd.f32 %v826, %v938
  %v948 = vadd.f32 %v828, %v938
  %v949 = vadd.f32 %v830, %v938
  %v950 = vadd.f32 %v832, %v938
  %v951 = vadd.f32 %v834, %v938
  %v952 = vadd.f32 %v836, %v938
  %v953 = vadd.f32 %v838, %v938
  %v954 = vadd.f32 %v840, %v938
  %v955 = vadd.f32 %v842, %v938
  %v956 = vadd.f32 %v844, %v938
  %v957 = vadd.f32 %v846, %v938
  %v958 = vadd.f32 %v848, %v938
  %v959 = vadd.f32 %v850, %v938
  %v960 = vadd.f32 %v852, %v938
  %v961 = vadd.f32 %v854, %v938
  %v962 = vadd.f32 %v856, %v938
  %v963 = vadd.f32 %v858, %v938
  %v964 = vadd.f32 %v860, %v938
  %v965 = vadd.f32 %v862, %v938
  %v966 = vadd.f32 %v864, %v938
  %v967 = vadd.f32 %v866, %v938
  %v968 = vadd.f32 %v868, %v938
  %v969 = vadd.f32 %v870, %v938
  %v970 = vadd.f32 %v872, %v938
  %v971 = vadd.f32 %v874, %v938
  %v972 = vadd.f32 %v876, %v938
  %v973 = vadd.f32 %v878, %v938
  %v974 = vadd.f32 %v880, %v938
  %v975 = vadd.f32 %v882, %v938
  %v976 = vadd.f32 %v884, %v938
  %v977 = vadd.f32 %v886, %v938
  %v978 = vadd.f32 %v888, %v938
  %v979 = vadd.f32 %v890, %v938
  %v980 = vadd.f32 %v892, %v938
  %v981 = vadd.f32 %v894, %v938
  %v982 = vadd.f32 %v896, %v938
  %v983 = vadd.f32 %v898, %v938
  %v984 = vadd.f32 %v900, %v938
  %v985 = vadd.f32 %v902, %v938
  %v986 = vadd.f32 %v904, %v938
  %v987 = vadd.f32 %v906, %v938
  %v988 = vadd.f32 %v908, %v938
  %v989 = vadd.f32 %v910, %v938
  %v990 = vadd.f32 %v912, %v938
  %v991 = vadd.f32 %v914, %v938
  %v992 = vadd.f32 %v916, %v938
  %v993 = vadd.f32 %v918, %v938
  %v994 = vadd.f32 %v920, %v938
  %v995 = vadd.f32 %v922, %v938
  %v996 = vadd.f32 %v924, %v938
  %v997 = vadd.f32 %v926, %v938
  %v998 = vadd.f32 %v928, %v938
  %v999 = vadd.f32 %v930, %v938
  %v1000 = vadd.f32 %v932, %v938
  %v1001 = vadd.f32 %v934, %v938
  %v1002 = vadd.f32 %v936, %v938
  %v1003 = vxor.u32 %v939, 2147483648
  %v1004 = vxor.u32 %v940, 2147483648
  %v1005 = vxor.u32 %v941, 2147483648
  %v1006 = vxor.u32 %v942, 2147483648
  %v1007 = vxor.u32 %v943, 2147483648
  %v1008 = vxor.u32 %v944, 2147483648
  %v1009 = vxor.u32 %v945, 2147483648
  %v1010 = vxor.u32 %v946, 2147483648
  %v1011 = vxor.u32 %v947, 2147483648
  %v1012 = vxor.u32 %v948, 2147483648
  %v1013 = vxor.u32 %v949, 2147483648
  %v1014 = vxor.u32 %v950, 2147483648
  %v1015 = vxor.u32 %v951, 2147483648
  %v1016 = vxor.u32 %v952, 2147483648
  %v1017 = vxor.u32 %v953, 2147483648
  %v1018 = vxor.u32 %v954, 2147483648
  %v1019 = vxor.u32 %v955, 2147483648
  %v1020 = vxor.u32 %v956, 2147483648
  %v1021 = vxor.u32 %v957, 2147483648
  %v1022 = vxor.u32 %v958, 2147483648
  %v1023 = vxor.u32 %v959, 2147483648
  %v1024 = vxor.u32 %v960, 2147483648
  %v1025 = vxor.u32 %v961, 2147483648
  %v1026 = vxor.u32 %v962, 2147483648
  %v1027 = vxor.u32 %v963, 2147483648
  %v1028 = vxor.u32 %v964, 2147483648
  %v1029 = vxor.u32 %v965, 2147483648
  %v1030 = vxor.u32 %v966, 2147483648
  %v1031 = vxor.u32 %v967, 2147483648
  %v1032 = vxor.u32 %v968, 2147483648
  %v1033 = vxor.u32 %v969, 2147483648
  %v1034 = vxor.u32 %v970, 2147483648
  %v1035 = vxor.u32 %v971, 2147483648
  %v1036 = vxor.u32 %v972, 2147483648
  %v1037 = vxor.u32 %v973, 2147483648
  %v1038 = vxor.u32 %v974, 2147483648
  %v1039 = vxor.u32 %v975, 2147483648
  %v1040 = vxor.u32 %v976, 2147483648
  %v1041 = vxor.u32 %v977, 2147483648
  %v1042 = vxor.u32 %v978, 2147483648
  %v1043 = vxor.u32 %v979, 2147483648
  %v1044 = vxor.u32 %v980, 2147483648
  %v1045 = vxor.u32 %v981, 2147483648
  %v1046 = vxor.u32 %v982, 2147483648
  %v1047 = vxor.u32 %v983, 2147483648
  %v1048 = vxor.u32 %v984, 2147483648
  %v1049 = vxor.u32 %v985, 2147483648
  %v1050 = vxor.u32 %v986, 2147483648
  %v1051 = vxor.u32 %v987, 2147483648
  %v1052 = vxor.u32 %v988, 2147483648
  %v1053 = vxor.u32 %v989, 2147483648
  %v1054 = vxor.u32 %v990, 2147483648
  %v1055 = vxor.u32 %v991, 2147483648
  %v1056 = vxor.u32 %v992, 2147483648
  %v1057 = vxor.u32 %v993, 2147483648
  %v1058 = vxor.u32 %v994, 2147483648
  %v1059 = vxor.u32 %v995, 2147483648
  %v1060 = vxor.u32 %v996, 2147483648
  %v1061 = vxor.u32 %v997, 2147483648
  %v1062 = vxor.u32 %v998, 2147483648
  %v1063 = vxor.u32 %v999, 2147483648
  %v1064 = vxor.u32 %v1000, 2147483648
  %v1065 = vxor.u32 %v1001, 2147483648
  %v1066 = vxor.u32 %v1002, 2147483648
  %v1067 = vmul.f32 %v1003, 1.442695
  %v1068 = vpow.pop %v1067
  %v1069 = vmul.f32 %v1004, 1.442695
  %v1070 = vpow.pop %v1069
  %v1071 = vmul.f32 %v1005, 1.442695
  %v1072 = vpow.pop %v1071
  %v1073 = vmul.f32 %v1006, 1.442695
  %v1074 = vpow.pop %v1073
  %v1075 = vmul.f32 %v1007, 1.442695
  %v1076 = vpow.pop %v1075
  %v1077 = vmul.f32 %v1008, 1.442695
  %v1078 = vpow.pop %v1077
  %v1079 = vmul.f32 %v1009, 1.442695
  %v1080 = vpow.pop %v1079
  %v1081 = vmul.f32 %v1010, 1.442695
  %v1082 = vpow.pop %v1081
  %v1083 = vmul.f32 %v1011, 1.442695
  %v1084 = vpow.pop %v1083
  %v1085 = vmul.f32 %v1012, 1.442695
  %v1086 = vpow.pop %v1085
  %v1087 = vmul.f32 %v1013, 1.442695
  %v1088 = vpow.pop %v1087
  %v1089 = vmul.f32 %v1014, 1.442695
  %v1090 = vpow.pop %v1089
  %v1091 = vmul.f32 %v1015, 1.442695
  %v1092 = vpow.pop %v1091
  %v1093 = vmul.f32 %v1016, 1.442695
  %v1094 = vpow.pop %v1093
  %v1095 = vmul.f32 %v1017, 1.442695
  %v1096 = vpow.pop %v1095
  %v1097 = vmul.f32 %v1018, 1.442695
  %v1098 = vpow.pop %v1097
  %v1099 = vmul.f32 %v1019, 1.442695
  %v1100 = vpow.pop %v1099
  %v1101 = vmul.f32 %v1020, 1.442695
  %v1102 = vpow.pop %v1101
  %v1103 = vmul.f32 %v1021, 1.442695
  %v1104 = vpow.pop %v1103
  %v1105 = vmul.f32 %v1022, 1.442695
  %v1106 = vpow.pop %v1105
  %v1107 = vmul.f32 %v1023, 1.442695
  %v1108 = vpow.pop %v1107
  %v1109 = vmul.f32 %v1024, 1.442695
  %v1110 = vpow.pop %v1109
  %v1111 = vmul.f32 %v1025, 1.442695
  %v1112 = vpow.pop %v1111
  %v1113 = vmul.f32 %v1026, 1.442695
  %v1114 = vpow.pop %v1113
  %v1115 = vmul.f32 %v1027, 1.442695
  %v1116 = vpow.pop %v1115
  %v1117 = vmul.f32 %v1028, 1.442695
  %v1118 = vpow.pop %v1117
  %v1119 = vmul.f32 %v1029, 1.442695
  %v1120 = vpow.pop %v1119
  %v1121 = vmul.f32 %v1030, 1.442695
  %v1122 = vpow.pop %v1121
  %v1123 = vmul.f32 %v1031, 1.442695
  %v1124 = vpow.pop %v1123
  %v1125 = vmul.f32 %v1032, 1.442695
  %v1126 = vpow.pop %v1125
  %v1127 = vmul.f32 %v1033, 1.442695
  %v1128 = vpow.pop %v1127
  %v1129 = vmul.f32 %v1034, 1.442695
  %v1130 = vpow.pop %v1129
  %v1131 = vmul.f32 %v1035, 1.442695
  %v1132 = vpow.pop %v1131
  %v1133 = vmul.f32 %v1036, 1.442695
  %v1134 = vpow.pop %v1133
  %v1135 = vmul.f32 %v1037, 1.442695
  %v1136 = vpow.pop %v1135
  %v1137 = vmul.f32 %v1038, 1.442695
  %v1138 = vpow.pop %v1137
  %v1139 = vmul.f32 %v1039, 1.442695
  %v1140 = vpow.pop %v1139
  %v1141 = vmul.f32 %v1040, 1.442695
  %v1142 = vpow.pop %v1141
  %v1143 = vmul.f32 %v1041, 1.442695
  %v1144 = vpow.pop %v1143
  %v1145 = vmul.f32 %v1042, 1.442695
  %v1146 = vpow.pop %v1145
  %v1147 = vmul.f32 %v1043, 1.442695
  %v1148 = vpow.pop %v1147
  %v1149 = vmul.f32 %v1044, 1.442695
  %v1150 = vpow.pop %v1149
  %v1151 = vmul.f32 %v1045, 1.442695
  %v1152 = vpow.pop %v1151
  %v1153 = vmul.f32 %v1046, 1.442695
  %v1154 = vpow.pop %v1153
  %v1155 = vmul.f32 %v1047, 1.442695
  %v1156 = vpow.pop %v1155
  %v1157 = vmul.f32 %v1048, 1.442695
  %v1158 = vpow.pop %v1157
  %v1159 = vmul.f32 %v1049, 1.442695
  %v1160 = vpow.pop %v1159
  %v1161 = vmul.f32 %v1050, 1.442695
  %v1162 = vpow.pop %v1161
  %v1163 = vmul.f32 %v1051, 1.442695
  %v1164 = vpow.pop %v1163
  %v1165 = vmul.f32 %v1052, 1.442695
  %v1166 = vpow.pop %v1165
  %v1167 = vmul.f32 %v1053, 1.442695
  %v1168 = vpow.pop %v1167
  %v1169 = vmul.f32 %v1054, 1.442695
  %v1170 = vpow.pop %v1169
  %v1171 = vmul.f32 %v1055, 1.442695
  %v1172 = vpow.pop %v1171
  %v1173 = vmul.f32 %v1056, 1.442695
  %v1174 = vpow.pop %v1173
  %v1175 = vmul.f32 %v1057, 1.442695
  %v1176 = vpow.pop %v1175
  %v1177 = vmul.f32 %v1058, 1.442695
  %v1178 = vpow.pop %v1177
  %v1179 = vmul.f32 %v1059, 1.442695
  %v1180 = vpow.pop %v1179
  %v1181 = vmul.f32 %v1060, 1.442695
  %v1182 = vpow.pop %v1181
  %v1183 = vmul.f32 %v1061, 1.442695
  %v1184 = vpow.pop %v1183
  %v1185 = vmul.f32 %v1062, 1.442695
  %v1186 = vpow.pop %v1185
  %v1187 = vmul.f32 %v1063, 1.442695
  %v1188 = vpow.pop %v1187
  %v1189 = vmul.f32 %v1064, 1.442695
  %v1190 = vpow.pop %v1189
  %v1191 = vmul.f32 %v1065, 1.442695
  %v1192 = vpow.pop %v1191
  %v1193 = vmul.f32 %v1066, 1.442695
  %v1194 = vpow.pop %v1193
  %v1195 = vadd.f32 %v1068, 1.0
  %v1196 = vadd.f32 %v1070, 1.0
  %v1197 = vadd.f32 %v1072, 1.0
  %v1198 = vadd.f32 %v1074, 1.0
  %v1199 = vadd.f32 %v1076, 1.0
  %v1200 = vadd.f32 %v1078, 1.0
  %v1201 = vadd.f32 %v1080, 1.0
  %v1202 = vadd.f32 %v1082, 1.0
  %v1203 = vadd.f32 %v1084, 1.0
  %v1204 = vadd.f32 %v1086, 1.0
  %v1205 = vadd.f32 %v1088, 1.0
  %v1206 = vadd.f32 %v1090, 1.0
  %v1207 = vadd.f32 %v1092, 1.0
  %v1208 = vadd.f32 %v1094, 1.0
  %v1209 = vadd.f32 %v1096, 1.0
  %v1210 = vadd.f32 %v1098, 1.0
  %v1211 = vadd.f32 %v1100, 1.0
  %v1212 = vadd.f32 %v1102, 1.0
  %v1213 = vadd.f32 %v1104, 1.0
  %v1214 = vadd.f32 %v1106, 1.0
  %v1215 = vadd.f32 %v1108, 1.0
  %v1216 = vadd.f32 %v1110, 1.0
  %v1217 = vadd.f32 %v1112, 1.0
  %v1218 = vadd.f32 %v1114, 1.0
  %v1219 = vadd.f32 %v1116, 1.0
  %v1220 = vadd.f32 %v1118, 1.0
  %v1221 = vadd.f32 %v1120, 1.0
  %v1222 = vadd.f32 %v1122, 1.0
  %v1223 = vadd.f32 %v1124, 1.0
  %v1224 = vadd.f32 %v1126, 1.0
  %v1225 = vadd.f32 %v1128, 1.0
  %v1226 = vadd.f32 %v1130, 1.0
  %v1227 = vadd.f32 %v1132, 1.0
  %v1228 = vadd.f32 %v1134, 1.0
  %v1229 = vadd.f32 %v1136, 1.0
  %v1230 = vadd.f32 %v1138, 1.0
  %v1231 = vadd.f32 %v1140, 1.0
  %v1232 = vadd.f32 %v1142, 1.0
  %v1233 = vadd.f32 %v1144, 1.0
  %v1234 = vadd.f32 %v1146, 1.0
  %v1235 = vadd.f32 %v1148, 1.0
  %v1236 = vadd.f32 %v1150, 1.0
  %v1237 = vadd.f32 %v1152, 1.0
  %v1238 = vadd.f32 %v1154, 1.0
  %v1239 = vadd.f32 %v1156, 1.0
  %v1240 = vadd.f32 %v1158, 1.0
  %v1241 = vadd.f32 %v1160, 1.0
  %v1242 = vadd.f32 %v1162, 1.0
  %v1243 = vadd.f32 %v1164, 1.0
  %v1244 = vadd.f32 %v1166, 1.0
  %v1245 = vadd.f32 %v1168, 1.0
  %v1246 = vadd.f32 %v1170, 1.0
  %v1247 = vadd.f32 %v1172, 1.0
  %v1248 = vadd.f32 %v1174, 1.0
  %v1249 = vadd.f32 %v1176, 1.0
  %v1250 = vadd.f32 %v1178, 1.0
  %v1251 = vadd.f32 %v1180, 1.0
  %v1252 = vadd.f32 %v1182, 1.0
  %v1253 = vadd.f32 %v1184, 1.0
  %v1254 = vadd.f32 %v1186, 1.0
  %v1255 = vadd.f32 %v1188, 1.0
  %v1256 = vadd.f32 %v1190, 1.0
  %v1257 = vadd.f32 %v1192, 1.0
  %v1258 = vadd.f32 %v1194, 1.0
  %v1259 = vrcp.pop %v1195
  %v1260 = vmul.f32 1.0, %v1259
  %v1261 = vrcp.pop %v1196
  %v1262 = vmul.f32 1.0, %v1261
  %v1263 = vrcp.pop %v1197
  %v1264 = vmul.f32 1.0, %v1263
  %v1265 = vrcp.pop %v1198
  %v1266 = vmul.f32 1.0, %v1265
  %v1267 = vrcp.pop %v1199
  %v1268 = vmul.f32 1.0, %v1267
  %v1269 = vrcp.pop %v1200
  %v1270 = vmul.f32 1.0, %v1269
  %v1271 = vrcp.pop %v1201
  %v1272 = vmul.f32 1.0, %v1271
  %v1273 = vrcp.pop %v1202
  %v1274 = vmul.f32 1.0, %v1273
  %v1275 = vrcp.pop %v1203
  %v1276 = vmul.f32 1.0, %v1275
  %v1277 = vrcp.pop %v1204
  %v1278 = vmul.f32 1.0, %v1277
  %v1279 = vrcp.pop %v1205
  %v1280 = vmul.f32 1.0, %v1279
  %v1281 = vrcp.pop %v1206
  %v1282 = vmul.f32 1.0, %v1281
  %v1283 = vrcp.pop %v1207
  %v1284 = vmul.f32 1.0, %v1283
  %v1285 = vrcp.pop %v1208
  %v1286 = vmul.f32 1.0, %v1285
  %v1287 = vrcp.pop %v1209
  %v1288 = vmul.f32 1.0, %v1287
  %v1289 = vrcp.pop %v1210
  %v1290 = vmul.f32 1.0, %v1289
  %v1291 = vrcp.pop %v1211
  %v1292 = vmul.f32 1.0, %v1291
  %v1293 = vrcp.pop %v1212
  %v1294 = vmul.f32 1.0, %v1293
  %v1295 = vrcp.pop %v1213
  %v1296 = vmul.f32 1.0, %v1295
  %v1297 = vrcp.pop %v1214
  %v1298 = vmul.f32 1.0, %v1297
  %v1299 = vrcp.pop %v1215
  %v1300 = vmul.f32 1.0, %v1299
  %v1301 = vrcp.pop %v1216
  %v1302 = vmul.f32 1.0, %v1301
  %v1303 = vrcp.pop %v1217
  %v1304 = vmul.f32 1.0, %v1303
  %v1305 = vrcp.pop %v1218
  %v1306 = vmul.f32 1.0, %v1305
  %v1307 = vrcp.pop %v1219
  %v1308 = vmul.f32 1.0, %v1307
  %v1309 = vrcp.pop %v1220
  %v1310 = vmul.f32 1.0, %v1309
  %v1311 = vrcp.pop %v1221
  %v1312 = vmul.f32 1.0, %v1311
  %v1313 = vrcp.pop %v1222
  %v1314 = vmul.f32 1.0, %v1313
  %v1315 = vrcp.pop %v1223
  %v1316 = vmul.f32 1.0, %v1315
  %v1317 = vrcp.pop %v1224
  %v1318 = vmul.f32 1.0, %v1317
  %v1319 = vrcp.pop %v1225
  %v1320 = vmul.f32 1.0, %v1319
  %v1321 = vrcp.pop %v1226
  %v1322 = vmul.f32 1.0, %v1321
  %v1323 = vrcp.pop %v1227
  %v1324 = vmul.f32 1.0, %v1323
  %v1325 = vrcp.pop %v1228
  %v1326 = vmul.f32 1.0, %v1325
  %v1327 = vrcp.pop %v1229
  %v1328 = vmul.f32 1.0, %v1327
  %v1329 = vrcp.pop %v1230
  %v1330 = vmul.f32 1.0, %v1329
  %v1331 = vrcp.pop %v1231
  %v1332 = vmul.f32 1.0, %v1331
  %v1333 = vrcp.pop %v1232
  %v1334 = vmul.f32 1.0, %v1333
  %v1335 = vrcp.pop %v1233
  %v1336 = vmul.f32 1.0, %v1335
  %v1337 = vrcp.pop %v1234
  %v1338 = vmul.f32 1.0, %v1337
  %v1339 = vrcp.pop %v1235
  %v1340 = vmul.f32 1.0, %v1339
  %v1341 = vrcp.pop %v1236
  %v1342 = vmul.f32 1.0, %v1341
  %v1343 = vrcp.pop %v1237
  %v1344 = vmul.f32 1.0, %v1343
  %v1345 = vrcp.pop %v1238
  %v1346 = vmul.f32 1.0, %v1345
  %v1347 = vrcp.pop %v1239
  %v1348 = vmul.f32 1.0, %v1347
  %v1349 = vrcp.pop %v1240
  %v1350 = vmul.f32 1.0, %v1349
  %v1351 = vrcp.pop %v1241
  %v1352 = vmul.f32 1.0, %v1351
  %v1353 = vrcp.pop %v1242
  %v1354 = vmul.f32 1.0, %v1353
  %v1355 = vrcp.pop %v1243
  %v1356 = vmul.f32 1.0, %v1355
  %v1357 = vrcp.pop %v1244
  %v1358 = vmul.f32 1.0, %v1357
  %v1359 = vrcp.pop %v1245
  %v1360 = vmul.f32 1.0, %v1359
  %v1361 = vrcp.pop %v1246
  %v1362 = vmul.f32 1.0, %v1361
  %v1363 = vrcp.pop %v1247
  %v1364 = vmul.f32 1.0, %v1363
  %v1365 = vrcp.pop %v1248
  %v1366 = vmul.f32 1.0, %v1365
  %v1367 = vrcp.pop %v1249
  %v1368 = vmul.f32 1.0, %v1367
  %v1369 = vrcp.pop %v1250
  %v1370 = vmul.f32 1.0, %v1369
  %v1371 = vrcp.pop %v1251
  %v1372 = vmul.f32 1.0, %v1371
  %v1373 = vrcp.pop %v1252
  %v1374 = vmul.f32 1.0, %v1373
  %v1375 = vrcp.pop %v1253
  %v1376 = vmul.f32 1.0, %v1375
  %v1377 = vrcp.pop %v1254
  %v1378 = vmul.f32 1.0, %v1377
  %v1379 = vrcp.pop %v1255
  %v1380 = vmul.f32 1.0, %v1379
  %v1381 = vrcp.pop %v1256
  %v1382 = vmul.f32 1.0, %v1381
  %v1383 = vrcp.pop %v1257
  %v1384 = vmul.f32 1.0, %v1383
  %v1385 = vrcp.pop %v1258
  %v1386 = vmul.f32 1.0, %v1385
  %v1451 = vlaneseq
  %v1452 = vshrl.u32 %v1451, 7
  %v1453 = vsub.s32 0, %v1452
  %v1454 = vrot.slane %v1260, %v1453
  %v1455 = vlaneseq
  %v1456 = vshrl.u32 %v1455, 7
  %v1457 = vsub.s32 1, %v1456
  %v1458 = vrot.slane %v1260, %v1457
  %v1459 = vlaneseq
  %v1460 = vshrl.u32 %v1459, 7
  %v1461 = vsub.s32 2, %v1460
  %v1462 = vrot.slane %v1260, %v1461
  %v1463 = vlaneseq
  %v1464 = vshrl.u32 %v1463, 7
  %v1465 = vsub.s32 3, %v1464
  %v1466 = vrot.slane %v1260, %v1465
  %v1467 = vlaneseq
  %v1468 = vshrl.u32 %v1467, 7
  %v1469 = vsub.s32 4, %v1468
  %v1470 = vrot.slane %v1260, %v1469
  %v1471 = vlaneseq
  %v1472 = vshrl.u32 %v1471, 7
  %v1473 = vsub.s32 5, %v1472
  %v1474 = vrot.slane %v1260, %v1473
  %v1475 = vlaneseq
  %v1476 = vshrl.u32 %v1475, 7
  %v1477 = vsub.s32 6, %v1476
  %v1478 = vrot.slane %v1260, %v1477
  %v1479 = vlaneseq
  %v1480 = vshrl.u32 %v1479, 7
  %v1481 = vsub.s32 7, %v1480
  %v1482 = vrot.slane %v1260, %v1481
  %v1483 = vlaneseq
  %v1484 = vshrl.u32 %v1483, 7
  %v1485 = vsub.s32 0, %v1484
  %v1486 = vrot.slane %v1262, %v1485
  %v1487 = vlaneseq
  %v1488 = vshrl.u32 %v1487, 7
  %v1489 = vsub.s32 1, %v1488
  %v1490 = vrot.slane %v1262, %v1489
  %v1491 = vlaneseq
  %v1492 = vshrl.u32 %v1491, 7
  %v1493 = vsub.s32 2, %v1492
  %v1494 = vrot.slane %v1262, %v1493
  %v1495 = vlaneseq
  %v1496 = vshrl.u32 %v1495, 7
  %v1497 = vsub.s32 3, %v1496
  %v1498 = vrot.slane %v1262, %v1497
  %v1499 = vlaneseq
  %v1500 = vshrl.u32 %v1499, 7
  %v1501 = vsub.s32 4, %v1500
  %v1502 = vrot.slane %v1262, %v1501
  %v1503 = vlaneseq
  %v1504 = vshrl.u32 %v1503, 7
  %v1505 = vsub.s32 5, %v1504
  %v1506 = vrot.slane %v1262, %v1505
  %v1507 = vlaneseq
  %v1508 = vshrl.u32 %v1507, 7
  %v1509 = vsub.s32 6, %v1508
  %v1510 = vrot.slane %v1262, %v1509
  %v1511 = vlaneseq
  %v1512 = vshrl.u32 %v1511, 7
  %v1513 = vsub.s32 7, %v1512
  %v1514 = vrot.slane %v1262, %v1513
  %v1515 = vlaneseq
  %v1516 = vshrl.u32 %v1515, 7
  %v1517 = vsub.s32 0, %v1516
  %v1518 = vrot.slane %v1264, %v1517
  %v1519 = vlaneseq
  %v1520 = vshrl.u32 %v1519, 7
  %v1521 = vsub.s32 1, %v1520
  %v1522 = vrot.slane %v1264, %v1521
  %v1523 = vlaneseq
  %v1524 = vshrl.u32 %v1523, 7
  %v1525 = vsub.s32 2, %v1524
  %v1526 = vrot.slane %v1264, %v1525
  %v1527 = vlaneseq
  %v1528 = vshrl.u32 %v1527, 7
  %v1529 = vsub.s32 3, %v1528
  %v1530 = vrot.slane %v1264, %v1529
  %v1531 = vlaneseq
  %v1532 = vshrl.u32 %v1531, 7
  %v1533 = vsub.s32 4, %v1532
  %v1534 = vrot.slane %v1264, %v1533
  %v1535 = vlaneseq
  %v1536 = vshrl.u32 %v1535, 7
  %v1537 = vsub.s32 5, %v1536
  %v1538 = vrot.slane %v1264, %v1537
  %v1539 = vlaneseq
  %v1540 = vshrl.u32 %v1539, 7
  %v1541 = vsub.s32 6, %v1540
  %v1542 = vrot.slane %v1264, %v1541
  %v1543 = vlaneseq
  %v1544 = vshrl.u32 %v1543, 7
  %v1545 = vsub.s32 7, %v1544
  %v1546 = vrot.slane %v1264, %v1545
  %v1547 = vlaneseq
  %v1548 = vshrl.u32 %v1547, 7
  %v1549 = vsub.s32 0, %v1548
  %v1550 = vrot.slane %v1266, %v1549
  %v1551 = vlaneseq
  %v1552 = vshrl.u32 %v1551, 7
  %v1553 = vsub.s32 1, %v1552
  %v1554 = vrot.slane %v1266, %v1553
  %v1555 = vlaneseq
  %v1556 = vshrl.u32 %v1555, 7
  %v1557 = vsub.s32 2, %v1556
  %v1558 = vrot.slane %v1266, %v1557
  %v1559 = vlaneseq
  %v1560 = vshrl.u32 %v1559, 7
  %v1561 = vsub.s32 3, %v1560
  %v1562 = vrot.slane %v1266, %v1561
  %v1563 = vlaneseq
  %v1564 = vshrl.u32 %v1563, 7
  %v1565 = vsub.s32 4, %v1564
  %v1566 = vrot.slane %v1266, %v1565
  %v1567 = vlaneseq
  %v1568 = vshrl.u32 %v1567, 7
  %v1569 = vsub.s32 5, %v1568
  %v1570 = vrot.slane %v1266, %v1569
  %v1571 = vlaneseq
  %v1572 = vshrl.u32 %v1571, 7
  %v1573 = vsub.s32 6, %v1572
  %v1574 = vrot.slane %v1266, %v1573
  %v1575 = vlaneseq
  %v1576 = vshrl.u32 %v1575, 7
  %v1577 = vsub.s32 7, %v1576
  %v1578 = vrot.slane %v1266, %v1577
  %v1579 = vlaneseq
  %v1580 = vshrl.u32 %v1579, 7
  %v1581 = vsub.s32 0, %v1580
  %v1582 = vrot.slane %v1268, %v1581
  %v1583 = vlaneseq
  %v1584 = vshrl.u32 %v1583, 7
  %v1585 = vsub.s32 1, %v1584
  %v1586 = vrot.slane %v1268, %v1585
  %v1587 = vlaneseq
  %v1588 = vshrl.u32 %v1587, 7
  %v1589 = vsub.s32 2, %v1588
  %v1590 = vrot.slane %v1268, %v1589
  %v1591 = vlaneseq
  %v1592 = vshrl.u32 %v1591, 7
  %v1593 = vsub.s32 3, %v1592
  %v1594 = vrot.slane %v1268, %v1593
  %v1595 = vlaneseq
  %v1596 = vshrl.u32 %v1595, 7
  %v1597 = vsub.s32 4, %v1596
  %v1598 = vrot.slane %v1268, %v1597
  %v1599 = vlaneseq
  %v1600 = vshrl.u32 %v1599, 7
  %v1601 = vsub.s32 5, %v1600
  %v1602 = vrot.slane %v1268, %v1601
  %v1603 = vlaneseq
  %v1604 = vshrl.u32 %v1603, 7
  %v1605 = vsub.s32 6, %v1604
  %v1606 = vrot.slane %v1268, %v1605
  %v1607 = vlaneseq
  %v1608 = vshrl.u32 %v1607, 7
  %v1609 = vsub.s32 7, %v1608
  %v1610 = vrot.slane %v1268, %v1609
  %v1611 = vlaneseq
  %v1612 = vshrl.u32 %v1611, 7
  %v1613 = vsub.s32 0, %v1612
  %v1614 = vrot.slane %v1270, %v1613
  %v1615 = vlaneseq
  %v1616 = vshrl.u32 %v1615, 7
  %v1617 = vsub.s32 1, %v1616
  %v1618 = vrot.slane %v1270, %v1617
  %v1619 = vlaneseq
  %v1620 = vshrl.u32 %v1619, 7
  %v1621 = vsub.s32 2, %v1620
  %v1622 = vrot.slane %v1270, %v1621
  %v1623 = vlaneseq
  %v1624 = vshrl.u32 %v1623, 7
  %v1625 = vsub.s32 3, %v1624
  %v1626 = vrot.slane %v1270, %v1625
  %v1627 = vlaneseq
  %v1628 = vshrl.u32 %v1627, 7
  %v1629 = vsub.s32 4, %v1628
  %v1630 = vrot.slane %v1270, %v1629
  %v1631 = vlaneseq
  %v1632 = vshrl.u32 %v1631, 7
  %v1633 = vsub.s32 5, %v1632
  %v1634 = vrot.slane %v1270, %v1633
  %v1635 = vlaneseq
  %v1636 = vshrl.u32 %v1635, 7
  %v1637 = vsub.s32 6, %v1636
  %v1638 = vrot.slane %v1270, %v1637
  %v1639 = vlaneseq
  %v1640 = vshrl.u32 %v1639, 7
  %v1641 = vsub.s32 7, %v1640
  %v1642 = vrot.slane %v1270, %v1641
  %v1643 = vlaneseq
  %v1644 = vshrl.u32 %v1643, 7
  %v1645 = vsub.s32 0, %v1644
  %v1646 = vrot.slane %v1272, %v1645
  %v1647 = vlaneseq
  %v1648 = vshrl.u32 %v1647, 7
  %v1649 = vsub.s32 1, %v1648
  %v1650 = vrot.slane %v1272, %v1649
  %v1651 = vlaneseq
  %v1652 = vshrl.u32 %v1651, 7
  %v1653 = vsub.s32 2, %v1652
  %v1654 = vrot.slane %v1272, %v1653
  %v1655 = vlaneseq
  %v1656 = vshrl.u32 %v1655, 7
  %v1657 = vsub.s32 3, %v1656
  %v1658 = vrot.slane %v1272, %v1657
  %v1659 = vlaneseq
  %v1660 = vshrl.u32 %v1659, 7
  %v1661 = vsub.s32 4, %v1660
  %v1662 = vrot.slane %v1272, %v1661
  %v1663 = vlaneseq
  %v1664 = vshrl.u32 %v1663, 7
  %v1665 = vsub.s32 5, %v1664
  %v1666 = vrot.slane %v1272, %v1665
  %v1667 = vlaneseq
  %v1668 = vshrl.u32 %v1667, 7
  %v1669 = vsub.s32 6, %v1668
  %v1670 = vrot.slane %v1272, %v1669
  %v1671 = vlaneseq
  %v1672 = vshrl.u32 %v1671, 7
  %v1673 = vsub.s32 7, %v1672
  %v1674 = vrot.slane %v1272, %v1673
  %v1675 = vlaneseq
  %v1676 = vshrl.u32 %v1675, 7
  %v1677 = vsub.s32 0, %v1676
  %v1678 = vrot.slane %v1274, %v1677
  %v1679 = vlaneseq
  %v1680 = vshrl.u32 %v1679, 7
  %v1681 = vsub.s32 1, %v1680
  %v1682 = vrot.slane %v1274, %v1681
  %v1683 = vlaneseq
  %v1684 = vshrl.u32 %v1683, 7
  %v1685 = vsub.s32 2, %v1684
  %v1686 = vrot.slane %v1274, %v1685
  %v1687 = vlaneseq
  %v1688 = vshrl.u32 %v1687, 7
  %v1689 = vsub.s32 3, %v1688
  %v1690 = vrot.slane %v1274, %v1689
  %v1691 = vlaneseq
  %v1692 = vshrl.u32 %v1691, 7
  %v1693 = vsub.s32 4, %v1692
  %v1694 = vrot.slane %v1274, %v1693
  %v1695 = vlaneseq
  %v1696 = vshrl.u32 %v1695, 7
  %v1697 = vsub.s32 5, %v1696
  %v1698 = vrot.slane %v1274, %v1697
  %v1699 = vlaneseq
  %v1700 = vshrl.u32 %v1699, 7
  %v1701 = vsub.s32 6, %v1700
  %v1702 = vrot.slane %v1274, %v1701
  %v1703 = vlaneseq
  %v1704 = vshrl.u32 %v1703, 7
  %v1705 = vsub.s32 7, %v1704
  %v1706 = vrot.slane %v1274, %v1705
  %v1707 = vlaneseq
  %v1708 = vshrl.u32 %v1707, 7
  %v1709 = vsub.s32 0, %v1708
  %v1710 = vrot.slane %v1276, %v1709
  %v1711 = vlaneseq
  %v1712 = vshrl.u32 %v1711, 7
  %v1713 = vsub.s32 1, %v1712
  %v1714 = vrot.slane %v1276, %v1713
  %v1715 = vlaneseq
  %v1716 = vshrl.u32 %v1715, 7
  %v1717 = vsub.s32 2, %v1716
  %v1718 = vrot.slane %v1276, %v1717
  %v1719 = vlaneseq
  %v1720 = vshrl.u32 %v1719, 7
  %v1721 = vsub.s32 3, %v1720
  %v1722 = vrot.slane %v1276, %v1721
  %v1723 = vlaneseq
  %v1724 = vshrl.u32 %v1723, 7
  %v1725 = vsub.s32 4, %v1724
  %v1726 = vrot.slane %v1276, %v1725
  %v1727 = vlaneseq
  %v1728 = vshrl.u32 %v1727, 7
  %v1729 = vsub.s32 5, %v1728
  %v1730 = vrot.slane %v1276, %v1729
  %v1731 = vlaneseq
  %v1732 = vshrl.u32 %v1731, 7
  %v1733 = vsub.s32 6, %v1732
  %v1734 = vrot.slane %v1276, %v1733
  %v1735 = vlaneseq
  %v1736 = vshrl.u32 %v1735, 7
  %v1737 = vsub.s32 7, %v1736
  %v1738 = vrot.slane %v1276, %v1737
  %v1739 = vlaneseq
  %v1740 = vshrl.u32 %v1739, 7
  %v1741 = vsub.s32 0, %v1740
  %v1742 = vrot.slane %v1278, %v1741
  %v1743 = vlaneseq
  %v1744 = vshrl.u32 %v1743, 7
  %v1745 = vsub.s32 1, %v1744
  %v1746 = vrot.slane %v1278, %v1745
  %v1747 = vlaneseq
  %v1748 = vshrl.u32 %v1747, 7
  %v1749 = vsub.s32 2, %v1748
  %v1750 = vrot.slane %v1278, %v1749
  %v1751 = vlaneseq
  %v1752 = vshrl.u32 %v1751, 7
  %v1753 = vsub.s32 3, %v1752
  %v1754 = vrot.slane %v1278, %v1753
  %v1755 = vlaneseq
  %v1756 = vshrl.u32 %v1755, 7
  %v1757 = vsub.s32 4, %v1756
  %v1758 = vrot.slane %v1278, %v1757
  %v1759 = vlaneseq
  %v1760 = vshrl.u32 %v1759, 7
  %v1761 = vsub.s32 5, %v1760
  %v1762 = vrot.slane %v1278, %v1761
  %v1763 = vlaneseq
  %v1764 = vshrl.u32 %v1763, 7
  %v1765 = vsub.s32 6, %v1764
  %v1766 = vrot.slane %v1278, %v1765
  %v1767 = vlaneseq
  %v1768 = vshrl.u32 %v1767, 7
  %v1769 = vsub.s32 7, %v1768
  %v1770 = vrot.slane %v1278, %v1769
  %v1771 = vlaneseq
  %v1772 = vshrl.u32 %v1771, 7
  %v1773 = vsub.s32 0, %v1772
  %v1774 = vrot.slane %v1280, %v1773
  %v1775 = vlaneseq
  %v1776 = vshrl.u32 %v1775, 7
  %v1777 = vsub.s32 1, %v1776
  %v1778 = vrot.slane %v1280, %v1777
  %v1779 = vlaneseq
  %v1780 = vshrl.u32 %v1779, 7
  %v1781 = vsub.s32 2, %v1780
  %v1782 = vrot.slane %v1280, %v1781
  %v1783 = vlaneseq
  %v1784 = vshrl.u32 %v1783, 7
  %v1785 = vsub.s32 3, %v1784
  %v1786 = vrot.slane %v1280, %v1785
  %v1787 = vlaneseq
  %v1788 = vshrl.u32 %v1787, 7
  %v1789 = vsub.s32 4, %v1788
  %v1790 = vrot.slane %v1280, %v1789
  %v1791 = vlaneseq
  %v1792 = vshrl.u32 %v1791, 7
  %v1793 = vsub.s32 5, %v1792
  %v1794 = vrot.slane %v1280, %v1793
  %v1795 = vlaneseq
  %v1796 = vshrl.u32 %v1795, 7
  %v1797 = vsub.s32 6, %v1796
  %v1798 = vrot.slane %v1280, %v1797
  %v1799 = vlaneseq
  %v1800 = vshrl.u32 %v1799, 7
  %v1801 = vsub.s32 7, %v1800
  %v1802 = vrot.slane %v1280, %v1801
  %v1803 = vlaneseq
  %v1804 = vshrl.u32 %v1803, 7
  %v1805 = vsub.s32 0, %v1804
  %v1806 = vrot.slane %v1282, %v1805
  %v1807 = vlaneseq
  %v1808 = vshrl.u32 %v1807, 7
  %v1809 = vsub.s32 1, %v1808
  %v1810 = vrot.slane %v1282, %v1809
  %v1811 = vlaneseq
  %v1812 = vshrl.u32 %v1811, 7
  %v1813 = vsub.s32 2, %v1812
  %v1814 = vrot.slane %v1282, %v1813
  %v1815 = vlaneseq
  %v1816 = vshrl.u32 %v1815, 7
  %v1817 = vsub.s32 3, %v1816
  %v1818 = vrot.slane %v1282, %v1817
  %v1819 = vlaneseq
  %v1820 = vshrl.u32 %v1819, 7
  %v1821 = vsub.s32 4, %v1820
  %v1822 = vrot.slane %v1282, %v1821
  %v1823 = vlaneseq
  %v1824 = vshrl.u32 %v1823, 7
  %v1825 = vsub.s32 5, %v1824
  %v1826 = vrot.slane %v1282, %v1825
  %v1827 = vlaneseq
  %v1828 = vshrl.u32 %v1827, 7
  %v1829 = vsub.s32 6, %v1828
  %v1830 = vrot.slane %v1282, %v1829
  %v1831 = vlaneseq
  %v1832 = vshrl.u32 %v1831, 7
  %v1833 = vsub.s32 7, %v1832
  %v1834 = vrot.slane %v1282, %v1833
  %v1835 = vlaneseq
  %v1836 = vshrl.u32 %v1835, 7
  %v1837 = vsub.s32 0, %v1836
  %v1838 = vrot.slane %v1284, %v1837
  %v1839 = vlaneseq
  %v1840 = vshrl.u32 %v1839, 7
  %v1841 = vsub.s32 1, %v1840
  %v1842 = vrot.slane %v1284, %v1841
  %v1843 = vlaneseq
  %v1844 = vshrl.u32 %v1843, 7
  %v1845 = vsub.s32 2, %v1844
  %v1846 = vrot.slane %v1284, %v1845
  %v1847 = vlaneseq
  %v1848 = vshrl.u32 %v1847, 7
  %v1849 = vsub.s32 3, %v1848
  %v1850 = vrot.slane %v1284, %v1849
  %v1851 = vlaneseq
  %v1852 = vshrl.u32 %v1851, 7
  %v1853 = vsub.s32 4, %v1852
  %v1854 = vrot.slane %v1284, %v1853
  %v1855 = vlaneseq
  %v1856 = vshrl.u32 %v1855, 7
  %v1857 = vsub.s32 5, %v1856
  %v1858 = vrot.slane %v1284, %v1857
  %v1859 = vlaneseq
  %v1860 = vshrl.u32 %v1859, 7
  %v1861 = vsub.s32 6, %v1860
  %v1862 = vrot.slane %v1284, %v1861
  %v1863 = vlaneseq
  %v1864 = vshrl.u32 %v1863, 7
  %v1865 = vsub.s32 7, %v1864
  %v1866 = vrot.slane %v1284, %v1865
  %v1867 = vlaneseq
  %v1868 = vshrl.u32 %v1867, 7
  %v1869 = vsub.s32 0, %v1868
  %v1870 = vrot.slane %v1286, %v1869
  %v1871 = vlaneseq
  %v1872 = vshrl.u32 %v1871, 7
  %v1873 = vsub.s32 1, %v1872
  %v1874 = vrot.slane %v1286, %v1873
  %v1875 = vlaneseq
  %v1876 = vshrl.u32 %v1875, 7
  %v1877 = vsub.s32 2, %v1876
  %v1878 = vrot.slane %v1286, %v1877
  %v1879 = vlaneseq
  %v1880 = vshrl.u32 %v1879, 7
  %v1881 = vsub.s32 3, %v1880
  %v1882 = vrot.slane %v1286, %v1881
  %v1883 = vlaneseq
  %v1884 = vshrl.u32 %v1883, 7
  %v1885 = vsub.s32 4, %v1884
  %v1886 = vrot.slane %v1286, %v1885
  %v1887 = vlaneseq
  %v1888 = vshrl.u32 %v1887, 7
  %v1889 = vsub.s32 5, %v1888
  %v1890 = vrot.slane %v1286, %v1889
  %v1891 = vlaneseq
  %v1892 = vshrl.u32 %v1891, 7
  %v1893 = vsub.s32 6, %v1892
  %v1894 = vrot.slane %v1286, %v1893
  %v1895 = vlaneseq
  %v1896 = vshrl.u32 %v1895, 7
  %v1897 = vsub.s32 7, %v1896
  %v1898 = vrot.slane %v1286, %v1897
  %v1899 = vlaneseq
  %v1900 = vshrl.u32 %v1899, 7
  %v1901 = vsub.s32 0, %v1900
  %v1902 = vrot.slane %v1288, %v1901
  %v1903 = vlaneseq
  %v1904 = vshrl.u32 %v1903, 7
  %v1905 = vsub.s32 1, %v1904
  %v1906 = vrot.slane %v1288, %v1905
  %v1907 = vlaneseq
  %v1908 = vshrl.u32 %v1907, 7
  %v1909 = vsub.s32 2, %v1908
  %v1910 = vrot.slane %v1288, %v1909
  %v1911 = vlaneseq
  %v1912 = vshrl.u32 %v1911, 7
  %v1913 = vsub.s32 3, %v1912
  %v1914 = vrot.slane %v1288, %v1913
  %v1915 = vlaneseq
  %v1916 = vshrl.u32 %v1915, 7
  %v1917 = vsub.s32 4, %v1916
  %v1918 = vrot.slane %v1288, %v1917
  %v1919 = vlaneseq
  %v1920 = vshrl.u32 %v1919, 7
  %v1921 = vsub.s32 5, %v1920
  %v1922 = vrot.slane %v1288, %v1921
  %v1923 = vlaneseq
  %v1924 = vshrl.u32 %v1923, 7
  %v1925 = vsub.s32 6, %v1924
  %v1926 = vrot.slane %v1288, %v1925
  %v1927 = vlaneseq
  %v1928 = vshrl.u32 %v1927, 7
  %v1929 = vsub.s32 7, %v1928
  %v1930 = vrot.slane %v1288, %v1929
  %v1931 = vlaneseq
  %v1932 = vshrl.u32 %v1931, 7
  %v1933 = vsub.s32 0, %v1932
  %v1934 = vrot.slane %v1290, %v1933
  %v1935 = vlaneseq
  %v1936 = vshrl.u32 %v1935, 7
  %v1937 = vsub.s32 1, %v1936
  %v1938 = vrot.slane %v1290, %v1937
  %v1939 = vlaneseq
  %v1940 = vshrl.u32 %v1939, 7
  %v1941 = vsub.s32 2, %v1940
  %v1942 = vrot.slane %v1290, %v1941
  %v1943 = vlaneseq
  %v1944 = vshrl.u32 %v1943, 7
  %v1945 = vsub.s32 3, %v1944
  %v1946 = vrot.slane %v1290, %v1945
  %v1947 = vlaneseq
  %v1948 = vshrl.u32 %v1947, 7
  %v1949 = vsub.s32 4, %v1948
  %v1950 = vrot.slane %v1290, %v1949
  %v1951 = vlaneseq
  %v1952 = vshrl.u32 %v1951, 7
  %v1953 = vsub.s32 5, %v1952
  %v1954 = vrot.slane %v1290, %v1953
  %v1955 = vlaneseq
  %v1956 = vshrl.u32 %v1955, 7
  %v1957 = vsub.s32 6, %v1956
  %v1958 = vrot.slane %v1290, %v1957
  %v1959 = vlaneseq
  %v1960 = vshrl.u32 %v1959, 7
  %v1961 = vsub.s32 7, %v1960
  %v1962 = vrot.slane %v1290, %v1961
  %v1963 = vlaneseq
  %v1964 = vshrl.u32 %v1963, 7
  %v1965 = vsub.s32 0, %v1964
  %v1966 = vrot.slane %v1292, %v1965
  %v1967 = vlaneseq
  %v1968 = vshrl.u32 %v1967, 7
  %v1969 = vsub.s32 1, %v1968
  %v1970 = vrot.slane %v1292, %v1969
  %v1971 = vlaneseq
  %v1972 = vshrl.u32 %v1971, 7
  %v1973 = vsub.s32 2, %v1972
  %v1974 = vrot.slane %v1292, %v1973
  %v1975 = vlaneseq
  %v1976 = vshrl.u32 %v1975, 7
  %v1977 = vsub.s32 3, %v1976
  %v1978 = vrot.slane %v1292, %v1977
  %v1979 = vlaneseq
  %v1980 = vshrl.u32 %v1979, 7
  %v1981 = vsub.s32 4, %v1980
  %v1982 = vrot.slane %v1292, %v1981
  %v1983 = vlaneseq
  %v1984 = vshrl.u32 %v1983, 7
  %v1985 = vsub.s32 5, %v1984
  %v1986 = vrot.slane %v1292, %v1985
  %v1987 = vlaneseq
  %v1988 = vshrl.u32 %v1987, 7
  %v1989 = vsub.s32 6, %v1988
  %v1990 = vrot.slane %v1292, %v1989
  %v1991 = vlaneseq
  %v1992 = vshrl.u32 %v1991, 7
  %v1993 = vsub.s32 7, %v1992
  %v1994 = vrot.slane %v1292, %v1993
  %v1995 = vlaneseq
  %v1996 = vshrl.u32 %v1995, 7
  %v1997 = vsub.s32 0, %v1996
  %v1998 = vrot.slane %v1294, %v1997
  %v1999 = vlaneseq
  %v2000 = vshrl.u32 %v1999, 7
  %v2001 = vsub.s32 1, %v2000
  %v2002 = vrot.slane %v1294, %v2001
  %v2003 = vlaneseq
  %v2004 = vshrl.u32 %v2003, 7
  %v2005 = vsub.s32 2, %v2004
  %v2006 = vrot.slane %v1294, %v2005
  %v2007 = vlaneseq
  %v2008 = vshrl.u32 %v2007, 7
  %v2009 = vsub.s32 3, %v2008
  %v2010 = vrot.slane %v1294, %v2009
  %v2011 = vlaneseq
  %v2012 = vshrl.u32 %v2011, 7
  %v2013 = vsub.s32 4, %v2012
  %v2014 = vrot.slane %v1294, %v2013
  %v2015 = vlaneseq
  %v2016 = vshrl.u32 %v2015, 7
  %v2017 = vsub.s32 5, %v2016
  %v2018 = vrot.slane %v1294, %v2017
  %v2019 = vlaneseq
  %v2020 = vshrl.u32 %v2019, 7
  %v2021 = vsub.s32 6, %v2020
  %v2022 = vrot.slane %v1294, %v2021
  %v2023 = vlaneseq
  %v2024 = vshrl.u32 %v2023, 7
  %v2025 = vsub.s32 7, %v2024
  %v2026 = vrot.slane %v1294, %v2025
  %v2027 = vlaneseq
  %v2028 = vshrl.u32 %v2027, 7
  %v2029 = vsub.s32 0, %v2028
  %v2030 = vrot.slane %v1296, %v2029
  %v2031 = vlaneseq
  %v2032 = vshrl.u32 %v2031, 7
  %v2033 = vsub.s32 1, %v2032
  %v2034 = vrot.slane %v1296, %v2033
  %v2035 = vlaneseq
  %v2036 = vshrl.u32 %v2035, 7
  %v2037 = vsub.s32 2, %v2036
  %v2038 = vrot.slane %v1296, %v2037
  %v2039 = vlaneseq
  %v2040 = vshrl.u32 %v2039, 7
  %v2041 = vsub.s32 3, %v2040
  %v2042 = vrot.slane %v1296, %v2041
  %v2043 = vlaneseq
  %v2044 = vshrl.u32 %v2043, 7
  %v2045 = vsub.s32 4, %v2044
  %v2046 = vrot.slane %v1296, %v2045
  %v2047 = vlaneseq
  %v2048 = vshrl.u32 %v2047, 7
  %v2049 = vsub.s32 5, %v2048
  %v2050 = vrot.slane %v1296, %v2049
  %v2051 = vlaneseq
  %v2052 = vshrl.u32 %v2051, 7
  %v2053 = vsub.s32 6, %v2052
  %v2054 = vrot.slane %v1296, %v2053
  %v2055 = vlaneseq
  %v2056 = vshrl.u32 %v2055, 7
  %v2057 = vsub.s32 7, %v2056
  %v2058 = vrot.slane %v1296, %v2057
  %v2059 = vlaneseq
  %v2060 = vshrl.u32 %v2059, 7
  %v2061 = vsub.s32 0, %v2060
  %v2062 = vrot.slane %v1298, %v2061
  %v2063 = vlaneseq
  %v2064 = vshrl.u32 %v2063, 7
  %v2065 = vsub.s32 1, %v2064
  %v2066 = vrot.slane %v1298, %v2065
  %v2067 = vlaneseq
  %v2068 = vshrl.u32 %v2067, 7
  %v2069 = vsub.s32 2, %v2068
  %v2070 = vrot.slane %v1298, %v2069
  %v2071 = vlaneseq
  %v2072 = vshrl.u32 %v2071, 7
  %v2073 = vsub.s32 3, %v2072
  %v2074 = vrot.slane %v1298, %v2073
  %v2075 = vlaneseq
  %v2076 = vshrl.u32 %v2075, 7
  %v2077 = vsub.s32 4, %v2076
  %v2078 = vrot.slane %v1298, %v2077
  %v2079 = vlaneseq
  %v2080 = vshrl.u32 %v2079, 7
  %v2081 = vsub.s32 5, %v2080
  %v2082 = vrot.slane %v1298, %v2081
  %v2083 = vlaneseq
  %v2084 = vshrl.u32 %v2083, 7
  %v2085 = vsub.s32 6, %v2084
  %v2086 = vrot.slane %v1298, %v2085
  %v2087 = vlaneseq
  %v2088 = vshrl.u32 %v2087, 7
  %v2089 = vsub.s32 7, %v2088
  %v2090 = vrot.slane %v1298, %v2089
  %v2091 = vlaneseq
  %v2092 = vshrl.u32 %v2091, 7
  %v2093 = vsub.s32 0, %v2092
  %v2094 = vrot.slane %v1300, %v2093
  %v2095 = vlaneseq
  %v2096 = vshrl.u32 %v2095, 7
  %v2097 = vsub.s32 1, %v2096
  %v2098 = vrot.slane %v1300, %v2097
  %v2099 = vlaneseq
  %v2100 = vshrl.u32 %v2099, 7
  %v2101 = vsub.s32 2, %v2100
  %v2102 = vrot.slane %v1300, %v2101
  %v2103 = vlaneseq
  %v2104 = vshrl.u32 %v2103, 7
  %v2105 = vsub.s32 3, %v2104
  %v2106 = vrot.slane %v1300, %v2105
  %v2107 = vlaneseq
  %v2108 = vshrl.u32 %v2107, 7
  %v2109 = vsub.s32 4, %v2108
  %v2110 = vrot.slane %v1300, %v2109
  %v2111 = vlaneseq
  %v2112 = vshrl.u32 %v2111, 7
  %v2113 = vsub.s32 5, %v2112
  %v2114 = vrot.slane %v1300, %v2113
  %v2115 = vlaneseq
  %v2116 = vshrl.u32 %v2115, 7
  %v2117 = vsub.s32 6, %v2116
  %v2118 = vrot.slane %v1300, %v2117
  %v2119 = vlaneseq
  %v2120 = vshrl.u32 %v2119, 7
  %v2121 = vsub.s32 7, %v2120
  %v2122 = vrot.slane %v1300, %v2121
  %v2123 = vlaneseq
  %v2124 = vshrl.u32 %v2123, 7
  %v2125 = vsub.s32 0, %v2124
  %v2126 = vrot.slane %v1302, %v2125
  %v2127 = vlaneseq
  %v2128 = vshrl.u32 %v2127, 7
  %v2129 = vsub.s32 1, %v2128
  %v2130 = vrot.slane %v1302, %v2129
  %v2131 = vlaneseq
  %v2132 = vshrl.u32 %v2131, 7
  %v2133 = vsub.s32 2, %v2132
  %v2134 = vrot.slane %v1302, %v2133
  %v2135 = vlaneseq
  %v2136 = vshrl.u32 %v2135, 7
  %v2137 = vsub.s32 3, %v2136
  %v2138 = vrot.slane %v1302, %v2137
  %v2139 = vlaneseq
  %v2140 = vshrl.u32 %v2139, 7
  %v2141 = vsub.s32 4, %v2140
  %v2142 = vrot.slane %v1302, %v2141
  %v2143 = vlaneseq
  %v2144 = vshrl.u32 %v2143, 7
  %v2145 = vsub.s32 5, %v2144
  %v2146 = vrot.slane %v1302, %v2145
  %v2147 = vlaneseq
  %v2148 = vshrl.u32 %v2147, 7
  %v2149 = vsub.s32 6, %v2148
  %v2150 = vrot.slane %v1302, %v2149
  %v2151 = vlaneseq
  %v2152 = vshrl.u32 %v2151, 7
  %v2153 = vsub.s32 7, %v2152
  %v2154 = vrot.slane %v1302, %v2153
  %v2155 = vlaneseq
  %v2156 = vshrl.u32 %v2155, 7
  %v2157 = vsub.s32 0, %v2156
  %v2158 = vrot.slane %v1304, %v2157
  %v2159 = vlaneseq
  %v2160 = vshrl.u32 %v2159, 7
  %v2161 = vsub.s32 1, %v2160
  %v2162 = vrot.slane %v1304, %v2161
  %v2163 = vlaneseq
  %v2164 = vshrl.u32 %v2163, 7
  %v2165 = vsub.s32 2, %v2164
  %v2166 = vrot.slane %v1304, %v2165
  %v2167 = vlaneseq
  %v2168 = vshrl.u32 %v2167, 7
  %v2169 = vsub.s32 3, %v2168
  %v2170 = vrot.slane %v1304, %v2169
  %v2171 = vlaneseq
  %v2172 = vshrl.u32 %v2171, 7
  %v2173 = vsub.s32 4, %v2172
  %v2174 = vrot.slane %v1304, %v2173
  %v2175 = vlaneseq
  %v2176 = vshrl.u32 %v2175, 7
  %v2177 = vsub.s32 5, %v2176
  %v2178 = vrot.slane %v1304, %v2177
  %v2179 = vlaneseq
  %v2180 = vshrl.u32 %v2179, 7
  %v2181 = vsub.s32 6, %v2180
  %v2182 = vrot.slane %v1304, %v2181
  %v2183 = vlaneseq
  %v2184 = vshrl.u32 %v2183, 7
  %v2185 = vsub.s32 7, %v2184
  %v2186 = vrot.slane %v1304, %v2185
  %v2187 = vlaneseq
  %v2188 = vshrl.u32 %v2187, 7
  %v2189 = vsub.s32 0, %v2188
  %v2190 = vrot.slane %v1306, %v2189
  %v2191 = vlaneseq
  %v2192 = vshrl.u32 %v2191, 7
  %v2193 = vsub.s32 1, %v2192
  %v2194 = vrot.slane %v1306, %v2193
  %v2195 = vlaneseq
  %v2196 = vshrl.u32 %v2195, 7
  %v2197 = vsub.s32 2, %v2196
  %v2198 = vrot.slane %v1306, %v2197
  %v2199 = vlaneseq
  %v2200 = vshrl.u32 %v2199, 7
  %v2201 = vsub.s32 3, %v2200
  %v2202 = vrot.slane %v1306, %v2201
  %v2203 = vlaneseq
  %v2204 = vshrl.u32 %v2203, 7
  %v2205 = vsub.s32 4, %v2204
  %v2206 = vrot.slane %v1306, %v2205
  %v2207 = vlaneseq
  %v2208 = vshrl.u32 %v2207, 7
  %v2209 = vsub.s32 5, %v2208
  %v2210 = vrot.slane %v1306, %v2209
  %v2211 = vlaneseq
  %v2212 = vshrl.u32 %v2211, 7
  %v2213 = vsub.s32 6, %v2212
  %v2214 = vrot.slane %v1306, %v2213
  %v2215 = vlaneseq
  %v2216 = vshrl.u32 %v2215, 7
  %v2217 = vsub.s32 7, %v2216
  %v2218 = vrot.slane %v1306, %v2217
  %v2219 = vlaneseq
  %v2220 = vshrl.u32 %v2219, 7
  %v2221 = vsub.s32 0, %v2220
  %v2222 = vrot.slane %v1308, %v2221
  %v2223 = vlaneseq
  %v2224 = vshrl.u32 %v2223, 7
  %v2225 = vsub.s32 1, %v2224
  %v2226 = vrot.slane %v1308, %v2225
  %v2227 = vlaneseq
  %v2228 = vshrl.u32 %v2227, 7
  %v2229 = vsub.s32 2, %v2228
  %v2230 = vrot.slane %v1308, %v2229
  %v2231 = vlaneseq
  %v2232 = vshrl.u32 %v2231, 7
  %v2233 = vsub.s32 3, %v2232
  %v2234 = vrot.slane %v1308, %v2233
  %v2235 = vlaneseq
  %v2236 = vshrl.u32 %v2235, 7
  %v2237 = vsub.s32 4, %v2236
  %v2238 = vrot.slane %v1308, %v2237
  %v2239 = vlaneseq
  %v2240 = vshrl.u32 %v2239, 7
  %v2241 = vsub.s32 5, %v2240
  %v2242 = vrot.slane %v1308, %v2241
  %v2243 = vlaneseq
  %v2244 = vshrl.u32 %v2243, 7
  %v2245 = vsub.s32 6, %v2244
  %v2246 = vrot.slane %v1308, %v2245
  %v2247 = vlaneseq
  %v2248 = vshrl.u32 %v2247, 7
  %v2249 = vsub.s32 7, %v2248
  %v2250 = vrot.slane %v1308, %v2249
  %v2251 = vlaneseq
  %v2252 = vshrl.u32 %v2251, 7
  %v2253 = vsub.s32 0, %v2252
  %v2254 = vrot.slane %v1310, %v2253
  %v2255 = vlaneseq
  %v2256 = vshrl.u32 %v2255, 7
  %v2257 = vsub.s32 1, %v2256
  %v2258 = vrot.slane %v1310, %v2257
  %v2259 = vlaneseq
  %v2260 = vshrl.u32 %v2259, 7
  %v2261 = vsub.s32 2, %v2260
  %v2262 = vrot.slane %v1310, %v2261
  %v2263 = vlaneseq
  %v2264 = vshrl.u32 %v2263, 7
  %v2265 = vsub.s32 3, %v2264
  %v2266 = vrot.slane %v1310, %v2265
  %v2267 = vlaneseq
  %v2268 = vshrl.u32 %v2267, 7
  %v2269 = vsub.s32 4, %v2268
  %v2270 = vrot.slane %v1310, %v2269
  %v2271 = vlaneseq
  %v2272 = vshrl.u32 %v2271, 7
  %v2273 = vsub.s32 5, %v2272
  %v2274 = vrot.slane %v1310, %v2273
  %v2275 = vlaneseq
  %v2276 = vshrl.u32 %v2275, 7
  %v2277 = vsub.s32 6, %v2276
  %v2278 = vrot.slane %v1310, %v2277
  %v2279 = vlaneseq
  %v2280 = vshrl.u32 %v2279, 7
  %v2281 = vsub.s32 7, %v2280
  %v2282 = vrot.slane %v1310, %v2281
  %v2283 = vlaneseq
  %v2284 = vshrl.u32 %v2283, 7
  %v2285 = vsub.s32 0, %v2284
  %v2286 = vrot.slane %v1312, %v2285
  %v2287 = vlaneseq
  %v2288 = vshrl.u32 %v2287, 7
  %v2289 = vsub.s32 1, %v2288
  %v2290 = vrot.slane %v1312, %v2289
  %v2291 = vlaneseq
  %v2292 = vshrl.u32 %v2291, 7
  %v2293 = vsub.s32 2, %v2292
  %v2294 = vrot.slane %v1312, %v2293
  %v2295 = vlaneseq
  %v2296 = vshrl.u32 %v2295, 7
  %v2297 = vsub.s32 3, %v2296
  %v2298 = vrot.slane %v1312, %v2297
  %v2299 = vlaneseq
  %v2300 = vshrl.u32 %v2299, 7
  %v2301 = vsub.s32 4, %v2300
  %v2302 = vrot.slane %v1312, %v2301
  %v2303 = vlaneseq
  %v2304 = vshrl.u32 %v2303, 7
  %v2305 = vsub.s32 5, %v2304
  %v2306 = vrot.slane %v1312, %v2305
  %v2307 = vlaneseq
  %v2308 = vshrl.u32 %v2307, 7
  %v2309 = vsub.s32 6, %v2308
  %v2310 = vrot.slane %v1312, %v2309
  %v2311 = vlaneseq
  %v2312 = vshrl.u32 %v2311, 7
  %v2313 = vsub.s32 7, %v2312
  %v2314 = vrot.slane %v1312, %v2313
  %v2315 = vlaneseq
  %v2316 = vshrl.u32 %v2315, 7
  %v2317 = vsub.s32 0, %v2316
  %v2318 = vrot.slane %v1314, %v2317
  %v2319 = vlaneseq
  %v2320 = vshrl.u32 %v2319, 7
  %v2321 = vsub.s32 1, %v2320
  %v2322 = vrot.slane %v1314, %v2321
  %v2323 = vlaneseq
  %v2324 = vshrl.u32 %v2323, 7
  %v2325 = vsub.s32 2, %v2324
  %v2326 = vrot.slane %v1314, %v2325
  %v2327 = vlaneseq
  %v2328 = vshrl.u32 %v2327, 7
  %v2329 = vsub.s32 3, %v2328
  %v2330 = vrot.slane %v1314, %v2329
  %v2331 = vlaneseq
  %v2332 = vshrl.u32 %v2331, 7
  %v2333 = vsub.s32 4, %v2332
  %v2334 = vrot.slane %v1314, %v2333
  %v2335 = vlaneseq
  %v2336 = vshrl.u32 %v2335, 7
  %v2337 = vsub.s32 5, %v2336
  %v2338 = vrot.slane %v1314, %v2337
  %v2339 = vlaneseq
  %v2340 = vshrl.u32 %v2339, 7
  %v2341 = vsub.s32 6, %v2340
  %v2342 = vrot.slane %v1314, %v2341
  %v2343 = vlaneseq
  %v2344 = vshrl.u32 %v2343, 7
  %v2345 = vsub.s32 7, %v2344
  %v2346 = vrot.slane %v1314, %v2345
  %v2347 = vlaneseq
  %v2348 = vshrl.u32 %v2347, 7
  %v2349 = vsub.s32 0, %v2348
  %v2350 = vrot.slane %v1316, %v2349
  %v2351 = vlaneseq
  %v2352 = vshrl.u32 %v2351, 7
  %v2353 = vsub.s32 1, %v2352
  %v2354 = vrot.slane %v1316, %v2353
  %v2355 = vlaneseq
  %v2356 = vshrl.u32 %v2355, 7
  %v2357 = vsub.s32 2, %v2356
  %v2358 = vrot.slane %v1316, %v2357
  %v2359 = vlaneseq
  %v2360 = vshrl.u32 %v2359, 7
  %v2361 = vsub.s32 3, %v2360
  %v2362 = vrot.slane %v1316, %v2361
  %v2363 = vlaneseq
  %v2364 = vshrl.u32 %v2363, 7
  %v2365 = vsub.s32 4, %v2364
  %v2366 = vrot.slane %v1316, %v2365
  %v2367 = vlaneseq
  %v2368 = vshrl.u32 %v2367, 7
  %v2369 = vsub.s32 5, %v2368
  %v2370 = vrot.slane %v1316, %v2369
  %v2371 = vlaneseq
  %v2372 = vshrl.u32 %v2371, 7
  %v2373 = vsub.s32 6, %v2372
  %v2374 = vrot.slane %v1316, %v2373
  %v2375 = vlaneseq
  %v2376 = vshrl.u32 %v2375, 7
  %v2377 = vsub.s32 7, %v2376
  %v2378 = vrot.slane %v1316, %v2377
  %v2379 = vlaneseq
  %v2380 = vshrl.u32 %v2379, 7
  %v2381 = vsub.s32 0, %v2380
  %v2382 = vrot.slane %v1318, %v2381
  %v2383 = vlaneseq
  %v2384 = vshrl.u32 %v2383, 7
  %v2385 = vsub.s32 1, %v2384
  %v2386 = vrot.slane %v1318, %v2385
  %v2387 = vlaneseq
  %v2388 = vshrl.u32 %v2387, 7
  %v2389 = vsub.s32 2, %v2388
  %v2390 = vrot.slane %v1318, %v2389
  %v2391 = vlaneseq
  %v2392 = vshrl.u32 %v2391, 7
  %v2393 = vsub.s32 3, %v2392
  %v2394 = vrot.slane %v1318, %v2393
  %v2395 = vlaneseq
  %v2396 = vshrl.u32 %v2395, 7
  %v2397 = vsub.s32 4, %v2396
  %v2398 = vrot.slane %v1318, %v2397
  %v2399 = vlaneseq
  %v2400 = vshrl.u32 %v2399, 7
  %v2401 = vsub.s32 5, %v2400
  %v2402 = vrot.slane %v1318, %v2401
  %v2403 = vlaneseq
  %v2404 = vshrl.u32 %v2403, 7
  %v2405 = vsub.s32 6, %v2404
  %v2406 = vrot.slane %v1318, %v2405
  %v2407 = vlaneseq
  %v2408 = vshrl.u32 %v2407, 7
  %v2409 = vsub.s32 7, %v2408
  %v2410 = vrot.slane %v1318, %v2409
  %v2411 = vlaneseq
  %v2412 = vshrl.u32 %v2411, 7
  %v2413 = vsub.s32 0, %v2412
  %v2414 = vrot.slane %v1320, %v2413
  %v2415 = vlaneseq
  %v2416 = vshrl.u32 %v2415, 7
  %v2417 = vsub.s32 1, %v2416
  %v2418 = vrot.slane %v1320, %v2417
  %v2419 = vlaneseq
  %v2420 = vshrl.u32 %v2419, 7
  %v2421 = vsub.s32 2, %v2420
  %v2422 = vrot.slane %v1320, %v2421
  %v2423 = vlaneseq
  %v2424 = vshrl.u32 %v2423, 7
  %v2425 = vsub.s32 3, %v2424
  %v2426 = vrot.slane %v1320, %v2425
  %v2427 = vlaneseq
  %v2428 = vshrl.u32 %v2427, 7
  %v2429 = vsub.s32 4, %v2428
  %v2430 = vrot.slane %v1320, %v2429
  %v2431 = vlaneseq
  %v2432 = vshrl.u32 %v2431, 7
  %v2433 = vsub.s32 5, %v2432
  %v2434 = vrot.slane %v1320, %v2433
  %v2435 = vlaneseq
  %v2436 = vshrl.u32 %v2435, 7
  %v2437 = vsub.s32 6, %v2436
  %v2438 = vrot.slane %v1320, %v2437
  %v2439 = vlaneseq
  %v2440 = vshrl.u32 %v2439, 7
  %v2441 = vsub.s32 7, %v2440
  %v2442 = vrot.slane %v1320, %v2441
  %v2443 = vlaneseq
  %v2444 = vshrl.u32 %v2443, 7
  %v2445 = vsub.s32 0, %v2444
  %v2446 = vrot.slane %v1322, %v2445
  %v2447 = vlaneseq
  %v2448 = vshrl.u32 %v2447, 7
  %v2449 = vsub.s32 1, %v2448
  %v2450 = vrot.slane %v1322, %v2449
  %v2451 = vlaneseq
  %v2452 = vshrl.u32 %v2451, 7
  %v2453 = vsub.s32 2, %v2452
  %v2454 = vrot.slane %v1322, %v2453
  %v2455 = vlaneseq
  %v2456 = vshrl.u32 %v2455, 7
  %v2457 = vsub.s32 3, %v2456
  %v2458 = vrot.slane %v1322, %v2457
  %v2459 = vlaneseq
  %v2460 = vshrl.u32 %v2459, 7
  %v2461 = vsub.s32 4, %v2460
  %v2462 = vrot.slane %v1322, %v2461
  %v2463 = vlaneseq
  %v2464 = vshrl.u32 %v2463, 7
  %v2465 = vsub.s32 5, %v2464
  %v2466 = vrot.slane %v1322, %v2465
  %v2467 = vlaneseq
  %v2468 = vshrl.u32 %v2467, 7
  %v2469 = vsub.s32 6, %v2468
  %v2470 = vrot.slane %v1322, %v2469
  %v2471 = vlaneseq
  %v2472 = vshrl.u32 %v2471, 7
  %v2473 = vsub.s32 7, %v2472
  %v2474 = vrot.slane %v1322, %v2473
  %v2475 = vlaneseq
  %v2476 = vshrl.u32 %v2475, 7
  %v2477 = vsub.s32 0, %v2476
  %v2478 = vrot.slane %v1324, %v2477
  %v2479 = vlaneseq
  %v2480 = vshrl.u32 %v2479, 7
  %v2481 = vsub.s32 1, %v2480
  %v2482 = vrot.slane %v1324, %v2481
  %v2483 = vlaneseq
  %v2484 = vshrl.u32 %v2483, 7
  %v2485 = vsub.s32 2, %v2484
  %v2486 = vrot.slane %v1324, %v2485
  %v2487 = vlaneseq
  %v2488 = vshrl.u32 %v2487, 7
  %v2489 = vsub.s32 3, %v2488
  %v2490 = vrot.slane %v1324, %v2489
  %v2491 = vlaneseq
  %v2492 = vshrl.u32 %v2491, 7
  %v2493 = vsub.s32 4, %v2492
  %v2494 = vrot.slane %v1324, %v2493
  %v2495 = vlaneseq
  %v2496 = vshrl.u32 %v2495, 7
  %v2497 = vsub.s32 5, %v2496
  %v2498 = vrot.slane %v1324, %v2497
  %v2499 = vlaneseq
  %v2500 = vshrl.u32 %v2499, 7
  %v2501 = vsub.s32 6, %v2500
  %v2502 = vrot.slane %v1324, %v2501
  %v2503 = vlaneseq
  %v2504 = vshrl.u32 %v2503, 7
  %v2505 = vsub.s32 7, %v2504
  %v2506 = vrot.slane %v1324, %v2505
  %v2507 = vlaneseq
  %v2508 = vshrl.u32 %v2507, 7
  %v2509 = vsub.s32 0, %v2508
  %v2510 = vrot.slane %v1326, %v2509
  %v2511 = vlaneseq
  %v2512 = vshrl.u32 %v2511, 7
  %v2513 = vsub.s32 1, %v2512
  %v2514 = vrot.slane %v1326, %v2513
  %v2515 = vlaneseq
  %v2516 = vshrl.u32 %v2515, 7
  %v2517 = vsub.s32 2, %v2516
  %v2518 = vrot.slane %v1326, %v2517
  %v2519 = vlaneseq
  %v2520 = vshrl.u32 %v2519, 7
  %v2521 = vsub.s32 3, %v2520
  %v2522 = vrot.slane %v1326, %v2521
  %v2523 = vlaneseq
  %v2524 = vshrl.u32 %v2523, 7
  %v2525 = vsub.s32 4, %v2524
  %v2526 = vrot.slane %v1326, %v2525
  %v2527 = vlaneseq
  %v2528 = vshrl.u32 %v2527, 7
  %v2529 = vsub.s32 5, %v2528
  %v2530 = vrot.slane %v1326, %v2529
  %v2531 = vlaneseq
  %v2532 = vshrl.u32 %v2531, 7
  %v2533 = vsub.s32 6, %v2532
  %v2534 = vrot.slane %v1326, %v2533
  %v2535 = vlaneseq
  %v2536 = vshrl.u32 %v2535, 7
  %v2537 = vsub.s32 7, %v2536
  %v2538 = vrot.slane %v1326, %v2537
  %v2539 = vlaneseq
  %v2540 = vshrl.u32 %v2539, 7
  %v2541 = vsub.s32 0, %v2540
  %v2542 = vrot.slane %v1328, %v2541
  %v2543 = vlaneseq
  %v2544 = vshrl.u32 %v2543, 7
  %v2545 = vsub.s32 1, %v2544
  %v2546 = vrot.slane %v1328, %v2545
  %v2547 = vlaneseq
  %v2548 = vshrl.u32 %v2547, 7
  %v2549 = vsub.s32 2, %v2548
  %v2550 = vrot.slane %v1328, %v2549
  %v2551 = vlaneseq
  %v2552 = vshrl.u32 %v2551, 7
  %v2553 = vsub.s32 3, %v2552
  %v2554 = vrot.slane %v1328, %v2553
  %v2555 = vlaneseq
  %v2556 = vshrl.u32 %v2555, 7
  %v2557 = vsub.s32 4, %v2556
  %v2558 = vrot.slane %v1328, %v2557
  %v2559 = vlaneseq
  %v2560 = vshrl.u32 %v2559, 7
  %v2561 = vsub.s32 5, %v2560
  %v2562 = vrot.slane %v1328, %v2561
  %v2563 = vlaneseq
  %v2564 = vshrl.u32 %v2563, 7
  %v2565 = vsub.s32 6, %v2564
  %v2566 = vrot.slane %v1328, %v2565
  %v2567 = vlaneseq
  %v2568 = vshrl.u32 %v2567, 7
  %v2569 = vsub.s32 7, %v2568
  %v2570 = vrot.slane %v1328, %v2569
  %v2571 = vlaneseq
  %v2572 = vshrl.u32 %v2571, 7
  %v2573 = vsub.s32 0, %v2572
  %v2574 = vrot.slane %v1330, %v2573
  %v2575 = vlaneseq
  %v2576 = vshrl.u32 %v2575, 7
  %v2577 = vsub.s32 1, %v2576
  %v2578 = vrot.slane %v1330, %v2577
  %v2579 = vlaneseq
  %v2580 = vshrl.u32 %v2579, 7
  %v2581 = vsub.s32 2, %v2580
  %v2582 = vrot.slane %v1330, %v2581
  %v2583 = vlaneseq
  %v2584 = vshrl.u32 %v2583, 7
  %v2585 = vsub.s32 3, %v2584
  %v2586 = vrot.slane %v1330, %v2585
  %v2587 = vlaneseq
  %v2588 = vshrl.u32 %v2587, 7
  %v2589 = vsub.s32 4, %v2588
  %v2590 = vrot.slane %v1330, %v2589
  %v2591 = vlaneseq
  %v2592 = vshrl.u32 %v2591, 7
  %v2593 = vsub.s32 5, %v2592
  %v2594 = vrot.slane %v1330, %v2593
  %v2595 = vlaneseq
  %v2596 = vshrl.u32 %v2595, 7
  %v2597 = vsub.s32 6, %v2596
  %v2598 = vrot.slane %v1330, %v2597
  %v2599 = vlaneseq
  %v2600 = vshrl.u32 %v2599, 7
  %v2601 = vsub.s32 7, %v2600
  %v2602 = vrot.slane %v1330, %v2601
  %v2603 = vlaneseq
  %v2604 = vshrl.u32 %v2603, 7
  %v2605 = vsub.s32 0, %v2604
  %v2606 = vrot.slane %v1332, %v2605
  %v2607 = vlaneseq
  %v2608 = vshrl.u32 %v2607, 7
  %v2609 = vsub.s32 1, %v2608
  %v2610 = vrot.slane %v1332, %v2609
  %v2611 = vlaneseq
  %v2612 = vshrl.u32 %v2611, 7
  %v2613 = vsub.s32 2, %v2612
  %v2614 = vrot.slane %v1332, %v2613
  %v2615 = vlaneseq
  %v2616 = vshrl.u32 %v2615, 7
  %v2617 = vsub.s32 3, %v2616
  %v2618 = vrot.slane %v1332, %v2617
  %v2619 = vlaneseq
  %v2620 = vshrl.u32 %v2619, 7
  %v2621 = vsub.s32 4, %v2620
  %v2622 = vrot.slane %v1332, %v2621
  %v2623 = vlaneseq
  %v2624 = vshrl.u32 %v2623, 7
  %v2625 = vsub.s32 5, %v2624
  %v2626 = vrot.slane %v1332, %v2625
  %v2627 = vlaneseq
  %v2628 = vshrl.u32 %v2627, 7
  %v2629 = vsub.s32 6, %v2628
  %v2630 = vrot.slane %v1332, %v2629
  %v2631 = vlaneseq
  %v2632 = vshrl.u32 %v2631, 7
  %v2633 = vsub.s32 7, %v2632
  %v2634 = vrot.slane %v1332, %v2633
  %v2635 = vlaneseq
  %v2636 = vshrl.u32 %v2635, 7
  %v2637 = vsub.s32 0, %v2636
  %v2638 = vrot.slane %v1334, %v2637
  %v2639 = vlaneseq
  %v2640 = vshrl.u32 %v2639, 7
  %v2641 = vsub.s32 1, %v2640
  %v2642 = vrot.slane %v1334, %v2641
  %v2643 = vlaneseq
  %v2644 = vshrl.u32 %v2643, 7
  %v2645 = vsub.s32 2, %v2644
  %v2646 = vrot.slane %v1334, %v2645
  %v2647 = vlaneseq
  %v2648 = vshrl.u32 %v2647, 7
  %v2649 = vsub.s32 3, %v2648
  %v2650 = vrot.slane %v1334, %v2649
  %v2651 = vlaneseq
  %v2652 = vshrl.u32 %v2651, 7
  %v2653 = vsub.s32 4, %v2652
  %v2654 = vrot.slane %v1334, %v2653
  %v2655 = vlaneseq
  %v2656 = vshrl.u32 %v2655, 7
  %v2657 = vsub.s32 5, %v2656
  %v2658 = vrot.slane %v1334, %v2657
  %v2659 = vlaneseq
  %v2660 = vshrl.u32 %v2659, 7
  %v2661 = vsub.s32 6, %v2660
  %v2662 = vrot.slane %v1334, %v2661
  %v2663 = vlaneseq
  %v2664 = vshrl.u32 %v2663, 7
  %v2665 = vsub.s32 7, %v2664
  %v2666 = vrot.slane %v1334, %v2665
  %v2667 = vlaneseq
  %v2668 = vshrl.u32 %v2667, 7
  %v2669 = vsub.s32 0, %v2668
  %v2670 = vrot.slane %v1336, %v2669
  %v2671 = vlaneseq
  %v2672 = vshrl.u32 %v2671, 7
  %v2673 = vsub.s32 1, %v2672
  %v2674 = vrot.slane %v1336, %v2673
  %v2675 = vlaneseq
  %v2676 = vshrl.u32 %v2675, 7
  %v2677 = vsub.s32 2, %v2676
  %v2678 = vrot.slane %v1336, %v2677
  %v2679 = vlaneseq
  %v2680 = vshrl.u32 %v2679, 7
  %v2681 = vsub.s32 3, %v2680
  %v2682 = vrot.slane %v1336, %v2681
  %v2683 = vlaneseq
  %v2684 = vshrl.u32 %v2683, 7
  %v2685 = vsub.s32 4, %v2684
  %v2686 = vrot.slane %v1336, %v2685
  %v2687 = vlaneseq
  %v2688 = vshrl.u32 %v2687, 7
  %v2689 = vsub.s32 5, %v2688
  %v2690 = vrot.slane %v1336, %v2689
  %v2691 = vlaneseq
  %v2692 = vshrl.u32 %v2691, 7
  %v2693 = vsub.s32 6, %v2692
  %v2694 = vrot.slane %v1336, %v2693
  %v2695 = vlaneseq
  %v2696 = vshrl.u32 %v2695, 7
  %v2697 = vsub.s32 7, %v2696
  %v2698 = vrot.slane %v1336, %v2697
  %v2699 = vlaneseq
  %v2700 = vshrl.u32 %v2699, 7
  %v2701 = vsub.s32 0, %v2700
  %v2702 = vrot.slane %v1338, %v2701
  %v2703 = vlaneseq
  %v2704 = vshrl.u32 %v2703, 7
  %v2705 = vsub.s32 1, %v2704
  %v2706 = vrot.slane %v1338, %v2705
  %v2707 = vlaneseq
  %v2708 = vshrl.u32 %v2707, 7
  %v2709 = vsub.s32 2, %v2708
  %v2710 = vrot.slane %v1338, %v2709
  %v2711 = vlaneseq
  %v2712 = vshrl.u32 %v2711, 7
  %v2713 = vsub.s32 3, %v2712
  %v2714 = vrot.slane %v1338, %v2713
  %v2715 = vlaneseq
  %v2716 = vshrl.u32 %v2715, 7
  %v2717 = vsub.s32 4, %v2716
  %v2718 = vrot.slane %v1338, %v2717
  %v2719 = vlaneseq
  %v2720 = vshrl.u32 %v2719, 7
  %v2721 = vsub.s32 5, %v2720
  %v2722 = vrot.slane %v1338, %v2721
  %v2723 = vlaneseq
  %v2724 = vshrl.u32 %v2723, 7
  %v2725 = vsub.s32 6, %v2724
  %v2726 = vrot.slane %v1338, %v2725
  %v2727 = vlaneseq
  %v2728 = vshrl.u32 %v2727, 7
  %v2729 = vsub.s32 7, %v2728
  %v2730 = vrot.slane %v1338, %v2729
  %v2731 = vlaneseq
  %v2732 = vshrl.u32 %v2731, 7
  %v2733 = vsub.s32 0, %v2732
  %v2734 = vrot.slane %v1340, %v2733
  %v2735 = vlaneseq
  %v2736 = vshrl.u32 %v2735, 7
  %v2737 = vsub.s32 1, %v2736
  %v2738 = vrot.slane %v1340, %v2737
  %v2739 = vlaneseq
  %v2740 = vshrl.u32 %v2739, 7
  %v2741 = vsub.s32 2, %v2740
  %v2742 = vrot.slane %v1340, %v2741
  %v2743 = vlaneseq
  %v2744 = vshrl.u32 %v2743, 7
  %v2745 = vsub.s32 3, %v2744
  %v2746 = vrot.slane %v1340, %v2745
  %v2747 = vlaneseq
  %v2748 = vshrl.u32 %v2747, 7
  %v2749 = vsub.s32 4, %v2748
  %v2750 = vrot.slane %v1340, %v2749
  %v2751 = vlaneseq
  %v2752 = vshrl.u32 %v2751, 7
  %v2753 = vsub.s32 5, %v2752
  %v2754 = vrot.slane %v1340, %v2753
  %v2755 = vlaneseq
  %v2756 = vshrl.u32 %v2755, 7
  %v2757 = vsub.s32 6, %v2756
  %v2758 = vrot.slane %v1340, %v2757
  %v2759 = vlaneseq
  %v2760 = vshrl.u32 %v2759, 7
  %v2761 = vsub.s32 7, %v2760
  %v2762 = vrot.slane %v1340, %v2761
  %v2763 = vlaneseq
  %v2764 = vshrl.u32 %v2763, 7
  %v2765 = vsub.s32 0, %v2764
  %v2766 = vrot.slane %v1342, %v2765
  %v2767 = vlaneseq
  %v2768 = vshrl.u32 %v2767, 7
  %v2769 = vsub.s32 1, %v2768
  %v2770 = vrot.slane %v1342, %v2769
  %v2771 = vlaneseq
  %v2772 = vshrl.u32 %v2771, 7
  %v2773 = vsub.s32 2, %v2772
  %v2774 = vrot.slane %v1342, %v2773
  %v2775 = vlaneseq
  %v2776 = vshrl.u32 %v2775, 7
  %v2777 = vsub.s32 3, %v2776
  %v2778 = vrot.slane %v1342, %v2777
  %v2779 = vlaneseq
  %v2780 = vshrl.u32 %v2779, 7
  %v2781 = vsub.s32 4, %v2780
  %v2782 = vrot.slane %v1342, %v2781
  %v2783 = vlaneseq
  %v2784 = vshrl.u32 %v2783, 7
  %v2785 = vsub.s32 5, %v2784
  %v2786 = vrot.slane %v1342, %v2785
  %v2787 = vlaneseq
  %v2788 = vshrl.u32 %v2787, 7
  %v2789 = vsub.s32 6, %v2788
  %v2790 = vrot.slane %v1342, %v2789
  %v2791 = vlaneseq
  %v2792 = vshrl.u32 %v2791, 7
  %v2793 = vsub.s32 7, %v2792
  %v2794 = vrot.slane %v1342, %v2793
  %v2795 = vlaneseq
  %v2796 = vshrl.u32 %v2795, 7
  %v2797 = vsub.s32 0, %v2796
  %v2798 = vrot.slane %v1344, %v2797
  %v2799 = vlaneseq
  %v2800 = vshrl.u32 %v2799, 7
  %v2801 = vsub.s32 1, %v2800
  %v2802 = vrot.slane %v1344, %v2801
  %v2803 = vlaneseq
  %v2804 = vshrl.u32 %v2803, 7
  %v2805 = vsub.s32 2, %v2804
  %v2806 = vrot.slane %v1344, %v2805
  %v2807 = vlaneseq
  %v2808 = vshrl.u32 %v2807, 7
  %v2809 = vsub.s32 3, %v2808
  %v2810 = vrot.slane %v1344, %v2809
  %v2811 = vlaneseq
  %v2812 = vshrl.u32 %v2811, 7
  %v2813 = vsub.s32 4, %v2812
  %v2814 = vrot.slane %v1344, %v2813
  %v2815 = vlaneseq
  %v2816 = vshrl.u32 %v2815, 7
  %v2817 = vsub.s32 5, %v2816
  %v2818 = vrot.slane %v1344, %v2817
  %v2819 = vlaneseq
  %v2820 = vshrl.u32 %v2819, 7
  %v2821 = vsub.s32 6, %v2820
  %v2822 = vrot.slane %v1344, %v2821
  %v2823 = vlaneseq
  %v2824 = vshrl.u32 %v2823, 7
  %v2825 = vsub.s32 7, %v2824
  %v2826 = vrot.slane %v1344, %v2825
  %v2827 = vlaneseq
  %v2828 = vshrl.u32 %v2827, 7
  %v2829 = vsub.s32 0, %v2828
  %v2830 = vrot.slane %v1346, %v2829
  %v2831 = vlaneseq
  %v2832 = vshrl.u32 %v2831, 7
  %v2833 = vsub.s32 1, %v2832
  %v2834 = vrot.slane %v1346, %v2833
  %v2835 = vlaneseq
  %v2836 = vshrl.u32 %v2835, 7
  %v2837 = vsub.s32 2, %v2836
  %v2838 = vrot.slane %v1346, %v2837
  %v2839 = vlaneseq
  %v2840 = vshrl.u32 %v2839, 7
  %v2841 = vsub.s32 3, %v2840
  %v2842 = vrot.slane %v1346, %v2841
  %v2843 = vlaneseq
  %v2844 = vshrl.u32 %v2843, 7
  %v2845 = vsub.s32 4, %v2844
  %v2846 = vrot.slane %v1346, %v2845
  %v2847 = vlaneseq
  %v2848 = vshrl.u32 %v2847, 7
  %v2849 = vsub.s32 5, %v2848
  %v2850 = vrot.slane %v1346, %v2849
  %v2851 = vlaneseq
  %v2852 = vshrl.u32 %v2851, 7
  %v2853 = vsub.s32 6, %v2852
  %v2854 = vrot.slane %v1346, %v2853
  %v2855 = vlaneseq
  %v2856 = vshrl.u32 %v2855, 7
  %v2857 = vsub.s32 7, %v2856
  %v2858 = vrot.slane %v1346, %v2857
  %v2859 = vlaneseq
  %v2860 = vshrl.u32 %v2859, 7
  %v2861 = vsub.s32 0, %v2860
  %v2862 = vrot.slane %v1348, %v2861
  %v2863 = vlaneseq
  %v2864 = vshrl.u32 %v2863, 7
  %v2865 = vsub.s32 1, %v2864
  %v2866 = vrot.slane %v1348, %v2865
  %v2867 = vlaneseq
  %v2868 = vshrl.u32 %v2867, 7
  %v2869 = vsub.s32 2, %v2868
  %v2870 = vrot.slane %v1348, %v2869
  %v2871 = vlaneseq
  %v2872 = vshrl.u32 %v2871, 7
  %v2873 = vsub.s32 3, %v2872
  %v2874 = vrot.slane %v1348, %v2873
  %v2875 = vlaneseq
  %v2876 = vshrl.u32 %v2875, 7
  %v2877 = vsub.s32 4, %v2876
  %v2878 = vrot.slane %v1348, %v2877
  %v2879 = vlaneseq
  %v2880 = vshrl.u32 %v2879, 7
  %v2881 = vsub.s32 5, %v2880
  %v2882 = vrot.slane %v1348, %v2881
  %v2883 = vlaneseq
  %v2884 = vshrl.u32 %v2883, 7
  %v2885 = vsub.s32 6, %v2884
  %v2886 = vrot.slane %v1348, %v2885
  %v2887 = vlaneseq
  %v2888 = vshrl.u32 %v2887, 7
  %v2889 = vsub.s32 7, %v2888
  %v2890 = vrot.slane %v1348, %v2889
  %v2891 = vlaneseq
  %v2892 = vshrl.u32 %v2891, 7
  %v2893 = vsub.s32 0, %v2892
  %v2894 = vrot.slane %v1350, %v2893
  %v2895 = vlaneseq
  %v2896 = vshrl.u32 %v2895, 7
  %v2897 = vsub.s32 1, %v2896
  %v2898 = vrot.slane %v1350, %v2897
  %v2899 = vlaneseq
  %v2900 = vshrl.u32 %v2899, 7
  %v2901 = vsub.s32 2, %v2900
  %v2902 = vrot.slane %v1350, %v2901
  %v2903 = vlaneseq
  %v2904 = vshrl.u32 %v2903, 7
  %v2905 = vsub.s32 3, %v2904
  %v2906 = vrot.slane %v1350, %v2905
  %v2907 = vlaneseq
  %v2908 = vshrl.u32 %v2907, 7
  %v2909 = vsub.s32 4, %v2908
  %v2910 = vrot.slane %v1350, %v2909
  %v2911 = vlaneseq
  %v2912 = vshrl.u32 %v2911, 7
  %v2913 = vsub.s32 5, %v2912
  %v2914 = vrot.slane %v1350, %v2913
  %v2915 = vlaneseq
  %v2916 = vshrl.u32 %v2915, 7
  %v2917 = vsub.s32 6, %v2916
  %v2918 = vrot.slane %v1350, %v2917
  %v2919 = vlaneseq
  %v2920 = vshrl.u32 %v2919, 7
  %v2921 = vsub.s32 7, %v2920
  %v2922 = vrot.slane %v1350, %v2921
  %v2923 = vlaneseq
  %v2924 = vshrl.u32 %v2923, 7
  %v2925 = vsub.s32 0, %v2924
  %v2926 = vrot.slane %v1352, %v2925
  %v2927 = vlaneseq
  %v2928 = vshrl.u32 %v2927, 7
  %v2929 = vsub.s32 1, %v2928
  %v2930 = vrot.slane %v1352, %v2929
  %v2931 = vlaneseq
  %v2932 = vshrl.u32 %v2931, 7
  %v2933 = vsub.s32 2, %v2932
  %v2934 = vrot.slane %v1352, %v2933
  %v2935 = vlaneseq
  %v2936 = vshrl.u32 %v2935, 7
  %v2937 = vsub.s32 3, %v2936
  %v2938 = vrot.slane %v1352, %v2937
  %v2939 = vlaneseq
  %v2940 = vshrl.u32 %v2939, 7
  %v2941 = vsub.s32 4, %v2940
  %v2942 = vrot.slane %v1352, %v2941
  %v2943 = vlaneseq
  %v2944 = vshrl.u32 %v2943, 7
  %v2945 = vsub.s32 5, %v2944
  %v2946 = vrot.slane %v1352, %v2945
  %v2947 = vlaneseq
  %v2948 = vshrl.u32 %v2947, 7
  %v2949 = vsub.s32 6, %v2948
  %v2950 = vrot.slane %v1352, %v2949
  %v2951 = vlaneseq
  %v2952 = vshrl.u32 %v2951, 7
  %v2953 = vsub.s32 7, %v2952
  %v2954 = vrot.slane %v1352, %v2953
  %v2955 = vlaneseq
  %v2956 = vshrl.u32 %v2955, 7
  %v2957 = vsub.s32 0, %v2956
  %v2958 = vrot.slane %v1354, %v2957
  %v2959 = vlaneseq
  %v2960 = vshrl.u32 %v2959, 7
  %v2961 = vsub.s32 1, %v2960
  %v2962 = vrot.slane %v1354, %v2961
  %v2963 = vlaneseq
  %v2964 = vshrl.u32 %v2963, 7
  %v2965 = vsub.s32 2, %v2964
  %v2966 = vrot.slane %v1354, %v2965
  %v2967 = vlaneseq
  %v2968 = vshrl.u32 %v2967, 7
  %v2969 = vsub.s32 3, %v2968
  %v2970 = vrot.slane %v1354, %v2969
  %v2971 = vlaneseq
  %v2972 = vshrl.u32 %v2971, 7
  %v2973 = vsub.s32 4, %v2972
  %v2974 = vrot.slane %v1354, %v2973
  %v2975 = vlaneseq
  %v2976 = vshrl.u32 %v2975, 7
  %v2977 = vsub.s32 5, %v2976
  %v2978 = vrot.slane %v1354, %v2977
  %v2979 = vlaneseq
  %v2980 = vshrl.u32 %v2979, 7
  %v2981 = vsub.s32 6, %v2980
  %v2982 = vrot.slane %v1354, %v2981
  %v2983 = vlaneseq
  %v2984 = vshrl.u32 %v2983, 7
  %v2985 = vsub.s32 7, %v2984
  %v2986 = vrot.slane %v1354, %v2985
  %v2987 = vlaneseq
  %v2988 = vshrl.u32 %v2987, 7
  %v2989 = vsub.s32 0, %v2988
  %v2990 = vrot.slane %v1356, %v2989
  %v2991 = vlaneseq
  %v2992 = vshrl.u32 %v2991, 7
  %v2993 = vsub.s32 1, %v2992
  %v2994 = vrot.slane %v1356, %v2993
  %v2995 = vlaneseq
  %v2996 = vshrl.u32 %v2995, 7
  %v2997 = vsub.s32 2, %v2996
  %v2998 = vrot.slane %v1356, %v2997
  %v2999 = vlaneseq
  %v3000 = vshrl.u32 %v2999, 7
  %v3001 = vsub.s32 3, %v3000
  %v3002 = vrot.slane %v1356, %v3001
  %v3003 = vlaneseq
  %v3004 = vshrl.u32 %v3003, 7
  %v3005 = vsub.s32 4, %v3004
  %v3006 = vrot.slane %v1356, %v3005
  %v3007 = vlaneseq
  %v3008 = vshrl.u32 %v3007, 7
  %v3009 = vsub.s32 5, %v3008
  %v3010 = vrot.slane %v1356, %v3009
  %v3011 = vlaneseq
  %v3012 = vshrl.u32 %v3011, 7
  %v3013 = vsub.s32 6, %v3012
  %v3014 = vrot.slane %v1356, %v3013
  %v3015 = vlaneseq
  %v3016 = vshrl.u32 %v3015, 7
  %v3017 = vsub.s32 7, %v3016
  %v3018 = vrot.slane %v1356, %v3017
  %v3019 = vlaneseq
  %v3020 = vshrl.u32 %v3019, 7
  %v3021 = vsub.s32 0, %v3020
  %v3022 = vrot.slane %v1358, %v3021
  %v3023 = vlaneseq
  %v3024 = vshrl.u32 %v3023, 7
  %v3025 = vsub.s32 1, %v3024
  %v3026 = vrot.slane %v1358, %v3025
  %v3027 = vlaneseq
  %v3028 = vshrl.u32 %v3027, 7
  %v3029 = vsub.s32 2, %v3028
  %v3030 = vrot.slane %v1358, %v3029
  %v3031 = vlaneseq
  %v3032 = vshrl.u32 %v3031, 7
  %v3033 = vsub.s32 3, %v3032
  %v3034 = vrot.slane %v1358, %v3033
  %v3035 = vlaneseq
  %v3036 = vshrl.u32 %v3035, 7
  %v3037 = vsub.s32 4, %v3036
  %v3038 = vrot.slane %v1358, %v3037
  %v3039 = vlaneseq
  %v3040 = vshrl.u32 %v3039, 7
  %v3041 = vsub.s32 5, %v3040
  %v3042 = vrot.slane %v1358, %v3041
  %v3043 = vlaneseq
  %v3044 = vshrl.u32 %v3043, 7
  %v3045 = vsub.s32 6, %v3044
  %v3046 = vrot.slane %v1358, %v3045
  %v3047 = vlaneseq
  %v3048 = vshrl.u32 %v3047, 7
  %v3049 = vsub.s32 7, %v3048
  %v3050 = vrot.slane %v1358, %v3049
  %v3051 = vlaneseq
  %v3052 = vshrl.u32 %v3051, 7
  %v3053 = vsub.s32 0, %v3052
  %v3054 = vrot.slane %v1360, %v3053
  %v3055 = vlaneseq
  %v3056 = vshrl.u32 %v3055, 7
  %v3057 = vsub.s32 1, %v3056
  %v3058 = vrot.slane %v1360, %v3057
  %v3059 = vlaneseq
  %v3060 = vshrl.u32 %v3059, 7
  %v3061 = vsub.s32 2, %v3060
  %v3062 = vrot.slane %v1360, %v3061
  %v3063 = vlaneseq
  %v3064 = vshrl.u32 %v3063, 7
  %v3065 = vsub.s32 3, %v3064
  %v3066 = vrot.slane %v1360, %v3065
  %v3067 = vlaneseq
  %v3068 = vshrl.u32 %v3067, 7
  %v3069 = vsub.s32 4, %v3068
  %v3070 = vrot.slane %v1360, %v3069
  %v3071 = vlaneseq
  %v3072 = vshrl.u32 %v3071, 7
  %v3073 = vsub.s32 5, %v3072
  %v3074 = vrot.slane %v1360, %v3073
  %v3075 = vlaneseq
  %v3076 = vshrl.u32 %v3075, 7
  %v3077 = vsub.s32 6, %v3076
  %v3078 = vrot.slane %v1360, %v3077
  %v3079 = vlaneseq
  %v3080 = vshrl.u32 %v3079, 7
  %v3081 = vsub.s32 7, %v3080
  %v3082 = vrot.slane %v1360, %v3081
  %v3083 = vlaneseq
  %v3084 = vshrl.u32 %v3083, 7
  %v3085 = vsub.s32 0, %v3084
  %v3086 = vrot.slane %v1362, %v3085
  %v3087 = vlaneseq
  %v3088 = vshrl.u32 %v3087, 7
  %v3089 = vsub.s32 1, %v3088
  %v3090 = vrot.slane %v1362, %v3089
  %v3091 = vlaneseq
  %v3092 = vshrl.u32 %v3091, 7
  %v3093 = vsub.s32 2, %v3092
  %v3094 = vrot.slane %v1362, %v3093
  %v3095 = vlaneseq
  %v3096 = vshrl.u32 %v3095, 7
  %v3097 = vsub.s32 3, %v3096
  %v3098 = vrot.slane %v1362, %v3097
  %v3099 = vlaneseq
  %v3100 = vshrl.u32 %v3099, 7
  %v3101 = vsub.s32 4, %v3100
  %v3102 = vrot.slane %v1362, %v3101
  %v3103 = vlaneseq
  %v3104 = vshrl.u32 %v3103, 7
  %v3105 = vsub.s32 5, %v3104
  %v3106 = vrot.slane %v1362, %v3105
  %v3107 = vlaneseq
  %v3108 = vshrl.u32 %v3107, 7
  %v3109 = vsub.s32 6, %v3108
  %v3110 = vrot.slane %v1362, %v3109
  %v3111 = vlaneseq
  %v3112 = vshrl.u32 %v3111, 7
  %v3113 = vsub.s32 7, %v3112
  %v3114 = vrot.slane %v1362, %v3113
  %v3115 = vlaneseq
  %v3116 = vshrl.u32 %v3115, 7
  %v3117 = vsub.s32 0, %v3116
  %v3118 = vrot.slane %v1364, %v3117
  %v3119 = vlaneseq
  %v3120 = vshrl.u32 %v3119, 7
  %v3121 = vsub.s32 1, %v3120
  %v3122 = vrot.slane %v1364, %v3121
  %v3123 = vlaneseq
  %v3124 = vshrl.u32 %v3123, 7
  %v3125 = vsub.s32 2, %v3124
  %v3126 = vrot.slane %v1364, %v3125
  %v3127 = vlaneseq
  %v3128 = vshrl.u32 %v3127, 7
  %v3129 = vsub.s32 3, %v3128
  %v3130 = vrot.slane %v1364, %v3129
  %v3131 = vlaneseq
  %v3132 = vshrl.u32 %v3131, 7
  %v3133 = vsub.s32 4, %v3132
  %v3134 = vrot.slane %v1364, %v3133
  %v3135 = vlaneseq
  %v3136 = vshrl.u32 %v3135, 7
  %v3137 = vsub.s32 5, %v3136
  %v3138 = vrot.slane %v1364, %v3137
  %v3139 = vlaneseq
  %v3140 = vshrl.u32 %v3139, 7
  %v3141 = vsub.s32 6, %v3140
  %v3142 = vrot.slane %v1364, %v3141
  %v3143 = vlaneseq
  %v3144 = vshrl.u32 %v3143, 7
  %v3145 = vsub.s32 7, %v3144
  %v3146 = vrot.slane %v1364, %v3145
  %v3147 = vlaneseq
  %v3148 = vshrl.u32 %v3147, 7
  %v3149 = vsub.s32 0, %v3148
  %v3150 = vrot.slane %v1366, %v3149
  %v3151 = vlaneseq
  %v3152 = vshrl.u32 %v3151, 7
  %v3153 = vsub.s32 1, %v3152
  %v3154 = vrot.slane %v1366, %v3153
  %v3155 = vlaneseq
  %v3156 = vshrl.u32 %v3155, 7
  %v3157 = vsub.s32 2, %v3156
  %v3158 = vrot.slane %v1366, %v3157
  %v3159 = vlaneseq
  %v3160 = vshrl.u32 %v3159, 7
  %v3161 = vsub.s32 3, %v3160
  %v3162 = vrot.slane %v1366, %v3161
  %v3163 = vlaneseq
  %v3164 = vshrl.u32 %v3163, 7
  %v3165 = vsub.s32 4, %v3164
  %v3166 = vrot.slane %v1366, %v3165
  %v3167 = vlaneseq
  %v3168 = vshrl.u32 %v3167, 7
  %v3169 = vsub.s32 5, %v3168
  %v3170 = vrot.slane %v1366, %v3169
  %v3171 = vlaneseq
  %v3172 = vshrl.u32 %v3171, 7
  %v3173 = vsub.s32 6, %v3172
  %v3174 = vrot.slane %v1366, %v3173
  %v3175 = vlaneseq
  %v3176 = vshrl.u32 %v3175, 7
  %v3177 = vsub.s32 7, %v3176
  %v3178 = vrot.slane %v1366, %v3177
  %v3179 = vlaneseq
  %v3180 = vshrl.u32 %v3179, 7
  %v3181 = vsub.s32 0, %v3180
  %v3182 = vrot.slane %v1368, %v3181
  %v3183 = vlaneseq
  %v3184 = vshrl.u32 %v3183, 7
  %v3185 = vsub.s32 1, %v3184
  %v3186 = vrot.slane %v1368, %v3185
  %v3187 = vlaneseq
  %v3188 = vshrl.u32 %v3187, 7
  %v3189 = vsub.s32 2, %v3188
  %v3190 = vrot.slane %v1368, %v3189
  %v3191 = vlaneseq
  %v3192 = vshrl.u32 %v3191, 7
  %v3193 = vsub.s32 3, %v3192
  %v3194 = vrot.slane %v1368, %v3193
  %v3195 = vlaneseq
  %v3196 = vshrl.u32 %v3195, 7
  %v3197 = vsub.s32 4, %v3196
  %v3198 = vrot.slane %v1368, %v3197
  %v3199 = vlaneseq
  %v3200 = vshrl.u32 %v3199, 7
  %v3201 = vsub.s32 5, %v3200
  %v3202 = vrot.slane %v1368, %v3201
  %v3203 = vlaneseq
  %v3204 = vshrl.u32 %v3203, 7
  %v3205 = vsub.s32 6, %v3204
  %v3206 = vrot.slane %v1368, %v3205
  %v3207 = vlaneseq
  %v3208 = vshrl.u32 %v3207, 7
  %v3209 = vsub.s32 7, %v3208
  %v3210 = vrot.slane %v1368, %v3209
  %v3211 = vlaneseq
  %v3212 = vshrl.u32 %v3211, 7
  %v3213 = vsub.s32 0, %v3212
  %v3214 = vrot.slane %v1370, %v3213
  %v3215 = vlaneseq
  %v3216 = vshrl.u32 %v3215, 7
  %v3217 = vsub.s32 1, %v3216
  %v3218 = vrot.slane %v1370, %v3217
  %v3219 = vlaneseq
  %v3220 = vshrl.u32 %v3219, 7
  %v3221 = vsub.s32 2, %v3220
  %v3222 = vrot.slane %v1370, %v3221
  %v3223 = vlaneseq
  %v3224 = vshrl.u32 %v3223, 7
  %v3225 = vsub.s32 3, %v3224
  %v3226 = vrot.slane %v1370, %v3225
  %v3227 = vlaneseq
  %v3228 = vshrl.u32 %v3227, 7
  %v3229 = vsub.s32 4, %v3228
  %v3230 = vrot.slane %v1370, %v3229
  %v3231 = vlaneseq
  %v3232 = vshrl.u32 %v3231, 7
  %v3233 = vsub.s32 5, %v3232
  %v3234 = vrot.slane %v1370, %v3233
  %v3235 = vlaneseq
  %v3236 = vshrl.u32 %v3235, 7
  %v3237 = vsub.s32 6, %v3236
  %v3238 = vrot.slane %v1370, %v3237
  %v3239 = vlaneseq
  %v3240 = vshrl.u32 %v3239, 7
  %v3241 = vsub.s32 7, %v3240
  %v3242 = vrot.slane %v1370, %v3241
  %v3243 = vlaneseq
  %v3244 = vshrl.u32 %v3243, 7
  %v3245 = vsub.s32 0, %v3244
  %v3246 = vrot.slane %v1372, %v3245
  %v3247 = vlaneseq
  %v3248 = vshrl.u32 %v3247, 7
  %v3249 = vsub.s32 1, %v3248
  %v3250 = vrot.slane %v1372, %v3249
  %v3251 = vlaneseq
  %v3252 = vshrl.u32 %v3251, 7
  %v3253 = vsub.s32 2, %v3252
  %v3254 = vrot.slane %v1372, %v3253
  %v3255 = vlaneseq
  %v3256 = vshrl.u32 %v3255, 7
  %v3257 = vsub.s32 3, %v3256
  %v3258 = vrot.slane %v1372, %v3257
  %v3259 = vlaneseq
  %v3260 = vshrl.u32 %v3259, 7
  %v3261 = vsub.s32 4, %v3260
  %v3262 = vrot.slane %v1372, %v3261
  %v3263 = vlaneseq
  %v3264 = vshrl.u32 %v3263, 7
  %v3265 = vsub.s32 5, %v3264
  %v3266 = vrot.slane %v1372, %v3265
  %v3267 = vlaneseq
  %v3268 = vshrl.u32 %v3267, 7
  %v3269 = vsub.s32 6, %v3268
  %v3270 = vrot.slane %v1372, %v3269
  %v3271 = vlaneseq
  %v3272 = vshrl.u32 %v3271, 7
  %v3273 = vsub.s32 7, %v3272
  %v3274 = vrot.slane %v1372, %v3273
  %v3275 = vlaneseq
  %v3276 = vshrl.u32 %v3275, 7
  %v3277 = vsub.s32 0, %v3276
  %v3278 = vrot.slane %v1374, %v3277
  %v3279 = vlaneseq
  %v3280 = vshrl.u32 %v3279, 7
  %v3281 = vsub.s32 1, %v3280
  %v3282 = vrot.slane %v1374, %v3281
  %v3283 = vlaneseq
  %v3284 = vshrl.u32 %v3283, 7
  %v3285 = vsub.s32 2, %v3284
  %v3286 = vrot.slane %v1374, %v3285
  %v3287 = vlaneseq
  %v3288 = vshrl.u32 %v3287, 7
  %v3289 = vsub.s32 3, %v3288
  %v3290 = vrot.slane %v1374, %v3289
  %v3291 = vlaneseq
  %v3292 = vshrl.u32 %v3291, 7
  %v3293 = vsub.s32 4, %v3292
  %v3294 = vrot.slane %v1374, %v3293
  %v3295 = vlaneseq
  %v3296 = vshrl.u32 %v3295, 7
  %v3297 = vsub.s32 5, %v3296
  %v3298 = vrot.slane %v1374, %v3297
  %v3299 = vlaneseq
  %v3300 = vshrl.u32 %v3299, 7
  %v3301 = vsub.s32 6, %v3300
  %v3302 = vrot.slane %v1374, %v3301
  %v3303 = vlaneseq
  %v3304 = vshrl.u32 %v3303, 7
  %v3305 = vsub.s32 7, %v3304
  %v3306 = vrot.slane %v1374, %v3305
  %v3307 = vlaneseq
  %v3308 = vshrl.u32 %v3307, 7
  %v3309 = vsub.s32 0, %v3308
  %v3310 = vrot.slane %v1376, %v3309
  %v3311 = vlaneseq
  %v3312 = vshrl.u32 %v3311, 7
  %v3313 = vsub.s32 1, %v3312
  %v3314 = vrot.slane %v1376, %v3313
  %v3315 = vlaneseq
  %v3316 = vshrl.u32 %v3315, 7
  %v3317 = vsub.s32 2, %v3316
  %v3318 = vrot.slane %v1376, %v3317
  %v3319 = vlaneseq
  %v3320 = vshrl.u32 %v3319, 7
  %v3321 = vsub.s32 3, %v3320
  %v3322 = vrot.slane %v1376, %v3321
  %v3323 = vlaneseq
  %v3324 = vshrl.u32 %v3323, 7
  %v3325 = vsub.s32 4, %v3324
  %v3326 = vrot.slane %v1376, %v3325
  %v3327 = vlaneseq
  %v3328 = vshrl.u32 %v3327, 7
  %v3329 = vsub.s32 5, %v3328
  %v3330 = vrot.slane %v1376, %v3329
  %v3331 = vlaneseq
  %v3332 = vshrl.u32 %v3331, 7
  %v3333 = vsub.s32 6, %v3332
  %v3334 = vrot.slane %v1376, %v3333
  %v3335 = vlaneseq
  %v3336 = vshrl.u32 %v3335, 7
  %v3337 = vsub.s32 7, %v3336
  %v3338 = vrot.slane %v1376, %v3337
  %v3339 = vlaneseq
  %v3340 = vshrl.u32 %v3339, 7
  %v3341 = vsub.s32 0, %v3340
  %v3342 = vrot.slane %v1378, %v3341
  %v3343 = vlaneseq
  %v3344 = vshrl.u32 %v3343, 7
  %v3345 = vsub.s32 1, %v3344
  %v3346 = vrot.slane %v1378, %v3345
  %v3347 = vlaneseq
  %v3348 = vshrl.u32 %v3347, 7
  %v3349 = vsub.s32 2, %v3348
  %v3350 = vrot.slane %v1378, %v3349
  %v3351 = vlaneseq
  %v3352 = vshrl.u32 %v3351, 7
  %v3353 = vsub.s32 3, %v3352
  %v3354 = vrot.slane %v1378, %v3353
  %v3355 = vlaneseq
  %v3356 = vshrl.u32 %v3355, 7
  %v3357 = vsub.s32 4, %v3356
  %v3358 = vrot.slane %v1378, %v3357
  %v3359 = vlaneseq
  %v3360 = vshrl.u32 %v3359, 7
  %v3361 = vsub.s32 5, %v3360
  %v3362 = vrot.slane %v1378, %v3361
  %v3363 = vlaneseq
  %v3364 = vshrl.u32 %v3363, 7
  %v3365 = vsub.s32 6, %v3364
  %v3366 = vrot.slane %v1378, %v3365
  %v3367 = vlaneseq
  %v3368 = vshrl.u32 %v3367, 7
  %v3369 = vsub.s32 7, %v3368
  %v3370 = vrot.slane %v1378, %v3369
  %v3371 = vlaneseq
  %v3372 = vshrl.u32 %v3371, 7
  %v3373 = vsub.s32 0, %v3372
  %v3374 = vrot.slane %v1380, %v3373
  %v3375 = vlaneseq
  %v3376 = vshrl.u32 %v3375, 7
  %v3377 = vsub.s32 1, %v3376
  %v3378 = vrot.slane %v1380, %v3377
  %v3379 = vlaneseq
  %v3380 = vshrl.u32 %v3379, 7
  %v3381 = vsub.s32 2, %v3380
  %v3382 = vrot.slane %v1380, %v3381
  %v3383 = vlaneseq
  %v3384 = vshrl.u32 %v3383, 7
  %v3385 = vsub.s32 3, %v3384
  %v3386 = vrot.slane %v1380, %v3385
  %v3387 = vlaneseq
  %v3388 = vshrl.u32 %v3387, 7
  %v3389 = vsub.s32 4, %v3388
  %v3390 = vrot.slane %v1380, %v3389
  %v3391 = vlaneseq
  %v3392 = vshrl.u32 %v3391, 7
  %v3393 = vsub.s32 5, %v3392
  %v3394 = vrot.slane %v1380, %v3393
  %v3395 = vlaneseq
  %v3396 = vshrl.u32 %v3395, 7
  %v3397 = vsub.s32 6, %v3396
  %v3398 = vrot.slane %v1380, %v3397
  %v3399 = vlaneseq
  %v3400 = vshrl.u32 %v3399, 7
  %v3401 = vsub.s32 7, %v3400
  %v3402 = vrot.slane %v1380, %v3401
  %v3403 = vlaneseq
  %v3404 = vshrl.u32 %v3403, 7
  %v3405 = vsub.s32 0, %v3404
  %v3406 = vrot.slane %v1382, %v3405
  %v3407 = vlaneseq
  %v3408 = vshrl.u32 %v3407, 7
  %v3409 = vsub.s32 1, %v3408
  %v3410 = vrot.slane %v1382, %v3409
  %v3411 = vlaneseq
  %v3412 = vshrl.u32 %v3411, 7
  %v3413 = vsub.s32 2, %v3412
  %v3414 = vrot.slane %v1382, %v3413
  %v3415 = vlaneseq
  %v3416 = vshrl.u32 %v3415, 7
  %v3417 = vsub.s32 3, %v3416
  %v3418 = vrot.slane %v1382, %v3417
  %v3419 = vlaneseq
  %v3420 = vshrl.u32 %v3419, 7
  %v3421 = vsub.s32 4, %v3420
  %v3422 = vrot.slane %v1382, %v3421
  %v3423 = vlaneseq
  %v3424 = vshrl.u32 %v3423, 7
  %v3425 = vsub.s32 5, %v3424
  %v3426 = vrot.slane %v1382, %v3425
  %v3427 = vlaneseq
  %v3428 = vshrl.u32 %v3427, 7
  %v3429 = vsub.s32 6, %v3428
  %v3430 = vrot.slane %v1382, %v3429
  %v3431 = vlaneseq
  %v3432 = vshrl.u32 %v3431, 7
  %v3433 = vsub.s32 7, %v3432
  %v3434 = vrot.slane %v1382, %v3433
  %v3435 = vlaneseq
  %v3436 = vshrl.u32 %v3435, 7
  %v3437 = vsub.s32 0, %v3436
  %v3438 = vrot.slane %v1384, %v3437
  %v3439 = vlaneseq
  %v3440 = vshrl.u32 %v3439, 7
  %v3441 = vsub.s32 1, %v3440
  %v3442 = vrot.slane %v1384, %v3441
  %v3443 = vlaneseq
  %v3444 = vshrl.u32 %v3443, 7
  %v3445 = vsub.s32 2, %v3444
  %v3446 = vrot.slane %v1384, %v3445
  %v3447 = vlaneseq
  %v3448 = vshrl.u32 %v3447, 7
  %v3449 = vsub.s32 3, %v3448
  %v3450 = vrot.slane %v1384, %v3449
  %v3451 = vlaneseq
  %v3452 = vshrl.u32 %v3451, 7
  %v3453 = vsub.s32 4, %v3452
  %v3454 = vrot.slane %v1384, %v3453
  %v3455 = vlaneseq
  %v3456 = vshrl.u32 %v3455, 7
  %v3457 = vsub.s32 5, %v3456
  %v3458 = vrot.slane %v1384, %v3457
  %v3459 = vlaneseq
  %v3460 = vshrl.u32 %v3459, 7
  %v3461 = vsub.s32 6, %v3460
  %v3462 = vrot.slane %v1384, %v3461
  %v3463 = vlaneseq
  %v3464 = vshrl.u32 %v3463, 7
  %v3465 = vsub.s32 7, %v3464
  %v3466 = vrot.slane %v1384, %v3465
  %v3467 = vlaneseq
  %v3468 = vshrl.u32 %v3467, 7
  %v3469 = vsub.s32 0, %v3468
  %v3470 = vrot.slane %v1386, %v3469
  %v3471 = vlaneseq
  %v3472 = vshrl.u32 %v3471, 7
  %v3473 = vsub.s32 1, %v3472
  %v3474 = vrot.slane %v1386, %v3473
  %v3475 = vlaneseq
  %v3476 = vshrl.u32 %v3475, 7
  %v3477 = vsub.s32 2, %v3476
  %v3478 = vrot.slane %v1386, %v3477
  %v3479 = vlaneseq
  %v3480 = vshrl.u32 %v3479, 7
  %v3481 = vsub.s32 3, %v3480
  %v3482 = vrot.slane %v1386, %v3481
  %v3483 = vlaneseq
  %v3484 = vshrl.u32 %v3483, 7
  %v3485 = vsub.s32 4, %v3484
  %v3486 = vrot.slane %v1386, %v3485
  %v3487 = vlaneseq
  %v3488 = vshrl.u32 %v3487, 7
  %v3489 = vsub.s32 5, %v3488
  %v3490 = vrot.slane %v1386, %v3489
  %v3491 = vlaneseq
  %v3492 = vshrl.u32 %v3491, 7
  %v3493 = vsub.s32 6, %v3492
  %v3494 = vrot.slane %v1386, %v3493
  %v3495 = vlaneseq
  %v3496 = vshrl.u32 %v3495, 7
  %v3497 = vsub.s32 7, %v3496
  %v3498 = vrot.slane %v1386, %v3497
  %v3499 = vcombine.low %v1454, %v1458
  %v3500 = vcombine.low %v1462, %v1466
  %v3501 = vcombine.low %v1470, %v1474
  %v3502 = vcombine.low %v1478, %v1482
  %v3504 = vunpack.c.l.s4 1966171168
  %v3505 = vunpack.c.0.s8 %v3504
  %v3506 = vlaneseq
  %v3507 = vshrl.u32 %v3506, 7
  %v3508 = vsub.s32 %v3505, %v3507
  %v3509 = vrot.slane %v3499, %v3508
  %v3511 = vunpack.c.l.s4 1966171168
  %v3512 = vunpack.c.0.s8 %v3511
  %v3513 = vlaneseq
  %v3514 = vshrl.u32 %v3513, 7
  %v3515 = vsub.s32 %v3512, %v3514
  %v3516 = vrot.slane %v3500, %v3515
  %v3518 = vunpack.c.l.s4 1966171168
  %v3519 = vunpack.c.0.s8 %v3518
  %v3520 = vlaneseq
  %v3521 = vshrl.u32 %v3520, 7
  %v3522 = vsub.s32 %v3519, %v3521
  %v3523 = vrot.slane %v3501, %v3522
  %v3525 = vunpack.c.l.s4 1966171168
  %v3526 = vunpack.c.0.s8 %v3525
  %v3527 = vlaneseq
  %v3528 = vshrl.u32 %v3527, 7
  %v3529 = vsub.s32 %v3526, %v3528
  %v3530 = vrot.slane %v3502, %v3529
  %v3531 = vcombine.low %v3509, %v3516
  %v3532 = vcombine.low %v3523, %v3530
  %v3534 = vunpack.c.l.s4 1966171168
  %v3535 = vunpack.c.0.s8 %v3534
  %v3536 = vlaneseq
  %v3537 = vshrl.u32 %v3536, 7
  %v3538 = vsub.s32 %v3535, %v3537
  %v3539 = vrot.slane %v3531, %v3538
  %v3541 = vunpack.c.l.s4 1966171168
  %v3542 = vunpack.c.0.s8 %v3541
  %v3543 = vlaneseq
  %v3544 = vshrl.u32 %v3543, 7
  %v3545 = vsub.s32 %v3542, %v3544
  %v3546 = vrot.slane %v3532, %v3545
  %v3547 = vcombine.low %v3539, %v3546
  %v3548 = vcombine.low %v1486, %v1490
  %v3549 = vcombine.low %v1494, %v1498
  %v3550 = vcombine.low %v1502, %v1506
  %v3551 = vcombine.low %v1510, %v1514
  %v3553 = vunpack.c.l.s4 1966171168
  %v3554 = vunpack.c.0.s8 %v3553
  %v3555 = vlaneseq
  %v3556 = vshrl.u32 %v3555, 7
  %v3557 = vsub.s32 %v3554, %v3556
  %v3558 = vrot.slane %v3548, %v3557
  %v3560 = vunpack.c.l.s4 1966171168
  %v3561 = vunpack.c.0.s8 %v3560
  %v3562 = vlaneseq
  %v3563 = vshrl.u32 %v3562, 7
  %v3564 = vsub.s32 %v3561, %v3563
  %v3565 = vrot.slane %v3549, %v3564
  %v3567 = vunpack.c.l.s4 1966171168
  %v3568 = vunpack.c.0.s8 %v3567
  %v3569 = vlaneseq
  %v3570 = vshrl.u32 %v3569, 7
  %v3571 = vsub.s32 %v3568, %v3570
  %v3572 = vrot.slane %v3550, %v3571
  %v3574 = vunpack.c.l.s4 1966171168
  %v3575 = vunpack.c.0.s8 %v3574
  %v3576 = vlaneseq
  %v3577 = vshrl.u32 %v3576, 7
  %v3578 = vsub.s32 %v3575, %v3577
  %v3579 = vrot.slane %v3551, %v3578
  %v3580 = vcombine.low %v3558, %v3565
  %v3581 = vcombine.low %v3572, %v3579
  %v3583 = vunpack.c.l.s4 1966171168
  %v3584 = vunpack.c.0.s8 %v3583
  %v3585 = vlaneseq
  %v3586 = vshrl.u32 %v3585, 7
  %v3587 = vsub.s32 %v3584, %v3586
  %v3588 = vrot.slane %v3580, %v3587
  %v3590 = vunpack.c.l.s4 1966171168
  %v3591 = vunpack.c.0.s8 %v3590
  %v3592 = vlaneseq
  %v3593 = vshrl.u32 %v3592, 7
  %v3594 = vsub.s32 %v3591, %v3593
  %v3595 = vrot.slane %v3581, %v3594
  %v3596 = vcombine.low %v3588, %v3595
  %v3597 = vcombine.low %v1518, %v1522
  %v3598 = vcombine.low %v1526, %v1530
  %v3599 = vcombine.low %v1534, %v1538
  %v3600 = vcombine.low %v1542, %v1546
  %v3602 = vunpack.c.l.s4 1966171168
  %v3603 = vunpack.c.0.s8 %v3602
  %v3604 = vlaneseq
  %v3605 = vshrl.u32 %v3604, 7
  %v3606 = vsub.s32 %v3603, %v3605
  %v3607 = vrot.slane %v3597, %v3606
  %v3609 = vunpack.c.l.s4 1966171168
  %v3610 = vunpack.c.0.s8 %v3609
  %v3611 = vlaneseq
  %v3612 = vshrl.u32 %v3611, 7
  %v3613 = vsub.s32 %v3610, %v3612
  %v3614 = vrot.slane %v3598, %v3613
  %v3616 = vunpack.c.l.s4 1966171168
  %v3617 = vunpack.c.0.s8 %v3616
  %v3618 = vlaneseq
  %v3619 = vshrl.u32 %v3618, 7
  %v3620 = vsub.s32 %v3617, %v3619
  %v3621 = vrot.slane %v3599, %v3620
  %v3623 = vunpack.c.l.s4 1966171168
  %v3624 = vunpack.c.0.s8 %v3623
  %v3625 = vlaneseq
  %v3626 = vshrl.u32 %v3625, 7
  %v3627 = vsub.s32 %v3624, %v3626
  %v3628 = vrot.slane %v3600, %v3627
  %v3629 = vcombine.low %v3607, %v3614
  %v3630 = vcombine.low %v3621, %v3628
  %v3632 = vunpack.c.l.s4 1966171168
  %v3633 = vunpack.c.0.s8 %v3632
  %v3634 = vlaneseq
  %v3635 = vshrl.u32 %v3634, 7
  %v3636 = vsub.s32 %v3633, %v3635
  %v3637 = vrot.slane %v3629, %v3636
  %v3639 = vunpack.c.l.s4 1966171168
  %v3640 = vunpack.c.0.s8 %v3639
  %v3641 = vlaneseq
  %v3642 = vshrl.u32 %v3641, 7
  %v3643 = vsub.s32 %v3640, %v3642
  %v3644 = vrot.slane %v3630, %v3643
  %v3645 = vcombine.low %v3637, %v3644
  %v3646 = vcombine.low %v1550, %v1554
  %v3647 = vcombine.low %v1558, %v1562
  %v3648 = vcombine.low %v1566, %v1570
  %v3649 = vcombine.low %v1574, %v1578
  %v3651 = vunpack.c.l.s4 1966171168
  %v3652 = vunpack.c.0.s8 %v3651
  %v3653 = vlaneseq
  %v3654 = vshrl.u32 %v3653, 7
  %v3655 = vsub.s32 %v3652, %v3654
  %v3656 = vrot.slane %v3646, %v3655
  %v3658 = vunpack.c.l.s4 1966171168
  %v3659 = vunpack.c.0.s8 %v3658
  %v3660 = vlaneseq
  %v3661 = vshrl.u32 %v3660, 7
  %v3662 = vsub.s32 %v3659, %v3661
  %v3663 = vrot.slane %v3647, %v3662
  %v3665 = vunpack.c.l.s4 1966171168
  %v3666 = vunpack.c.0.s8 %v3665
  %v3667 = vlaneseq
  %v3668 = vshrl.u32 %v3667, 7
  %v3669 = vsub.s32 %v3666, %v3668
  %v3670 = vrot.slane %v3648, %v3669
  %v3672 = vunpack.c.l.s4 1966171168
  %v3673 = vunpack.c.0.s8 %v3672
  %v3674 = vlaneseq
  %v3675 = vshrl.u32 %v3674, 7
  %v3676 = vsub.s32 %v3673, %v3675
  %v3677 = vrot.slane %v3649, %v3676
  %v3678 = vcombine.low %v3656, %v3663
  %v3679 = vcombine.low %v3670, %v3677
  %v3681 = vunpack.c.l.s4 1966171168
  %v3682 = vunpack.c.0.s8 %v3681
  %v3683 = vlaneseq
  %v3684 = vshrl.u32 %v3683, 7
  %v3685 = vsub.s32 %v3682, %v3684
  %v3686 = vrot.slane %v3678, %v3685
  %v3688 = vunpack.c.l.s4 1966171168
  %v3689 = vunpack.c.0.s8 %v3688
  %v3690 = vlaneseq
  %v3691 = vshrl.u32 %v3690, 7
  %v3692 = vsub.s32 %v3689, %v3691
  %v3693 = vrot.slane %v3679, %v3692
  %v3694 = vcombine.low %v3686, %v3693
  %v3695 = vcombine.low %v1582, %v1586
  %v3696 = vcombine.low %v1590, %v1594
  %v3697 = vcombine.low %v1598, %v1602
  %v3698 = vcombine.low %v1606, %v1610
  %v3700 = vunpack.c.l.s4 1966171168
  %v3701 = vunpack.c.0.s8 %v3700
  %v3702 = vlaneseq
  %v3703 = vshrl.u32 %v3702, 7
  %v3704 = vsub.s32 %v3701, %v3703
  %v3705 = vrot.slane %v3695, %v3704
  %v3707 = vunpack.c.l.s4 1966171168
  %v3708 = vunpack.c.0.s8 %v3707
  %v3709 = vlaneseq
  %v3710 = vshrl.u32 %v3709, 7
  %v3711 = vsub.s32 %v3708, %v3710
  %v3712 = vrot.slane %v3696, %v3711
  %v3714 = vunpack.c.l.s4 1966171168
  %v3715 = vunpack.c.0.s8 %v3714
  %v3716 = vlaneseq
  %v3717 = vshrl.u32 %v3716, 7
  %v3718 = vsub.s32 %v3715, %v3717
  %v3719 = vrot.slane %v3697, %v3718
  %v3721 = vunpack.c.l.s4 1966171168
  %v3722 = vunpack.c.0.s8 %v3721
  %v3723 = vlaneseq
  %v3724 = vshrl.u32 %v3723, 7
  %v3725 = vsub.s32 %v3722, %v3724
  %v3726 = vrot.slane %v3698, %v3725
  %v3727 = vcombine.low %v3705, %v3712
  %v3728 = vcombine.low %v3719, %v3726
  %v3730 = vunpack.c.l.s4 1966171168
  %v3731 = vunpack.c.0.s8 %v3730
  %v3732 = vlaneseq
  %v3733 = vshrl.u32 %v3732, 7
  %v3734 = vsub.s32 %v3731, %v3733
  %v3735 = vrot.slane %v3727, %v3734
  %v3737 = vunpack.c.l.s4 1966171168
  %v3738 = vunpack.c.0.s8 %v3737
  %v3739 = vlaneseq
  %v3740 = vshrl.u32 %v3739, 7
  %v3741 = vsub.s32 %v3738, %v3740
  %v3742 = vrot.slane %v3728, %v3741
  %v3743 = vcombine.low %v3735, %v3742
  %v3744 = vcombine.low %v1614, %v1618
  %v3745 = vcombine.low %v1622, %v1626
  %v3746 = vcombine.low %v1630, %v1634
  %v3747 = vcombine.low %v1638, %v1642
  %v3749 = vunpack.c.l.s4 1966171168
  %v3750 = vunpack.c.0.s8 %v3749
  %v3751 = vlaneseq
  %v3752 = vshrl.u32 %v3751, 7
  %v3753 = vsub.s32 %v3750, %v3752
  %v3754 = vrot.slane %v3744, %v3753
  %v3756 = vunpack.c.l.s4 1966171168
  %v3757 = vunpack.c.0.s8 %v3756
  %v3758 = vlaneseq
  %v3759 = vshrl.u32 %v3758, 7
  %v3760 = vsub.s32 %v3757, %v3759
  %v3761 = vrot.slane %v3745, %v3760
  %v3763 = vunpack.c.l.s4 1966171168
  %v3764 = vunpack.c.0.s8 %v3763
  %v3765 = vlaneseq
  %v3766 = vshrl.u32 %v3765, 7
  %v3767 = vsub.s32 %v3764, %v3766
  %v3768 = vrot.slane %v3746, %v3767
  %v3770 = vunpack.c.l.s4 1966171168
  %v3771 = vunpack.c.0.s8 %v3770
  %v3772 = vlaneseq
  %v3773 = vshrl.u32 %v3772, 7
  %v3774 = vsub.s32 %v3771, %v3773
  %v3775 = vrot.slane %v3747, %v3774
  %v3776 = vcombine.low %v3754, %v3761
  %v3777 = vcombine.low %v3768, %v3775
  %v3779 = vunpack.c.l.s4 1966171168
  %v3780 = vunpack.c.0.s8 %v3779
  %v3781 = vlaneseq
  %v3782 = vshrl.u32 %v3781, 7
  %v3783 = vsub.s32 %v3780, %v3782
  %v3784 = vrot.slane %v3776, %v3783
  %v3786 = vunpack.c.l.s4 1966171168
  %v3787 = vunpack.c.0.s8 %v3786
  %v3788 = vlaneseq
  %v3789 = vshrl.u32 %v3788, 7
  %v3790 = vsub.s32 %v3787, %v3789
  %v3791 = vrot.slane %v3777, %v3790
  %v3792 = vcombine.low %v3784, %v3791
  %v3793 = vcombine.low %v1646, %v1650
  %v3794 = vcombine.low %v1654, %v1658
  %v3795 = vcombine.low %v1662, %v1666
  %v3796 = vcombine.low %v1670, %v1674
  %v3798 = vunpack.c.l.s4 1966171168
  %v3799 = vunpack.c.0.s8 %v3798
  %v3800 = vlaneseq
  %v3801 = vshrl.u32 %v3800, 7
  %v3802 = vsub.s32 %v3799, %v3801
  %v3803 = vrot.slane %v3793, %v3802
  %v3805 = vunpack.c.l.s4 1966171168
  %v3806 = vunpack.c.0.s8 %v3805
  %v3807 = vlaneseq
  %v3808 = vshrl.u32 %v3807, 7
  %v3809 = vsub.s32 %v3806, %v3808
  %v3810 = vrot.slane %v3794, %v3809
  %v3812 = vunpack.c.l.s4 1966171168
  %v3813 = vunpack.c.0.s8 %v3812
  %v3814 = vlaneseq
  %v3815 = vshrl.u32 %v3814, 7
  %v3816 = vsub.s32 %v3813, %v3815
  %v3817 = vrot.slane %v3795, %v3816
  %v3819 = vunpack.c.l.s4 1966171168
  %v3820 = vunpack.c.0.s8 %v3819
  %v3821 = vlaneseq
  %v3822 = vshrl.u32 %v3821, 7
  %v3823 = vsub.s32 %v3820, %v3822
  %v3824 = vrot.slane %v3796, %v3823
  %v3825 = vcombine.low %v3803, %v3810
  %v3826 = vcombine.low %v3817, %v3824
  %v3828 = vunpack.c.l.s4 1966171168
  %v3829 = vunpack.c.0.s8 %v3828
  %v3830 = vlaneseq
  %v3831 = vshrl.u32 %v3830, 7
  %v3832 = vsub.s32 %v3829, %v3831
  %v3833 = vrot.slane %v3825, %v3832
  %v3835 = vunpack.c.l.s4 1966171168
  %v3836 = vunpack.c.0.s8 %v3835
  %v3837 = vlaneseq
  %v3838 = vshrl.u32 %v3837, 7
  %v3839 = vsub.s32 %v3836, %v3838
  %v3840 = vrot.slane %v3826, %v3839
  %v3841 = vcombine.low %v3833, %v3840
  %v3842 = vcombine.low %v1678, %v1682
  %v3843 = vcombine.low %v1686, %v1690
  %v3844 = vcombine.low %v1694, %v1698
  %v3845 = vcombine.low %v1702, %v1706
  %v3847 = vunpack.c.l.s4 1966171168
  %v3848 = vunpack.c.0.s8 %v3847
  %v3849 = vlaneseq
  %v3850 = vshrl.u32 %v3849, 7
  %v3851 = vsub.s32 %v3848, %v3850
  %v3852 = vrot.slane %v3842, %v3851
  %v3854 = vunpack.c.l.s4 1966171168
  %v3855 = vunpack.c.0.s8 %v3854
  %v3856 = vlaneseq
  %v3857 = vshrl.u32 %v3856, 7
  %v3858 = vsub.s32 %v3855, %v3857
  %v3859 = vrot.slane %v3843, %v3858
  %v3861 = vunpack.c.l.s4 1966171168
  %v3862 = vunpack.c.0.s8 %v3861
  %v3863 = vlaneseq
  %v3864 = vshrl.u32 %v3863, 7
  %v3865 = vsub.s32 %v3862, %v3864
  %v3866 = vrot.slane %v3844, %v3865
  %v3868 = vunpack.c.l.s4 1966171168
  %v3869 = vunpack.c.0.s8 %v3868
  %v3870 = vlaneseq
  %v3871 = vshrl.u32 %v3870, 7
  %v3872 = vsub.s32 %v3869, %v3871
  %v3873 = vrot.slane %v3845, %v3872
  %v3874 = vcombine.low %v3852, %v3859
  %v3875 = vcombine.low %v3866, %v3873
  %v3877 = vunpack.c.l.s4 1966171168
  %v3878 = vunpack.c.0.s8 %v3877
  %v3879 = vlaneseq
  %v3880 = vshrl.u32 %v3879, 7
  %v3881 = vsub.s32 %v3878, %v3880
  %v3882 = vrot.slane %v3874, %v3881
  %v3884 = vunpack.c.l.s4 1966171168
  %v3885 = vunpack.c.0.s8 %v3884
  %v3886 = vlaneseq
  %v3887 = vshrl.u32 %v3886, 7
  %v3888 = vsub.s32 %v3885, %v3887
  %v3889 = vrot.slane %v3875, %v3888
  %v3890 = vcombine.low %v3882, %v3889
  %v3891 = vcombine.low %v1710, %v1714
  %v3892 = vcombine.low %v1718, %v1722
  %v3893 = vcombine.low %v1726, %v1730
  %v3894 = vcombine.low %v1734, %v1738
  %v3896 = vunpack.c.l.s4 1966171168
  %v3897 = vunpack.c.0.s8 %v3896
  %v3898 = vlaneseq
  %v3899 = vshrl.u32 %v3898, 7
  %v3900 = vsub.s32 %v3897, %v3899
  %v3901 = vrot.slane %v3891, %v3900
  %v3903 = vunpack.c.l.s4 1966171168
  %v3904 = vunpack.c.0.s8 %v3903
  %v3905 = vlaneseq
  %v3906 = vshrl.u32 %v3905, 7
  %v3907 = vsub.s32 %v3904, %v3906
  %v3908 = vrot.slane %v3892, %v3907
  %v3910 = vunpack.c.l.s4 1966171168
  %v3911 = vunpack.c.0.s8 %v3910
  %v3912 = vlaneseq
  %v3913 = vshrl.u32 %v3912, 7
  %v3914 = vsub.s32 %v3911, %v3913
  %v3915 = vrot.slane %v3893, %v3914
  %v3917 = vunpack.c.l.s4 1966171168
  %v3918 = vunpack.c.0.s8 %v3917
  %v3919 = vlaneseq
  %v3920 = vshrl.u32 %v3919, 7
  %v3921 = vsub.s32 %v3918, %v3920
  %v3922 = vrot.slane %v3894, %v3921
  %v3923 = vcombine.low %v3901, %v3908
  %v3924 = vcombine.low %v3915, %v3922
  %v3926 = vunpack.c.l.s4 1966171168
  %v3927 = vunpack.c.0.s8 %v3926
  %v3928 = vlaneseq
  %v3929 = vshrl.u32 %v3928, 7
  %v3930 = vsub.s32 %v3927, %v3929
  %v3931 = vrot.slane %v3923, %v3930
  %v3933 = vunpack.c.l.s4 1966171168
  %v3934 = vunpack.c.0.s8 %v3933
  %v3935 = vlaneseq
  %v3936 = vshrl.u32 %v3935, 7
  %v3937 = vsub.s32 %v3934, %v3936
  %v3938 = vrot.slane %v3924, %v3937
  %v3939 = vcombine.low %v3931, %v3938
  %v3940 = vcombine.low %v1742, %v1746
  %v3941 = vcombine.low %v1750, %v1754
  %v3942 = vcombine.low %v1758, %v1762
  %v3943 = vcombine.low %v1766, %v1770
  %v3945 = vunpack.c.l.s4 1966171168
  %v3946 = vunpack.c.0.s8 %v3945
  %v3947 = vlaneseq
  %v3948 = vshrl.u32 %v3947, 7
  %v3949 = vsub.s32 %v3946, %v3948
  %v3950 = vrot.slane %v3940, %v3949
  %v3952 = vunpack.c.l.s4 1966171168
  %v3953 = vunpack.c.0.s8 %v3952
  %v3954 = vlaneseq
  %v3955 = vshrl.u32 %v3954, 7
  %v3956 = vsub.s32 %v3953, %v3955
  %v3957 = vrot.slane %v3941, %v3956
  %v3959 = vunpack.c.l.s4 1966171168
  %v3960 = vunpack.c.0.s8 %v3959
  %v3961 = vlaneseq
  %v3962 = vshrl.u32 %v3961, 7
  %v3963 = vsub.s32 %v3960, %v3962
  %v3964 = vrot.slane %v3942, %v3963
  %v3966 = vunpack.c.l.s4 1966171168
  %v3967 = vunpack.c.0.s8 %v3966
  %v3968 = vlaneseq
  %v3969 = vshrl.u32 %v3968, 7
  %v3970 = vsub.s32 %v3967, %v3969
  %v3971 = vrot.slane %v3943, %v3970
  %v3972 = vcombine.low %v3950, %v3957
  %v3973 = vcombine.low %v3964, %v3971
  %v3975 = vunpack.c.l.s4 1966171168
  %v3976 = vunpack.c.0.s8 %v3975
  %v3977 = vlaneseq
  %v3978 = vshrl.u32 %v3977, 7
  %v3979 = vsub.s32 %v3976, %v3978
  %v3980 = vrot.slane %v3972, %v3979
  %v3982 = vunpack.c.l.s4 1966171168
  %v3983 = vunpack.c.0.s8 %v3982
  %v3984 = vlaneseq
  %v3985 = vshrl.u32 %v3984, 7
  %v3986 = vsub.s32 %v3983, %v3985
  %v3987 = vrot.slane %v3973, %v3986
  %v3988 = vcombine.low %v3980, %v3987
  %v3989 = vcombine.low %v1774, %v1778
  %v3990 = vcombine.low %v1782, %v1786
  %v3991 = vcombine.low %v1790, %v1794
  %v3992 = vcombine.low %v1798, %v1802
  %v3994 = vunpack.c.l.s4 1966171168
  %v3995 = vunpack.c.0.s8 %v3994
  %v3996 = vlaneseq
  %v3997 = vshrl.u32 %v3996, 7
  %v3998 = vsub.s32 %v3995, %v3997
  %v3999 = vrot.slane %v3989, %v3998
  %v4001 = vunpack.c.l.s4 1966171168
  %v4002 = vunpack.c.0.s8 %v4001
  %v4003 = vlaneseq
  %v4004 = vshrl.u32 %v4003, 7
  %v4005 = vsub.s32 %v4002, %v4004
  %v4006 = vrot.slane %v3990, %v4005
  %v4008 = vunpack.c.l.s4 1966171168
  %v4009 = vunpack.c.0.s8 %v4008
  %v4010 = vlaneseq
  %v4011 = vshrl.u32 %v4010, 7
  %v4012 = vsub.s32 %v4009, %v4011
  %v4013 = vrot.slane %v3991, %v4012
  %v4015 = vunpack.c.l.s4 1966171168
  %v4016 = vunpack.c.0.s8 %v4015
  %v4017 = vlaneseq
  %v4018 = vshrl.u32 %v4017, 7
  %v4019 = vsub.s32 %v4016, %v4018
  %v4020 = vrot.slane %v3992, %v4019
  %v4021 = vcombine.low %v3999, %v4006
  %v4022 = vcombine.low %v4013, %v4020
  %v4024 = vunpack.c.l.s4 1966171168
  %v4025 = vunpack.c.0.s8 %v4024
  %v4026 = vlaneseq
  %v4027 = vshrl.u32 %v4026, 7
  %v4028 = vsub.s32 %v4025, %v4027
  %v4029 = vrot.slane %v4021, %v4028
  %v4031 = vunpack.c.l.s4 1966171168
  %v4032 = vunpack.c.0.s8 %v4031
  %v4033 = vlaneseq
  %v4034 = vshrl.u32 %v4033, 7
  %v4035 = vsub.s32 %v4032, %v4034
  %v4036 = vrot.slane %v4022, %v4035
  %v4037 = vcombine.low %v4029, %v4036
  %v4038 = vcombine.low %v1806, %v1810
  %v4039 = vcombine.low %v1814, %v1818
  %v4040 = vcombine.low %v1822, %v1826
  %v4041 = vcombine.low %v1830, %v1834
  %v4043 = vunpack.c.l.s4 1966171168
  %v4044 = vunpack.c.0.s8 %v4043
  %v4045 = vlaneseq
  %v4046 = vshrl.u32 %v4045, 7
  %v4047 = vsub.s32 %v4044, %v4046
  %v4048 = vrot.slane %v4038, %v4047
  %v4050 = vunpack.c.l.s4 1966171168
  %v4051 = vunpack.c.0.s8 %v4050
  %v4052 = vlaneseq
  %v4053 = vshrl.u32 %v4052, 7
  %v4054 = vsub.s32 %v4051, %v4053
  %v4055 = vrot.slane %v4039, %v4054
  %v4057 = vunpack.c.l.s4 1966171168
  %v4058 = vunpack.c.0.s8 %v4057
  %v4059 = vlaneseq
  %v4060 = vshrl.u32 %v4059, 7
  %v4061 = vsub.s32 %v4058, %v4060
  %v4062 = vrot.slane %v4040, %v4061
  %v4064 = vunpack.c.l.s4 1966171168
  %v4065 = vunpack.c.0.s8 %v4064
  %v4066 = vlaneseq
  %v4067 = vshrl.u32 %v4066, 7
  %v4068 = vsub.s32 %v4065, %v4067
  %v4069 = vrot.slane %v4041, %v4068
  %v4070 = vcombine.low %v4048, %v4055
  %v4071 = vcombine.low %v4062, %v4069
  %v4073 = vunpack.c.l.s4 1966171168
  %v4074 = vunpack.c.0.s8 %v4073
  %v4075 = vlaneseq
  %v4076 = vshrl.u32 %v4075, 7
  %v4077 = vsub.s32 %v4074, %v4076
  %v4078 = vrot.slane %v4070, %v4077
  %v4080 = vunpack.c.l.s4 1966171168
  %v4081 = vunpack.c.0.s8 %v4080
  %v4082 = vlaneseq
  %v4083 = vshrl.u32 %v4082, 7
  %v4084 = vsub.s32 %v4081, %v4083
  %v4085 = vrot.slane %v4071, %v4084
  %v4086 = vcombine.low %v4078, %v4085
  %v4087 = vcombine.low %v1838, %v1842
  %v4088 = vcombine.low %v1846, %v1850
  %v4089 = vcombine.low %v1854, %v1858
  %v4090 = vcombine.low %v1862, %v1866
  %v4092 = vunpack.c.l.s4 1966171168
  %v4093 = vunpack.c.0.s8 %v4092
  %v4094 = vlaneseq
  %v4095 = vshrl.u32 %v4094, 7
  %v4096 = vsub.s32 %v4093, %v4095
  %v4097 = vrot.slane %v4087, %v4096
  %v4099 = vunpack.c.l.s4 1966171168
  %v4100 = vunpack.c.0.s8 %v4099
  %v4101 = vlaneseq
  %v4102 = vshrl.u32 %v4101, 7
  %v4103 = vsub.s32 %v4100, %v4102
  %v4104 = vrot.slane %v4088, %v4103
  %v4106 = vunpack.c.l.s4 1966171168
  %v4107 = vunpack.c.0.s8 %v4106
  %v4108 = vlaneseq
  %v4109 = vshrl.u32 %v4108, 7
  %v4110 = vsub.s32 %v4107, %v4109
  %v4111 = vrot.slane %v4089, %v4110
  %v4113 = vunpack.c.l.s4 1966171168
  %v4114 = vunpack.c.0.s8 %v4113
  %v4115 = vlaneseq
  %v4116 = vshrl.u32 %v4115, 7
  %v4117 = vsub.s32 %v4114, %v4116
  %v4118 = vrot.slane %v4090, %v4117
  %v4119 = vcombine.low %v4097, %v4104
  %v4120 = vcombine.low %v4111, %v4118
  %v4122 = vunpack.c.l.s4 1966171168
  %v4123 = vunpack.c.0.s8 %v4122
  %v4124 = vlaneseq
  %v4125 = vshrl.u32 %v4124, 7
  %v4126 = vsub.s32 %v4123, %v4125
  %v4127 = vrot.slane %v4119, %v4126
  %v4129 = vunpack.c.l.s4 1966171168
  %v4130 = vunpack.c.0.s8 %v4129
  %v4131 = vlaneseq
  %v4132 = vshrl.u32 %v4131, 7
  %v4133 = vsub.s32 %v4130, %v4132
  %v4134 = vrot.slane %v4120, %v4133
  %v4135 = vcombine.low %v4127, %v4134
  %v4136 = vcombine.low %v1870, %v1874
  %v4137 = vcombine.low %v1878, %v1882
  %v4138 = vcombine.low %v1886, %v1890
  %v4139 = vcombine.low %v1894, %v1898
  %v4141 = vunpack.c.l.s4 1966171168
  %v4142 = vunpack.c.0.s8 %v4141
  %v4143 = vlaneseq
  %v4144 = vshrl.u32 %v4143, 7
  %v4145 = vsub.s32 %v4142, %v4144
  %v4146 = vrot.slane %v4136, %v4145
  %v4148 = vunpack.c.l.s4 1966171168
  %v4149 = vunpack.c.0.s8 %v4148
  %v4150 = vlaneseq
  %v4151 = vshrl.u32 %v4150, 7
  %v4152 = vsub.s32 %v4149, %v4151
  %v4153 = vrot.slane %v4137, %v4152
  %v4155 = vunpack.c.l.s4 1966171168
  %v4156 = vunpack.c.0.s8 %v4155
  %v4157 = vlaneseq
  %v4158 = vshrl.u32 %v4157, 7
  %v4159 = vsub.s32 %v4156, %v4158
  %v4160 = vrot.slane %v4138, %v4159
  %v4162 = vunpack.c.l.s4 1966171168
  %v4163 = vunpack.c.0.s8 %v4162
  %v4164 = vlaneseq
  %v4165 = vshrl.u32 %v4164, 7
  %v4166 = vsub.s32 %v4163, %v4165
  %v4167 = vrot.slane %v4139, %v4166
  %v4168 = vcombine.low %v4146, %v4153
  %v4169 = vcombine.low %v4160, %v4167
  %v4171 = vunpack.c.l.s4 1966171168
  %v4172 = vunpack.c.0.s8 %v4171
  %v4173 = vlaneseq
  %v4174 = vshrl.u32 %v4173, 7
  %v4175 = vsub.s32 %v4172, %v4174
  %v4176 = vrot.slane %v4168, %v4175
  %v4178 = vunpack.c.l.s4 1966171168
  %v4179 = vunpack.c.0.s8 %v4178
  %v4180 = vlaneseq
  %v4181 = vshrl.u32 %v4180, 7
  %v4182 = vsub.s32 %v4179, %v4181
  %v4183 = vrot.slane %v4169, %v4182
  %v4184 = vcombine.low %v4176, %v4183
  %v4185 = vcombine.low %v1902, %v1906
  %v4186 = vcombine.low %v1910, %v1914
  %v4187 = vcombine.low %v1918, %v1922
  %v4188 = vcombine.low %v1926, %v1930
  %v4190 = vunpack.c.l.s4 1966171168
  %v4191 = vunpack.c.0.s8 %v4190
  %v4192 = vlaneseq
  %v4193 = vshrl.u32 %v4192, 7
  %v4194 = vsub.s32 %v4191, %v4193
  %v4195 = vrot.slane %v4185, %v4194
  %v4197 = vunpack.c.l.s4 1966171168
  %v4198 = vunpack.c.0.s8 %v4197
  %v4199 = vlaneseq
  %v4200 = vshrl.u32 %v4199, 7
  %v4201 = vsub.s32 %v4198, %v4200
  %v4202 = vrot.slane %v4186, %v4201
  %v4204 = vunpack.c.l.s4 1966171168
  %v4205 = vunpack.c.0.s8 %v4204
  %v4206 = vlaneseq
  %v4207 = vshrl.u32 %v4206, 7
  %v4208 = vsub.s32 %v4205, %v4207
  %v4209 = vrot.slane %v4187, %v4208
  %v4211 = vunpack.c.l.s4 1966171168
  %v4212 = vunpack.c.0.s8 %v4211
  %v4213 = vlaneseq
  %v4214 = vshrl.u32 %v4213, 7
  %v4215 = vsub.s32 %v4212, %v4214
  %v4216 = vrot.slane %v4188, %v4215
  %v4217 = vcombine.low %v4195, %v4202
  %v4218 = vcombine.low %v4209, %v4216
  %v4220 = vunpack.c.l.s4 1966171168
  %v4221 = vunpack.c.0.s8 %v4220
  %v4222 = vlaneseq
  %v4223 = vshrl.u32 %v4222, 7
  %v4224 = vsub.s32 %v4221, %v4223
  %v4225 = vrot.slane %v4217, %v4224
  %v4227 = vunpack.c.l.s4 1966171168
  %v4228 = vunpack.c.0.s8 %v4227
  %v4229 = vlaneseq
  %v4230 = vshrl.u32 %v4229, 7
  %v4231 = vsub.s32 %v4228, %v4230
  %v4232 = vrot.slane %v4218, %v4231
  %v4233 = vcombine.low %v4225, %v4232
  %v4234 = vcombine.low %v1934, %v1938
  %v4235 = vcombine.low %v1942, %v1946
  %v4236 = vcombine.low %v1950, %v1954
  %v4237 = vcombine.low %v1958, %v1962
  %v4239 = vunpack.c.l.s4 1966171168
  %v4240 = vunpack.c.0.s8 %v4239
  %v4241 = vlaneseq
  %v4242 = vshrl.u32 %v4241, 7
  %v4243 = vsub.s32 %v4240, %v4242
  %v4244 = vrot.slane %v4234, %v4243
  %v4246 = vunpack.c.l.s4 1966171168
  %v4247 = vunpack.c.0.s8 %v4246
  %v4248 = vlaneseq
  %v4249 = vshrl.u32 %v4248, 7
  %v4250 = vsub.s32 %v4247, %v4249
  %v4251 = vrot.slane %v4235, %v4250
  %v4253 = vunpack.c.l.s4 1966171168
  %v4254 = vunpack.c.0.s8 %v4253
  %v4255 = vlaneseq
  %v4256 = vshrl.u32 %v4255, 7
  %v4257 = vsub.s32 %v4254, %v4256
  %v4258 = vrot.slane %v4236, %v4257
  %v4260 = vunpack.c.l.s4 1966171168
  %v4261 = vunpack.c.0.s8 %v4260
  %v4262 = vlaneseq
  %v4263 = vshrl.u32 %v4262, 7
  %v4264 = vsub.s32 %v4261, %v4263
  %v4265 = vrot.slane %v4237, %v4264
  %v4266 = vcombine.low %v4244, %v4251
  %v4267 = vcombine.low %v4258, %v4265
  %v4269 = vunpack.c.l.s4 1966171168
  %v4270 = vunpack.c.0.s8 %v4269
  %v4271 = vlaneseq
  %v4272 = vshrl.u32 %v4271, 7
  %v4273 = vsub.s32 %v4270, %v4272
  %v4274 = vrot.slane %v4266, %v4273
  %v4276 = vunpack.c.l.s4 1966171168
  %v4277 = vunpack.c.0.s8 %v4276
  %v4278 = vlaneseq
  %v4279 = vshrl.u32 %v4278, 7
  %v4280 = vsub.s32 %v4277, %v4279
  %v4281 = vrot.slane %v4267, %v4280
  %v4282 = vcombine.low %v4274, %v4281
  %v4283 = vcombine.low %v1966, %v1970
  %v4284 = vcombine.low %v1974, %v1978
  %v4285 = vcombine.low %v1982, %v1986
  %v4286 = vcombine.low %v1990, %v1994
  %v4288 = vunpack.c.l.s4 1966171168
  %v4289 = vunpack.c.0.s8 %v4288
  %v4290 = vlaneseq
  %v4291 = vshrl.u32 %v4290, 7
  %v4292 = vsub.s32 %v4289, %v4291
  %v4293 = vrot.slane %v4283, %v4292
  %v4295 = vunpack.c.l.s4 1966171168
  %v4296 = vunpack.c.0.s8 %v4295
  %v4297 = vlaneseq
  %v4298 = vshrl.u32 %v4297, 7
  %v4299 = vsub.s32 %v4296, %v4298
  %v4300 = vrot.slane %v4284, %v4299
  %v4302 = vunpack.c.l.s4 1966171168
  %v4303 = vunpack.c.0.s8 %v4302
  %v4304 = vlaneseq
  %v4305 = vshrl.u32 %v4304, 7
  %v4306 = vsub.s32 %v4303, %v4305
  %v4307 = vrot.slane %v4285, %v4306
  %v4309 = vunpack.c.l.s4 1966171168
  %v4310 = vunpack.c.0.s8 %v4309
  %v4311 = vlaneseq
  %v4312 = vshrl.u32 %v4311, 7
  %v4313 = vsub.s32 %v4310, %v4312
  %v4314 = vrot.slane %v4286, %v4313
  %v4315 = vcombine.low %v4293, %v4300
  %v4316 = vcombine.low %v4307, %v4314
  %v4318 = vunpack.c.l.s4 1966171168
  %v4319 = vunpack.c.0.s8 %v4318
  %v4320 = vlaneseq
  %v4321 = vshrl.u32 %v4320, 7
  %v4322 = vsub.s32 %v4319, %v4321
  %v4323 = vrot.slane %v4315, %v4322
  %v4325 = vunpack.c.l.s4 1966171168
  %v4326 = vunpack.c.0.s8 %v4325
  %v4327 = vlaneseq
  %v4328 = vshrl.u32 %v4327, 7
  %v4329 = vsub.s32 %v4326, %v4328
  %v4330 = vrot.slane %v4316, %v4329
  %v4331 = vcombine.low %v4323, %v4330
  %v4332 = vcombine.low %v1998, %v2002
  %v4333 = vcombine.low %v2006, %v2010
  %v4334 = vcombine.low %v2014, %v2018
  %v4335 = vcombine.low %v2022, %v2026
  %v4337 = vunpack.c.l.s4 1966171168
  %v4338 = vunpack.c.0.s8 %v4337
  %v4339 = vlaneseq
  %v4340 = vshrl.u32 %v4339, 7
  %v4341 = vsub.s32 %v4338, %v4340
  %v4342 = vrot.slane %v4332, %v4341
  %v4344 = vunpack.c.l.s4 1966171168
  %v4345 = vunpack.c.0.s8 %v4344
  %v4346 = vlaneseq
  %v4347 = vshrl.u32 %v4346, 7
  %v4348 = vsub.s32 %v4345, %v4347
  %v4349 = vrot.slane %v4333, %v4348
  %v4351 = vunpack.c.l.s4 1966171168
  %v4352 = vunpack.c.0.s8 %v4351
  %v4353 = vlaneseq
  %v4354 = vshrl.u32 %v4353, 7
  %v4355 = vsub.s32 %v4352, %v4354
  %v4356 = vrot.slane %v4334, %v4355
  %v4358 = vunpack.c.l.s4 1966171168
  %v4359 = vunpack.c.0.s8 %v4358
  %v4360 = vlaneseq
  %v4361 = vshrl.u32 %v4360, 7
  %v4362 = vsub.s32 %v4359, %v4361
  %v4363 = vrot.slane %v4335, %v4362
  %v4364 = vcombine.low %v4342, %v4349
  %v4365 = vcombine.low %v4356, %v4363
  %v4367 = vunpack.c.l.s4 1966171168
  %v4368 = vunpack.c.0.s8 %v4367
  %v4369 = vlaneseq
  %v4370 = vshrl.u32 %v4369, 7
  %v4371 = vsub.s32 %v4368, %v4370
  %v4372 = vrot.slane %v4364, %v4371
  %v4374 = vunpack.c.l.s4 1966171168
  %v4375 = vunpack.c.0.s8 %v4374
  %v4376 = vlaneseq
  %v4377 = vshrl.u32 %v4376, 7
  %v4378 = vsub.s32 %v4375, %v4377
  %v4379 = vrot.slane %v4365, %v4378
  %v4380 = vcombine.low %v4372, %v4379
  %v4381 = vcombine.low %v2030, %v2034
  %v4382 = vcombine.low %v2038, %v2042
  %v4383 = vcombine.low %v2046, %v2050
  %v4384 = vcombine.low %v2054, %v2058
  %v4386 = vunpack.c.l.s4 1966171168
  %v4387 = vunpack.c.0.s8 %v4386
  %v4388 = vlaneseq
  %v4389 = vshrl.u32 %v4388, 7
  %v4390 = vsub.s32 %v4387, %v4389
  %v4391 = vrot.slane %v4381, %v4390
  %v4393 = vunpack.c.l.s4 1966171168
  %v4394 = vunpack.c.0.s8 %v4393
  %v4395 = vlaneseq
  %v4396 = vshrl.u32 %v4395, 7
  %v4397 = vsub.s32 %v4394, %v4396
  %v4398 = vrot.slane %v4382, %v4397
  %v4400 = vunpack.c.l.s4 1966171168
  %v4401 = vunpack.c.0.s8 %v4400
  %v4402 = vlaneseq
  %v4403 = vshrl.u32 %v4402, 7
  %v4404 = vsub.s32 %v4401, %v4403
  %v4405 = vrot.slane %v4383, %v4404
  %v4407 = vunpack.c.l.s4 1966171168
  %v4408 = vunpack.c.0.s8 %v4407
  %v4409 = vlaneseq
  %v4410 = vshrl.u32 %v4409, 7
  %v4411 = vsub.s32 %v4408, %v4410
  %v4412 = vrot.slane %v4384, %v4411
  %v4413 = vcombine.low %v4391, %v4398
  %v4414 = vcombine.low %v4405, %v4412
  %v4416 = vunpack.c.l.s4 1966171168
  %v4417 = vunpack.c.0.s8 %v4416
  %v4418 = vlaneseq
  %v4419 = vshrl.u32 %v4418, 7
  %v4420 = vsub.s32 %v4417, %v4419
  %v4421 = vrot.slane %v4413, %v4420
  %v4423 = vunpack.c.l.s4 1966171168
  %v4424 = vunpack.c.0.s8 %v4423
  %v4425 = vlaneseq
  %v4426 = vshrl.u32 %v4425, 7
  %v4427 = vsub.s32 %v4424, %v4426
  %v4428 = vrot.slane %v4414, %v4427
  %v4429 = vcombine.low %v4421, %v4428
  %v4430 = vcombine.low %v2062, %v2066
  %v4431 = vcombine.low %v2070, %v2074
  %v4432 = vcombine.low %v2078, %v2082
  %v4433 = vcombine.low %v2086, %v2090
  %v4435 = vunpack.c.l.s4 1966171168
  %v4436 = vunpack.c.0.s8 %v4435
  %v4437 = vlaneseq
  %v4438 = vshrl.u32 %v4437, 7
  %v4439 = vsub.s32 %v4436, %v4438
  %v4440 = vrot.slane %v4430, %v4439
  %v4442 = vunpack.c.l.s4 1966171168
  %v4443 = vunpack.c.0.s8 %v4442
  %v4444 = vlaneseq
  %v4445 = vshrl.u32 %v4444, 7
  %v4446 = vsub.s32 %v4443, %v4445
  %v4447 = vrot.slane %v4431, %v4446
  %v4449 = vunpack.c.l.s4 1966171168
  %v4450 = vunpack.c.0.s8 %v4449
  %v4451 = vlaneseq
  %v4452 = vshrl.u32 %v4451, 7
  %v4453 = vsub.s32 %v4450, %v4452
  %v4454 = vrot.slane %v4432, %v4453
  %v4456 = vunpack.c.l.s4 1966171168
  %v4457 = vunpack.c.0.s8 %v4456
  %v4458 = vlaneseq
  %v4459 = vshrl.u32 %v4458, 7
  %v4460 = vsub.s32 %v4457, %v4459
  %v4461 = vrot.slane %v4433, %v4460
  %v4462 = vcombine.low %v4440, %v4447
  %v4463 = vcombine.low %v4454, %v4461
  %v4465 = vunpack.c.l.s4 1966171168
  %v4466 = vunpack.c.0.s8 %v4465
  %v4467 = vlaneseq
  %v4468 = vshrl.u32 %v4467, 7
  %v4469 = vsub.s32 %v4466, %v4468
  %v4470 = vrot.slane %v4462, %v4469
  %v4472 = vunpack.c.l.s4 1966171168
  %v4473 = vunpack.c.0.s8 %v4472
  %v4474 = vlaneseq
  %v4475 = vshrl.u32 %v4474, 7
  %v4476 = vsub.s32 %v4473, %v4475
  %v4477 = vrot.slane %v4463, %v4476
  %v4478 = vcombine.low %v4470, %v4477
  %v4479 = vcombine.low %v2094, %v2098
  %v4480 = vcombine.low %v2102, %v2106
  %v4481 = vcombine.low %v2110, %v2114
  %v4482 = vcombine.low %v2118, %v2122
  %v4484 = vunpack.c.l.s4 1966171168
  %v4485 = vunpack.c.0.s8 %v4484
  %v4486 = vlaneseq
  %v4487 = vshrl.u32 %v4486, 7
  %v4488 = vsub.s32 %v4485, %v4487
  %v4489 = vrot.slane %v4479, %v4488
  %v4491 = vunpack.c.l.s4 1966171168
  %v4492 = vunpack.c.0.s8 %v4491
  %v4493 = vlaneseq
  %v4494 = vshrl.u32 %v4493, 7
  %v4495 = vsub.s32 %v4492, %v4494
  %v4496 = vrot.slane %v4480, %v4495
  %v4498 = vunpack.c.l.s4 1966171168
  %v4499 = vunpack.c.0.s8 %v4498
  %v4500 = vlaneseq
  %v4501 = vshrl.u32 %v4500, 7
  %v4502 = vsub.s32 %v4499, %v4501
  %v4503 = vrot.slane %v4481, %v4502
  %v4505 = vunpack.c.l.s4 1966171168
  %v4506 = vunpack.c.0.s8 %v4505
  %v4507 = vlaneseq
  %v4508 = vshrl.u32 %v4507, 7
  %v4509 = vsub.s32 %v4506, %v4508
  %v4510 = vrot.slane %v4482, %v4509
  %v4511 = vcombine.low %v4489, %v4496
  %v4512 = vcombine.low %v4503, %v4510
  %v4514 = vunpack.c.l.s4 1966171168
  %v4515 = vunpack.c.0.s8 %v4514
  %v4516 = vlaneseq
  %v4517 = vshrl.u32 %v4516, 7
  %v4518 = vsub.s32 %v4515, %v4517
  %v4519 = vrot.slane %v4511, %v4518
  %v4521 = vunpack.c.l.s4 1966171168
  %v4522 = vunpack.c.0.s8 %v4521
  %v4523 = vlaneseq
  %v4524 = vshrl.u32 %v4523, 7
  %v4525 = vsub.s32 %v4522, %v4524
  %v4526 = vrot.slane %v4512, %v4525
  %v4527 = vcombine.low %v4519, %v4526
  %v4528 = vcombine.low %v2126, %v2130
  %v4529 = vcombine.low %v2134, %v2138
  %v4530 = vcombine.low %v2142, %v2146
  %v4531 = vcombine.low %v2150, %v2154
  %v4533 = vunpack.c.l.s4 1966171168
  %v4534 = vunpack.c.0.s8 %v4533
  %v4535 = vlaneseq
  %v4536 = vshrl.u32 %v4535, 7
  %v4537 = vsub.s32 %v4534, %v4536
  %v4538 = vrot.slane %v4528, %v4537
  %v4540 = vunpack.c.l.s4 1966171168
  %v4541 = vunpack.c.0.s8 %v4540
  %v4542 = vlaneseq
  %v4543 = vshrl.u32 %v4542, 7
  %v4544 = vsub.s32 %v4541, %v4543
  %v4545 = vrot.slane %v4529, %v4544
  %v4547 = vunpack.c.l.s4 1966171168
  %v4548 = vunpack.c.0.s8 %v4547
  %v4549 = vlaneseq
  %v4550 = vshrl.u32 %v4549, 7
  %v4551 = vsub.s32 %v4548, %v4550
  %v4552 = vrot.slane %v4530, %v4551
  %v4554 = vunpack.c.l.s4 1966171168
  %v4555 = vunpack.c.0.s8 %v4554
  %v4556 = vlaneseq
  %v4557 = vshrl.u32 %v4556, 7
  %v4558 = vsub.s32 %v4555, %v4557
  %v4559 = vrot.slane %v4531, %v4558
  %v4560 = vcombine.low %v4538, %v4545
  %v4561 = vcombine.low %v4552, %v4559
  %v4563 = vunpack.c.l.s4 1966171168
  %v4564 = vunpack.c.0.s8 %v4563
  %v4565 = vlaneseq
  %v4566 = vshrl.u32 %v4565, 7
  %v4567 = vsub.s32 %v4564, %v4566
  %v4568 = vrot.slane %v4560, %v4567
  %v4570 = vunpack.c.l.s4 1966171168
  %v4571 = vunpack.c.0.s8 %v4570
  %v4572 = vlaneseq
  %v4573 = vshrl.u32 %v4572, 7
  %v4574 = vsub.s32 %v4571, %v4573
  %v4575 = vrot.slane %v4561, %v4574
  %v4576 = vcombine.low %v4568, %v4575
  %v4577 = vcombine.low %v2158, %v2162
  %v4578 = vcombine.low %v2166, %v2170
  %v4579 = vcombine.low %v2174, %v2178
  %v4580 = vcombine.low %v2182, %v2186
  %v4582 = vunpack.c.l.s4 1966171168
  %v4583 = vunpack.c.0.s8 %v4582
  %v4584 = vlaneseq
  %v4585 = vshrl.u32 %v4584, 7
  %v4586 = vsub.s32 %v4583, %v4585
  %v4587 = vrot.slane %v4577, %v4586
  %v4589 = vunpack.c.l.s4 1966171168
  %v4590 = vunpack.c.0.s8 %v4589
  %v4591 = vlaneseq
  %v4592 = vshrl.u32 %v4591, 7
  %v4593 = vsub.s32 %v4590, %v4592
  %v4594 = vrot.slane %v4578, %v4593
  %v4596 = vunpack.c.l.s4 1966171168
  %v4597 = vunpack.c.0.s8 %v4596
  %v4598 = vlaneseq
  %v4599 = vshrl.u32 %v4598, 7
  %v4600 = vsub.s32 %v4597, %v4599
  %v4601 = vrot.slane %v4579, %v4600
  %v4603 = vunpack.c.l.s4 1966171168
  %v4604 = vunpack.c.0.s8 %v4603
  %v4605 = vlaneseq
  %v4606 = vshrl.u32 %v4605, 7
  %v4607 = vsub.s32 %v4604, %v4606
  %v4608 = vrot.slane %v4580, %v4607
  %v4609 = vcombine.low %v4587, %v4594
  %v4610 = vcombine.low %v4601, %v4608
  %v4612 = vunpack.c.l.s4 1966171168
  %v4613 = vunpack.c.0.s8 %v4612
  %v4614 = vlaneseq
  %v4615 = vshrl.u32 %v4614, 7
  %v4616 = vsub.s32 %v4613, %v4615
  %v4617 = vrot.slane %v4609, %v4616
  %v4619 = vunpack.c.l.s4 1966171168
  %v4620 = vunpack.c.0.s8 %v4619
  %v4621 = vlaneseq
  %v4622 = vshrl.u32 %v4621, 7
  %v4623 = vsub.s32 %v4620, %v4622
  %v4624 = vrot.slane %v4610, %v4623
  %v4625 = vcombine.low %v4617, %v4624
  %v4626 = vcombine.low %v2190, %v2194
  %v4627 = vcombine.low %v2198, %v2202
  %v4628 = vcombine.low %v2206, %v2210
  %v4629 = vcombine.low %v2214, %v2218
  %v4631 = vunpack.c.l.s4 1966171168
  %v4632 = vunpack.c.0.s8 %v4631
  %v4633 = vlaneseq
  %v4634 = vshrl.u32 %v4633, 7
  %v4635 = vsub.s32 %v4632, %v4634
  %v4636 = vrot.slane %v4626, %v4635
  %v4638 = vunpack.c.l.s4 1966171168
  %v4639 = vunpack.c.0.s8 %v4638
  %v4640 = vlaneseq
  %v4641 = vshrl.u32 %v4640, 7
  %v4642 = vsub.s32 %v4639, %v4641
  %v4643 = vrot.slane %v4627, %v4642
  %v4645 = vunpack.c.l.s4 1966171168
  %v4646 = vunpack.c.0.s8 %v4645
  %v4647 = vlaneseq
  %v4648 = vshrl.u32 %v4647, 7
  %v4649 = vsub.s32 %v4646, %v4648
  %v4650 = vrot.slane %v4628, %v4649
  %v4652 = vunpack.c.l.s4 1966171168
  %v4653 = vunpack.c.0.s8 %v4652
  %v4654 = vlaneseq
  %v4655 = vshrl.u32 %v4654, 7
  %v4656 = vsub.s32 %v4653, %v4655
  %v4657 = vrot.slane %v4629, %v4656
  %v4658 = vcombine.low %v4636, %v4643
  %v4659 = vcombine.low %v4650, %v4657
  %v4661 = vunpack.c.l.s4 1966171168
  %v4662 = vunpack.c.0.s8 %v4661
  %v4663 = vlaneseq
  %v4664 = vshrl.u32 %v4663, 7
  %v4665 = vsub.s32 %v4662, %v4664
  %v4666 = vrot.slane %v4658, %v4665
  %v4668 = vunpack.c.l.s4 1966171168
  %v4669 = vunpack.c.0.s8 %v4668
  %v4670 = vlaneseq
  %v4671 = vshrl.u32 %v4670, 7
  %v4672 = vsub.s32 %v4669, %v4671
  %v4673 = vrot.slane %v4659, %v4672
  %v4674 = vcombine.low %v4666, %v4673
  %v4675 = vcombine.low %v2222, %v2226
  %v4676 = vcombine.low %v2230, %v2234
  %v4677 = vcombine.low %v2238, %v2242
  %v4678 = vcombine.low %v2246, %v2250
  %v4680 = vunpack.c.l.s4 1966171168
  %v4681 = vunpack.c.0.s8 %v4680
  %v4682 = vlaneseq
  %v4683 = vshrl.u32 %v4682, 7
  %v4684 = vsub.s32 %v4681, %v4683
  %v4685 = vrot.slane %v4675, %v4684
  %v4687 = vunpack.c.l.s4 1966171168
  %v4688 = vunpack.c.0.s8 %v4687
  %v4689 = vlaneseq
  %v4690 = vshrl.u32 %v4689, 7
  %v4691 = vsub.s32 %v4688, %v4690
  %v4692 = vrot.slane %v4676, %v4691
  %v4694 = vunpack.c.l.s4 1966171168
  %v4695 = vunpack.c.0.s8 %v4694
  %v4696 = vlaneseq
  %v4697 = vshrl.u32 %v4696, 7
  %v4698 = vsub.s32 %v4695, %v4697
  %v4699 = vrot.slane %v4677, %v4698
  %v4701 = vunpack.c.l.s4 1966171168
  %v4702 = vunpack.c.0.s8 %v4701
  %v4703 = vlaneseq
  %v4704 = vshrl.u32 %v4703, 7
  %v4705 = vsub.s32 %v4702, %v4704
  %v4706 = vrot.slane %v4678, %v4705
  %v4707 = vcombine.low %v4685, %v4692
  %v4708 = vcombine.low %v4699, %v4706
  %v4710 = vunpack.c.l.s4 1966171168
  %v4711 = vunpack.c.0.s8 %v4710
  %v4712 = vlaneseq
  %v4713 = vshrl.u32 %v4712, 7
  %v4714 = vsub.s32 %v4711, %v4713
  %v4715 = vrot.slane %v4707, %v4714
  %v4717 = vunpack.c.l.s4 1966171168
  %v4718 = vunpack.c.0.s8 %v4717
  %v4719 = vlaneseq
  %v4720 = vshrl.u32 %v4719, 7
  %v4721 = vsub.s32 %v4718, %v4720
  %v4722 = vrot.slane %v4708, %v4721
  %v4723 = vcombine.low %v4715, %v4722
  %v4724 = vcombine.low %v2254, %v2258
  %v4725 = vcombine.low %v2262, %v2266
  %v4726 = vcombine.low %v2270, %v2274
  %v4727 = vcombine.low %v2278, %v2282
  %v4729 = vunpack.c.l.s4 1966171168
  %v4730 = vunpack.c.0.s8 %v4729
  %v4731 = vlaneseq
  %v4732 = vshrl.u32 %v4731, 7
  %v4733 = vsub.s32 %v4730, %v4732
  %v4734 = vrot.slane %v4724, %v4733
  %v4736 = vunpack.c.l.s4 1966171168
  %v4737 = vunpack.c.0.s8 %v4736
  %v4738 = vlaneseq
  %v4739 = vshrl.u32 %v4738, 7
  %v4740 = vsub.s32 %v4737, %v4739
  %v4741 = vrot.slane %v4725, %v4740
  %v4743 = vunpack.c.l.s4 1966171168
  %v4744 = vunpack.c.0.s8 %v4743
  %v4745 = vlaneseq
  %v4746 = vshrl.u32 %v4745, 7
  %v4747 = vsub.s32 %v4744, %v4746
  %v4748 = vrot.slane %v4726, %v4747
  %v4750 = vunpack.c.l.s4 1966171168
  %v4751 = vunpack.c.0.s8 %v4750
  %v4752 = vlaneseq
  %v4753 = vshrl.u32 %v4752, 7
  %v4754 = vsub.s32 %v4751, %v4753
  %v4755 = vrot.slane %v4727, %v4754
  %v4756 = vcombine.low %v4734, %v4741
  %v4757 = vcombine.low %v4748, %v4755
  %v4759 = vunpack.c.l.s4 1966171168
  %v4760 = vunpack.c.0.s8 %v4759
  %v4761 = vlaneseq
  %v4762 = vshrl.u32 %v4761, 7
  %v4763 = vsub.s32 %v4760, %v4762
  %v4764 = vrot.slane %v4756, %v4763
  %v4766 = vunpack.c.l.s4 1966171168
  %v4767 = vunpack.c.0.s8 %v4766
  %v4768 = vlaneseq
  %v4769 = vshrl.u32 %v4768, 7
  %v4770 = vsub.s32 %v4767, %v4769
  %v4771 = vrot.slane %v4757, %v4770
  %v4772 = vcombine.low %v4764, %v4771
  %v4773 = vcombine.low %v2286, %v2290
  %v4774 = vcombine.low %v2294, %v2298
  %v4775 = vcombine.low %v2302, %v2306
  %v4776 = vcombine.low %v2310, %v2314
  %v4778 = vunpack.c.l.s4 1966171168
  %v4779 = vunpack.c.0.s8 %v4778
  %v4780 = vlaneseq
  %v4781 = vshrl.u32 %v4780, 7
  %v4782 = vsub.s32 %v4779, %v4781
  %v4783 = vrot.slane %v4773, %v4782
  %v4785 = vunpack.c.l.s4 1966171168
  %v4786 = vunpack.c.0.s8 %v4785
  %v4787 = vlaneseq
  %v4788 = vshrl.u32 %v4787, 7
  %v4789 = vsub.s32 %v4786, %v4788
  %v4790 = vrot.slane %v4774, %v4789
  %v4792 = vunpack.c.l.s4 1966171168
  %v4793 = vunpack.c.0.s8 %v4792
  %v4794 = vlaneseq
  %v4795 = vshrl.u32 %v4794, 7
  %v4796 = vsub.s32 %v4793, %v4795
  %v4797 = vrot.slane %v4775, %v4796
  %v4799 = vunpack.c.l.s4 1966171168
  %v4800 = vunpack.c.0.s8 %v4799
  %v4801 = vlaneseq
  %v4802 = vshrl.u32 %v4801, 7
  %v4803 = vsub.s32 %v4800, %v4802
  %v4804 = vrot.slane %v4776, %v4803
  %v4805 = vcombine.low %v4783, %v4790
  %v4806 = vcombine.low %v4797, %v4804
  %v4808 = vunpack.c.l.s4 1966171168
  %v4809 = vunpack.c.0.s8 %v4808
  %v4810 = vlaneseq
  %v4811 = vshrl.u32 %v4810, 7
  %v4812 = vsub.s32 %v4809, %v4811
  %v4813 = vrot.slane %v4805, %v4812
  %v4815 = vunpack.c.l.s4 1966171168
  %v4816 = vunpack.c.0.s8 %v4815
  %v4817 = vlaneseq
  %v4818 = vshrl.u32 %v4817, 7
  %v4819 = vsub.s32 %v4816, %v4818
  %v4820 = vrot.slane %v4806, %v4819
  %v4821 = vcombine.low %v4813, %v4820
  %v4822 = vcombine.low %v2318, %v2322
  %v4823 = vcombine.low %v2326, %v2330
  %v4824 = vcombine.low %v2334, %v2338
  %v4825 = vcombine.low %v2342, %v2346
  %v4827 = vunpack.c.l.s4 1966171168
  %v4828 = vunpack.c.0.s8 %v4827
  %v4829 = vlaneseq
  %v4830 = vshrl.u32 %v4829, 7
  %v4831 = vsub.s32 %v4828, %v4830
  %v4832 = vrot.slane %v4822, %v4831
  %v4834 = vunpack.c.l.s4 1966171168
  %v4835 = vunpack.c.0.s8 %v4834
  %v4836 = vlaneseq
  %v4837 = vshrl.u32 %v4836, 7
  %v4838 = vsub.s32 %v4835, %v4837
  %v4839 = vrot.slane %v4823, %v4838
  %v4841 = vunpack.c.l.s4 1966171168
  %v4842 = vunpack.c.0.s8 %v4841
  %v4843 = vlaneseq
  %v4844 = vshrl.u32 %v4843, 7
  %v4845 = vsub.s32 %v4842, %v4844
  %v4846 = vrot.slane %v4824, %v4845
  %v4848 = vunpack.c.l.s4 1966171168
  %v4849 = vunpack.c.0.s8 %v4848
  %v4850 = vlaneseq
  %v4851 = vshrl.u32 %v4850, 7
  %v4852 = vsub.s32 %v4849, %v4851
  %v4853 = vrot.slane %v4825, %v4852
  %v4854 = vcombine.low %v4832, %v4839
  %v4855 = vcombine.low %v4846, %v4853
  %v4857 = vunpack.c.l.s4 1966171168
  %v4858 = vunpack.c.0.s8 %v4857
  %v4859 = vlaneseq
  %v4860 = vshrl.u32 %v4859, 7
  %v4861 = vsub.s32 %v4858, %v4860
  %v4862 = vrot.slane %v4854, %v4861
  %v4864 = vunpack.c.l.s4 1966171168
  %v4865 = vunpack.c.0.s8 %v4864
  %v4866 = vlaneseq
  %v4867 = vshrl.u32 %v4866, 7
  %v4868 = vsub.s32 %v4865, %v4867
  %v4869 = vrot.slane %v4855, %v4868
  %v4870 = vcombine.low %v4862, %v4869
  %v4871 = vcombine.low %v2350, %v2354
  %v4872 = vcombine.low %v2358, %v2362
  %v4873 = vcombine.low %v2366, %v2370
  %v4874 = vcombine.low %v2374, %v2378
  %v4876 = vunpack.c.l.s4 1966171168
  %v4877 = vunpack.c.0.s8 %v4876
  %v4878 = vlaneseq
  %v4879 = vshrl.u32 %v4878, 7
  %v4880 = vsub.s32 %v4877, %v4879
  %v4881 = vrot.slane %v4871, %v4880
  %v4883 = vunpack.c.l.s4 1966171168
  %v4884 = vunpack.c.0.s8 %v4883
  %v4885 = vlaneseq
  %v4886 = vshrl.u32 %v4885, 7
  %v4887 = vsub.s32 %v4884, %v4886
  %v4888 = vrot.slane %v4872, %v4887
  %v4890 = vunpack.c.l.s4 1966171168
  %v4891 = vunpack.c.0.s8 %v4890
  %v4892 = vlaneseq
  %v4893 = vshrl.u32 %v4892, 7
  %v4894 = vsub.s32 %v4891, %v4893
  %v4895 = vrot.slane %v4873, %v4894
  %v4897 = vunpack.c.l.s4 1966171168
  %v4898 = vunpack.c.0.s8 %v4897
  %v4899 = vlaneseq
  %v4900 = vshrl.u32 %v4899, 7
  %v4901 = vsub.s32 %v4898, %v4900
  %v4902 = vrot.slane %v4874, %v4901
  %v4903 = vcombine.low %v4881, %v4888
  %v4904 = vcombine.low %v4895, %v4902
  %v4906 = vunpack.c.l.s4 1966171168
  %v4907 = vunpack.c.0.s8 %v4906
  %v4908 = vlaneseq
  %v4909 = vshrl.u32 %v4908, 7
  %v4910 = vsub.s32 %v4907, %v4909
  %v4911 = vrot.slane %v4903, %v4910
  %v4913 = vunpack.c.l.s4 1966171168
  %v4914 = vunpack.c.0.s8 %v4913
  %v4915 = vlaneseq
  %v4916 = vshrl.u32 %v4915, 7
  %v4917 = vsub.s32 %v4914, %v4916
  %v4918 = vrot.slane %v4904, %v4917
  %v4919 = vcombine.low %v4911, %v4918
  %v4920 = vcombine.low %v2382, %v2386
  %v4921 = vcombine.low %v2390, %v2394
  %v4922 = vcombine.low %v2398, %v2402
  %v4923 = vcombine.low %v2406, %v2410
  %v4925 = vunpack.c.l.s4 1966171168
  %v4926 = vunpack.c.0.s8 %v4925
  %v4927 = vlaneseq
  %v4928 = vshrl.u32 %v4927, 7
  %v4929 = vsub.s32 %v4926, %v4928
  %v4930 = vrot.slane %v4920, %v4929
  %v4932 = vunpack.c.l.s4 1966171168
  %v4933 = vunpack.c.0.s8 %v4932
  %v4934 = vlaneseq
  %v4935 = vshrl.u32 %v4934, 7
  %v4936 = vsub.s32 %v4933, %v4935
  %v4937 = vrot.slane %v4921, %v4936
  %v4939 = vunpack.c.l.s4 1966171168
  %v4940 = vunpack.c.0.s8 %v4939
  %v4941 = vlaneseq
  %v4942 = vshrl.u32 %v4941, 7
  %v4943 = vsub.s32 %v4940, %v4942
  %v4944 = vrot.slane %v4922, %v4943
  %v4946 = vunpack.c.l.s4 1966171168
  %v4947 = vunpack.c.0.s8 %v4946
  %v4948 = vlaneseq
  %v4949 = vshrl.u32 %v4948, 7
  %v4950 = vsub.s32 %v4947, %v4949
  %v4951 = vrot.slane %v4923, %v4950
  %v4952 = vcombine.low %v4930, %v4937
  %v4953 = vcombine.low %v4944, %v4951
  %v4955 = vunpack.c.l.s4 1966171168
  %v4956 = vunpack.c.0.s8 %v4955
  %v4957 = vlaneseq
  %v4958 = vshrl.u32 %v4957, 7
  %v4959 = vsub.s32 %v4956, %v4958
  %v4960 = vrot.slane %v4952, %v4959
  %v4962 = vunpack.c.l.s4 1966171168
  %v4963 = vunpack.c.0.s8 %v4962
  %v4964 = vlaneseq
  %v4965 = vshrl.u32 %v4964, 7
  %v4966 = vsub.s32 %v4963, %v4965
  %v4967 = vrot.slane %v4953, %v4966
  %v4968 = vcombine.low %v4960, %v4967
  %v4969 = vcombine.low %v2414, %v2418
  %v4970 = vcombine.low %v2422, %v2426
  %v4971 = vcombine.low %v2430, %v2434
  %v4972 = vcombine.low %v2438, %v2442
  %v4974 = vunpack.c.l.s4 1966171168
  %v4975 = vunpack.c.0.s8 %v4974
  %v4976 = vlaneseq
  %v4977 = vshrl.u32 %v4976, 7
  %v4978 = vsub.s32 %v4975, %v4977
  %v4979 = vrot.slane %v4969, %v4978
  %v4981 = vunpack.c.l.s4 1966171168
  %v4982 = vunpack.c.0.s8 %v4981
  %v4983 = vlaneseq
  %v4984 = vshrl.u32 %v4983, 7
  %v4985 = vsub.s32 %v4982, %v4984
  %v4986 = vrot.slane %v4970, %v4985
  %v4988 = vunpack.c.l.s4 1966171168
  %v4989 = vunpack.c.0.s8 %v4988
  %v4990 = vlaneseq
  %v4991 = vshrl.u32 %v4990, 7
  %v4992 = vsub.s32 %v4989, %v4991
  %v4993 = vrot.slane %v4971, %v4992
  %v4995 = vunpack.c.l.s4 1966171168
  %v4996 = vunpack.c.0.s8 %v4995
  %v4997 = vlaneseq
  %v4998 = vshrl.u32 %v4997, 7
  %v4999 = vsub.s32 %v4996, %v4998
  %v5000 = vrot.slane %v4972, %v4999
  %v5001 = vcombine.low %v4979, %v4986
  %v5002 = vcombine.low %v4993, %v5000
  %v5004 = vunpack.c.l.s4 1966171168
  %v5005 = vunpack.c.0.s8 %v5004
  %v5006 = vlaneseq
  %v5007 = vshrl.u32 %v5006, 7
  %v5008 = vsub.s32 %v5005, %v5007
  %v5009 = vrot.slane %v5001, %v5008
  %v5011 = vunpack.c.l.s4 1966171168
  %v5012 = vunpack.c.0.s8 %v5011
  %v5013 = vlaneseq
  %v5014 = vshrl.u32 %v5013, 7
  %v5015 = vsub.s32 %v5012, %v5014
  %v5016 = vrot.slane %v5002, %v5015
  %v5017 = vcombine.low %v5009, %v5016
  %v5018 = vcombine.low %v2446, %v2450
  %v5019 = vcombine.low %v2454, %v2458
  %v5020 = vcombine.low %v2462, %v2466
  %v5021 = vcombine.low %v2470, %v2474
  %v5023 = vunpack.c.l.s4 1966171168
  %v5024 = vunpack.c.0.s8 %v5023
  %v5025 = vlaneseq
  %v5026 = vshrl.u32 %v5025, 7
  %v5027 = vsub.s32 %v5024, %v5026
  %v5028 = vrot.slane %v5018, %v5027
  %v5030 = vunpack.c.l.s4 1966171168
  %v5031 = vunpack.c.0.s8 %v5030
  %v5032 = vlaneseq
  %v5033 = vshrl.u32 %v5032, 7
  %v5034 = vsub.s32 %v5031, %v5033
  %v5035 = vrot.slane %v5019, %v5034
  %v5037 = vunpack.c.l.s4 1966171168
  %v5038 = vunpack.c.0.s8 %v5037
  %v5039 = vlaneseq
  %v5040 = vshrl.u32 %v5039, 7
  %v5041 = vsub.s32 %v5038, %v5040
  %v5042 = vrot.slane %v5020, %v5041
  %v5044 = vunpack.c.l.s4 1966171168
  %v5045 = vunpack.c.0.s8 %v5044
  %v5046 = vlaneseq
  %v5047 = vshrl.u32 %v5046, 7
  %v5048 = vsub.s32 %v5045, %v5047
  %v5049 = vrot.slane %v5021, %v5048
  %v5050 = vcombine.low %v5028, %v5035
  %v5051 = vcombine.low %v5042, %v5049
  %v5053 = vunpack.c.l.s4 1966171168
  %v5054 = vunpack.c.0.s8 %v5053
  %v5055 = vlaneseq
  %v5056 = vshrl.u32 %v5055, 7
  %v5057 = vsub.s32 %v5054, %v5056
  %v5058 = vrot.slane %v5050, %v5057
  %v5060 = vunpack.c.l.s4 1966171168
  %v5061 = vunpack.c.0.s8 %v5060
  %v5062 = vlaneseq
  %v5063 = vshrl.u32 %v5062, 7
  %v5064 = vsub.s32 %v5061, %v5063
  %v5065 = vrot.slane %v5051, %v5064
  %v5066 = vcombine.low %v5058, %v5065
  %v5067 = vcombine.low %v2478, %v2482
  %v5068 = vcombine.low %v2486, %v2490
  %v5069 = vcombine.low %v2494, %v2498
  %v5070 = vcombine.low %v2502, %v2506
  %v5072 = vunpack.c.l.s4 1966171168
  %v5073 = vunpack.c.0.s8 %v5072
  %v5074 = vlaneseq
  %v5075 = vshrl.u32 %v5074, 7
  %v5076 = vsub.s32 %v5073, %v5075
  %v5077 = vrot.slane %v5067, %v5076
  %v5079 = vunpack.c.l.s4 1966171168
  %v5080 = vunpack.c.0.s8 %v5079
  %v5081 = vlaneseq
  %v5082 = vshrl.u32 %v5081, 7
  %v5083 = vsub.s32 %v5080, %v5082
  %v5084 = vrot.slane %v5068, %v5083
  %v5086 = vunpack.c.l.s4 1966171168
  %v5087 = vunpack.c.0.s8 %v5086
  %v5088 = vlaneseq
  %v5089 = vshrl.u32 %v5088, 7
  %v5090 = vsub.s32 %v5087, %v5089
  %v5091 = vrot.slane %v5069, %v5090
  %v5093 = vunpack.c.l.s4 1966171168
  %v5094 = vunpack.c.0.s8 %v5093
  %v5095 = vlaneseq
  %v5096 = vshrl.u32 %v5095, 7
  %v5097 = vsub.s32 %v5094, %v5096
  %v5098 = vrot.slane %v5070, %v5097
  %v5099 = vcombine.low %v5077, %v5084
  %v5100 = vcombine.low %v5091, %v5098
  %v5102 = vunpack.c.l.s4 1966171168
  %v5103 = vunpack.c.0.s8 %v5102
  %v5104 = vlaneseq
  %v5105 = vshrl.u32 %v5104, 7
  %v5106 = vsub.s32 %v5103, %v5105
  %v5107 = vrot.slane %v5099, %v5106
  %v5109 = vunpack.c.l.s4 1966171168
  %v5110 = vunpack.c.0.s8 %v5109
  %v5111 = vlaneseq
  %v5112 = vshrl.u32 %v5111, 7
  %v5113 = vsub.s32 %v5110, %v5112
  %v5114 = vrot.slane %v5100, %v5113
  %v5115 = vcombine.low %v5107, %v5114
  %v5116 = vcombine.low %v2510, %v2514
  %v5117 = vcombine.low %v2518, %v2522
  %v5118 = vcombine.low %v2526, %v2530
  %v5119 = vcombine.low %v2534, %v2538
  %v5121 = vunpack.c.l.s4 1966171168
  %v5122 = vunpack.c.0.s8 %v5121
  %v5123 = vlaneseq
  %v5124 = vshrl.u32 %v5123, 7
  %v5125 = vsub.s32 %v5122, %v5124
  %v5126 = vrot.slane %v5116, %v5125
  %v5128 = vunpack.c.l.s4 1966171168
  %v5129 = vunpack.c.0.s8 %v5128
  %v5130 = vlaneseq
  %v5131 = vshrl.u32 %v5130, 7
  %v5132 = vsub.s32 %v5129, %v5131
  %v5133 = vrot.slane %v5117, %v5132
  %v5135 = vunpack.c.l.s4 1966171168
  %v5136 = vunpack.c.0.s8 %v5135
  %v5137 = vlaneseq
  %v5138 = vshrl.u32 %v5137, 7
  %v5139 = vsub.s32 %v5136, %v5138
  %v5140 = vrot.slane %v5118, %v5139
  %v5142 = vunpack.c.l.s4 1966171168
  %v5143 = vunpack.c.0.s8 %v5142
  %v5144 = vlaneseq
  %v5145 = vshrl.u32 %v5144, 7
  %v5146 = vsub.s32 %v5143, %v5145
  %v5147 = vrot.slane %v5119, %v5146
  %v5148 = vcombine.low %v5126, %v5133
  %v5149 = vcombine.low %v5140, %v5147
  %v5151 = vunpack.c.l.s4 1966171168
  %v5152 = vunpack.c.0.s8 %v5151
  %v5153 = vlaneseq
  %v5154 = vshrl.u32 %v5153, 7
  %v5155 = vsub.s32 %v5152, %v5154
  %v5156 = vrot.slane %v5148, %v5155
  %v5158 = vunpack.c.l.s4 1966171168
  %v5159 = vunpack.c.0.s8 %v5158
  %v5160 = vlaneseq
  %v5161 = vshrl.u32 %v5160, 7
  %v5162 = vsub.s32 %v5159, %v5161
  %v5163 = vrot.slane %v5149, %v5162
  %v5164 = vcombine.low %v5156, %v5163
  %v5165 = vcombine.low %v2542, %v2546
  %v5166 = vcombine.low %v2550, %v2554
  %v5167 = vcombine.low %v2558, %v2562
  %v5168 = vcombine.low %v2566, %v2570
  %v5170 = vunpack.c.l.s4 1966171168
  %v5171 = vunpack.c.0.s8 %v5170
  %v5172 = vlaneseq
  %v5173 = vshrl.u32 %v5172, 7
  %v5174 = vsub.s32 %v5171, %v5173
  %v5175 = vrot.slane %v5165, %v5174
  %v5177 = vunpack.c.l.s4 1966171168
  %v5178 = vunpack.c.0.s8 %v5177
  %v5179 = vlaneseq
  %v5180 = vshrl.u32 %v5179, 7
  %v5181 = vsub.s32 %v5178, %v5180
  %v5182 = vrot.slane %v5166, %v5181
  %v5184 = vunpack.c.l.s4 1966171168
  %v5185 = vunpack.c.0.s8 %v5184
  %v5186 = vlaneseq
  %v5187 = vshrl.u32 %v5186, 7
  %v5188 = vsub.s32 %v5185, %v5187
  %v5189 = vrot.slane %v5167, %v5188
  %v5191 = vunpack.c.l.s4 1966171168
  %v5192 = vunpack.c.0.s8 %v5191
  %v5193 = vlaneseq
  %v5194 = vshrl.u32 %v5193, 7
  %v5195 = vsub.s32 %v5192, %v5194
  %v5196 = vrot.slane %v5168, %v5195
  %v5197 = vcombine.low %v5175, %v5182
  %v5198 = vcombine.low %v5189, %v5196
  %v5200 = vunpack.c.l.s4 1966171168
  %v5201 = vunpack.c.0.s8 %v5200
  %v5202 = vlaneseq
  %v5203 = vshrl.u32 %v5202, 7
  %v5204 = vsub.s32 %v5201, %v5203
  %v5205 = vrot.slane %v5197, %v5204
  %v5207 = vunpack.c.l.s4 1966171168
  %v5208 = vunpack.c.0.s8 %v5207
  %v5209 = vlaneseq
  %v5210 = vshrl.u32 %v5209, 7
  %v5211 = vsub.s32 %v5208, %v5210
  %v5212 = vrot.slane %v5198, %v5211
  %v5213 = vcombine.low %v5205, %v5212
  %v5214 = vcombine.low %v2574, %v2578
  %v5215 = vcombine.low %v2582, %v2586
  %v5216 = vcombine.low %v2590, %v2594
  %v5217 = vcombine.low %v2598, %v2602
  %v5219 = vunpack.c.l.s4 1966171168
  %v5220 = vunpack.c.0.s8 %v5219
  %v5221 = vlaneseq
  %v5222 = vshrl.u32 %v5221, 7
  %v5223 = vsub.s32 %v5220, %v5222
  %v5224 = vrot.slane %v5214, %v5223
  %v5226 = vunpack.c.l.s4 1966171168
  %v5227 = vunpack.c.0.s8 %v5226
  %v5228 = vlaneseq
  %v5229 = vshrl.u32 %v5228, 7
  %v5230 = vsub.s32 %v5227, %v5229
  %v5231 = vrot.slane %v5215, %v5230
  %v5233 = vunpack.c.l.s4 1966171168
  %v5234 = vunpack.c.0.s8 %v5233
  %v5235 = vlaneseq
  %v5236 = vshrl.u32 %v5235, 7
  %v5237 = vsub.s32 %v5234, %v5236
  %v5238 = vrot.slane %v5216, %v5237
  %v5240 = vunpack.c.l.s4 1966171168
  %v5241 = vunpack.c.0.s8 %v5240
  %v5242 = vlaneseq
  %v5243 = vshrl.u32 %v5242, 7
  %v5244 = vsub.s32 %v5241, %v5243
  %v5245 = vrot.slane %v5217, %v5244
  %v5246 = vcombine.low %v5224, %v5231
  %v5247 = vcombine.low %v5238, %v5245
  %v5249 = vunpack.c.l.s4 1966171168
  %v5250 = vunpack.c.0.s8 %v5249
  %v5251 = vlaneseq
  %v5252 = vshrl.u32 %v5251, 7
  %v5253 = vsub.s32 %v5250, %v5252
  %v5254 = vrot.slane %v5246, %v5253
  %v5256 = vunpack.c.l.s4 1966171168
  %v5257 = vunpack.c.0.s8 %v5256
  %v5258 = vlaneseq
  %v5259 = vshrl.u32 %v5258, 7
  %v5260 = vsub.s32 %v5257, %v5259
  %v5261 = vrot.slane %v5247, %v5260
  %v5262 = vcombine.low %v5254, %v5261
  %v5263 = vcombine.low %v2606, %v2610
  %v5264 = vcombine.low %v2614, %v2618
  %v5265 = vcombine.low %v2622, %v2626
  %v5266 = vcombine.low %v2630, %v2634
  %v5268 = vunpack.c.l.s4 1966171168
  %v5269 = vunpack.c.0.s8 %v5268
  %v5270 = vlaneseq
  %v5271 = vshrl.u32 %v5270, 7
  %v5272 = vsub.s32 %v5269, %v5271
  %v5273 = vrot.slane %v5263, %v5272
  %v5275 = vunpack.c.l.s4 1966171168
  %v5276 = vunpack.c.0.s8 %v5275
  %v5277 = vlaneseq
  %v5278 = vshrl.u32 %v5277, 7
  %v5279 = vsub.s32 %v5276, %v5278
  %v5280 = vrot.slane %v5264, %v5279
  %v5282 = vunpack.c.l.s4 1966171168
  %v5283 = vunpack.c.0.s8 %v5282
  %v5284 = vlaneseq
  %v5285 = vshrl.u32 %v5284, 7
  %v5286 = vsub.s32 %v5283, %v5285
  %v5287 = vrot.slane %v5265, %v5286
  %v5289 = vunpack.c.l.s4 1966171168
  %v5290 = vunpack.c.0.s8 %v5289
  %v5291 = vlaneseq
  %v5292 = vshrl.u32 %v5291, 7
  %v5293 = vsub.s32 %v5290, %v5292
  %v5294 = vrot.slane %v5266, %v5293
  %v5295 = vcombine.low %v5273, %v5280
  %v5296 = vcombine.low %v5287, %v5294
  %v5298 = vunpack.c.l.s4 1966171168
  %v5299 = vunpack.c.0.s8 %v5298
  %v5300 = vlaneseq
  %v5301 = vshrl.u32 %v5300, 7
  %v5302 = vsub.s32 %v5299, %v5301
  %v5303 = vrot.slane %v5295, %v5302
  %v5305 = vunpack.c.l.s4 1966171168
  %v5306 = vunpack.c.0.s8 %v5305
  %v5307 = vlaneseq
  %v5308 = vshrl.u32 %v5307, 7
  %v5309 = vsub.s32 %v5306, %v5308
  %v5310 = vrot.slane %v5296, %v5309
  %v5311 = vcombine.low %v5303, %v5310
  %v5312 = vcombine.low %v2638, %v2642
  %v5313 = vcombine.low %v2646, %v2650
  %v5314 = vcombine.low %v2654, %v2658
  %v5315 = vcombine.low %v2662, %v2666
  %v5317 = vunpack.c.l.s4 1966171168
  %v5318 = vunpack.c.0.s8 %v5317
  %v5319 = vlaneseq
  %v5320 = vshrl.u32 %v5319, 7
  %v5321 = vsub.s32 %v5318, %v5320
  %v5322 = vrot.slane %v5312, %v5321
  %v5324 = vunpack.c.l.s4 1966171168
  %v5325 = vunpack.c.0.s8 %v5324
  %v5326 = vlaneseq
  %v5327 = vshrl.u32 %v5326, 7
  %v5328 = vsub.s32 %v5325, %v5327
  %v5329 = vrot.slane %v5313, %v5328
  %v5331 = vunpack.c.l.s4 1966171168
  %v5332 = vunpack.c.0.s8 %v5331
  %v5333 = vlaneseq
  %v5334 = vshrl.u32 %v5333, 7
  %v5335 = vsub.s32 %v5332, %v5334
  %v5336 = vrot.slane %v5314, %v5335
  %v5338 = vunpack.c.l.s4 1966171168
  %v5339 = vunpack.c.0.s8 %v5338
  %v5340 = vlaneseq
  %v5341 = vshrl.u32 %v5340, 7
  %v5342 = vsub.s32 %v5339, %v5341
  %v5343 = vrot.slane %v5315, %v5342
  %v5344 = vcombine.low %v5322, %v5329
  %v5345 = vcombine.low %v5336, %v5343
  %v5347 = vunpack.c.l.s4 1966171168
  %v5348 = vunpack.c.0.s8 %v5347
  %v5349 = vlaneseq
  %v5350 = vshrl.u32 %v5349, 7
  %v5351 = vsub.s32 %v5348, %v5350
  %v5352 = vrot.slane %v5344, %v5351
  %v5354 = vunpack.c.l.s4 1966171168
  %v5355 = vunpack.c.0.s8 %v5354
  %v5356 = vlaneseq
  %v5357 = vshrl.u32 %v5356, 7
  %v5358 = vsub.s32 %v5355, %v5357
  %v5359 = vrot.slane %v5345, %v5358
  %v5360 = vcombine.low %v5352, %v5359
  %v5361 = vcombine.low %v2670, %v2674
  %v5362 = vcombine.low %v2678, %v2682
  %v5363 = vcombine.low %v2686, %v2690
  %v5364 = vcombine.low %v2694, %v2698
  %v5366 = vunpack.c.l.s4 1966171168
  %v5367 = vunpack.c.0.s8 %v5366
  %v5368 = vlaneseq
  %v5369 = vshrl.u32 %v5368, 7
  %v5370 = vsub.s32 %v5367, %v5369
  %v5371 = vrot.slane %v5361, %v5370
  %v5373 = vunpack.c.l.s4 1966171168
  %v5374 = vunpack.c.0.s8 %v5373
  %v5375 = vlaneseq
  %v5376 = vshrl.u32 %v5375, 7
  %v5377 = vsub.s32 %v5374, %v5376
  %v5378 = vrot.slane %v5362, %v5377
  %v5380 = vunpack.c.l.s4 1966171168
  %v5381 = vunpack.c.0.s8 %v5380
  %v5382 = vlaneseq
  %v5383 = vshrl.u32 %v5382, 7
  %v5384 = vsub.s32 %v5381, %v5383
  %v5385 = vrot.slane %v5363, %v5384
  %v5387 = vunpack.c.l.s4 1966171168
  %v5388 = vunpack.c.0.s8 %v5387
  %v5389 = vlaneseq
  %v5390 = vshrl.u32 %v5389, 7
  %v5391 = vsub.s32 %v5388, %v5390
  %v5392 = vrot.slane %v5364, %v5391
  %v5393 = vcombine.low %v5371, %v5378
  %v5394 = vcombine.low %v5385, %v5392
  %v5396 = vunpack.c.l.s4 1966171168
  %v5397 = vunpack.c.0.s8 %v5396
  %v5398 = vlaneseq
  %v5399 = vshrl.u32 %v5398, 7
  %v5400 = vsub.s32 %v5397, %v5399
  %v5401 = vrot.slane %v5393, %v5400
  %v5403 = vunpack.c.l.s4 1966171168
  %v5404 = vunpack.c.0.s8 %v5403
  %v5405 = vlaneseq
  %v5406 = vshrl.u32 %v5405, 7
  %v5407 = vsub.s32 %v5404, %v5406
  %v5408 = vrot.slane %v5394, %v5407
  %v5409 = vcombine.low %v5401, %v5408
  %v5410 = vcombine.low %v2702, %v2706
  %v5411 = vcombine.low %v2710, %v2714
  %v5412 = vcombine.low %v2718, %v2722
  %v5413 = vcombine.low %v2726, %v2730
  %v5415 = vunpack.c.l.s4 1966171168
  %v5416 = vunpack.c.0.s8 %v5415
  %v5417 = vlaneseq
  %v5418 = vshrl.u32 %v5417, 7
  %v5419 = vsub.s32 %v5416, %v5418
  %v5420 = vrot.slane %v5410, %v5419
  %v5422 = vunpack.c.l.s4 1966171168
  %v5423 = vunpack.c.0.s8 %v5422
  %v5424 = vlaneseq
  %v5425 = vshrl.u32 %v5424, 7
  %v5426 = vsub.s32 %v5423, %v5425
  %v5427 = vrot.slane %v5411, %v5426
  %v5429 = vunpack.c.l.s4 1966171168
  %v5430 = vunpack.c.0.s8 %v5429
  %v5431 = vlaneseq
  %v5432 = vshrl.u32 %v5431, 7
  %v5433 = vsub.s32 %v5430, %v5432
  %v5434 = vrot.slane %v5412, %v5433
  %v5436 = vunpack.c.l.s4 1966171168
  %v5437 = vunpack.c.0.s8 %v5436
  %v5438 = vlaneseq
  %v5439 = vshrl.u32 %v5438, 7
  %v5440 = vsub.s32 %v5437, %v5439
  %v5441 = vrot.slane %v5413, %v5440
  %v5442 = vcombine.low %v5420, %v5427
  %v5443 = vcombine.low %v5434, %v5441
  %v5445 = vunpack.c.l.s4 1966171168
  %v5446 = vunpack.c.0.s8 %v5445
  %v5447 = vlaneseq
  %v5448 = vshrl.u32 %v5447, 7
  %v5449 = vsub.s32 %v5446, %v5448
  %v5450 = vrot.slane %v5442, %v5449
  %v5452 = vunpack.c.l.s4 1966171168
  %v5453 = vunpack.c.0.s8 %v5452
  %v5454 = vlaneseq
  %v5455 = vshrl.u32 %v5454, 7
  %v5456 = vsub.s32 %v5453, %v5455
  %v5457 = vrot.slane %v5443, %v5456
  %v5458 = vcombine.low %v5450, %v5457
  %v5459 = vcombine.low %v2734, %v2738
  %v5460 = vcombine.low %v2742, %v2746
  %v5461 = vcombine.low %v2750, %v2754
  %v5462 = vcombine.low %v2758, %v2762
  %v5464 = vunpack.c.l.s4 1966171168
  %v5465 = vunpack.c.0.s8 %v5464
  %v5466 = vlaneseq
  %v5467 = vshrl.u32 %v5466, 7
  %v5468 = vsub.s32 %v5465, %v5467
  %v5469 = vrot.slane %v5459, %v5468
  %v5471 = vunpack.c.l.s4 1966171168
  %v5472 = vunpack.c.0.s8 %v5471
  %v5473 = vlaneseq
  %v5474 = vshrl.u32 %v5473, 7
  %v5475 = vsub.s32 %v5472, %v5474
  %v5476 = vrot.slane %v5460, %v5475
  %v5478 = vunpack.c.l.s4 1966171168
  %v5479 = vunpack.c.0.s8 %v5478
  %v5480 = vlaneseq
  %v5481 = vshrl.u32 %v5480, 7
  %v5482 = vsub.s32 %v5479, %v5481
  %v5483 = vrot.slane %v5461, %v5482
  %v5485 = vunpack.c.l.s4 1966171168
  %v5486 = vunpack.c.0.s8 %v5485
  %v5487 = vlaneseq
  %v5488 = vshrl.u32 %v5487, 7
  %v5489 = vsub.s32 %v5486, %v5488
  %v5490 = vrot.slane %v5462, %v5489
  %v5491 = vcombine.low %v5469, %v5476
  %v5492 = vcombine.low %v5483, %v5490
  %v5494 = vunpack.c.l.s4 1966171168
  %v5495 = vunpack.c.0.s8 %v5494
  %v5496 = vlaneseq
  %v5497 = vshrl.u32 %v5496, 7
  %v5498 = vsub.s32 %v5495, %v5497
  %v5499 = vrot.slane %v5491, %v5498
  %v5501 = vunpack.c.l.s4 1966171168
  %v5502 = vunpack.c.0.s8 %v5501
  %v5503 = vlaneseq
  %v5504 = vshrl.u32 %v5503, 7
  %v5505 = vsub.s32 %v5502, %v5504
  %v5506 = vrot.slane %v5492, %v5505
  %v5507 = vcombine.low %v5499, %v5506
  %v5508 = vcombine.low %v2766, %v2770
  %v5509 = vcombine.low %v2774, %v2778
  %v5510 = vcombine.low %v2782, %v2786
  %v5511 = vcombine.low %v2790, %v2794
  %v5513 = vunpack.c.l.s4 1966171168
  %v5514 = vunpack.c.0.s8 %v5513
  %v5515 = vlaneseq
  %v5516 = vshrl.u32 %v5515, 7
  %v5517 = vsub.s32 %v5514, %v5516
  %v5518 = vrot.slane %v5508, %v5517
  %v5520 = vunpack.c.l.s4 1966171168
  %v5521 = vunpack.c.0.s8 %v5520
  %v5522 = vlaneseq
  %v5523 = vshrl.u32 %v5522, 7
  %v5524 = vsub.s32 %v5521, %v5523
  %v5525 = vrot.slane %v5509, %v5524
  %v5527 = vunpack.c.l.s4 1966171168
  %v5528 = vunpack.c.0.s8 %v5527
  %v5529 = vlaneseq
  %v5530 = vshrl.u32 %v5529, 7
  %v5531 = vsub.s32 %v5528, %v5530
  %v5532 = vrot.slane %v5510, %v5531
  %v5534 = vunpack.c.l.s4 1966171168
  %v5535 = vunpack.c.0.s8 %v5534
  %v5536 = vlaneseq
  %v5537 = vshrl.u32 %v5536, 7
  %v5538 = vsub.s32 %v5535, %v5537
  %v5539 = vrot.slane %v5511, %v5538
  %v5540 = vcombine.low %v5518, %v5525
  %v5541 = vcombine.low %v5532, %v5539
  %v5543 = vunpack.c.l.s4 1966171168
  %v5544 = vunpack.c.0.s8 %v5543
  %v5545 = vlaneseq
  %v5546 = vshrl.u32 %v5545, 7
  %v5547 = vsub.s32 %v5544, %v5546
  %v5548 = vrot.slane %v5540, %v5547
  %v5550 = vunpack.c.l.s4 1966171168
  %v5551 = vunpack.c.0.s8 %v5550
  %v5552 = vlaneseq
  %v5553 = vshrl.u32 %v5552, 7
  %v5554 = vsub.s32 %v5551, %v5553
  %v5555 = vrot.slane %v5541, %v5554
  %v5556 = vcombine.low %v5548, %v5555
  %v5557 = vcombine.low %v2798, %v2802
  %v5558 = vcombine.low %v2806, %v2810
  %v5559 = vcombine.low %v2814, %v2818
  %v5560 = vcombine.low %v2822, %v2826
  %v5562 = vunpack.c.l.s4 1966171168
  %v5563 = vunpack.c.0.s8 %v5562
  %v5564 = vlaneseq
  %v5565 = vshrl.u32 %v5564, 7
  %v5566 = vsub.s32 %v5563, %v5565
  %v5567 = vrot.slane %v5557, %v5566
  %v5569 = vunpack.c.l.s4 1966171168
  %v5570 = vunpack.c.0.s8 %v5569
  %v5571 = vlaneseq
  %v5572 = vshrl.u32 %v5571, 7
  %v5573 = vsub.s32 %v5570, %v5572
  %v5574 = vrot.slane %v5558, %v5573
  %v5576 = vunpack.c.l.s4 1966171168
  %v5577 = vunpack.c.0.s8 %v5576
  %v5578 = vlaneseq
  %v5579 = vshrl.u32 %v5578, 7
  %v5580 = vsub.s32 %v5577, %v5579
  %v5581 = vrot.slane %v5559, %v5580
  %v5583 = vunpack.c.l.s4 1966171168
  %v5584 = vunpack.c.0.s8 %v5583
  %v5585 = vlaneseq
  %v5586 = vshrl.u32 %v5585, 7
  %v5587 = vsub.s32 %v5584, %v5586
  %v5588 = vrot.slane %v5560, %v5587
  %v5589 = vcombine.low %v5567, %v5574
  %v5590 = vcombine.low %v5581, %v5588
  %v5592 = vunpack.c.l.s4 1966171168
  %v5593 = vunpack.c.0.s8 %v5592
  %v5594 = vlaneseq
  %v5595 = vshrl.u32 %v5594, 7
  %v5596 = vsub.s32 %v5593, %v5595
  %v5597 = vrot.slane %v5589, %v5596
  %v5599 = vunpack.c.l.s4 1966171168
  %v5600 = vunpack.c.0.s8 %v5599
  %v5601 = vlaneseq
  %v5602 = vshrl.u32 %v5601, 7
  %v5603 = vsub.s32 %v5600, %v5602
  %v5604 = vrot.slane %v5590, %v5603
  %v5605 = vcombine.low %v5597, %v5604
  %v5606 = vcombine.low %v2830, %v2834
  %v5607 = vcombine.low %v2838, %v2842
  %v5608 = vcombine.low %v2846, %v2850
  %v5609 = vcombine.low %v2854, %v2858
  %v5611 = vunpack.c.l.s4 1966171168
  %v5612 = vunpack.c.0.s8 %v5611
  %v5613 = vlaneseq
  %v5614 = vshrl.u32 %v5613, 7
  %v5615 = vsub.s32 %v5612, %v5614
  %v5616 = vrot.slane %v5606, %v5615
  %v5618 = vunpack.c.l.s4 1966171168
  %v5619 = vunpack.c.0.s8 %v5618
  %v5620 = vlaneseq
  %v5621 = vshrl.u32 %v5620, 7
  %v5622 = vsub.s32 %v5619, %v5621
  %v5623 = vrot.slane %v5607, %v5622
  %v5625 = vunpack.c.l.s4 1966171168
  %v5626 = vunpack.c.0.s8 %v5625
  %v5627 = vlaneseq
  %v5628 = vshrl.u32 %v5627, 7
  %v5629 = vsub.s32 %v5626, %v5628
  %v5630 = vrot.slane %v5608, %v5629
  %v5632 = vunpack.c.l.s4 1966171168
  %v5633 = vunpack.c.0.s8 %v5632
  %v5634 = vlaneseq
  %v5635 = vshrl.u32 %v5634, 7
  %v5636 = vsub.s32 %v5633, %v5635
  %v5637 = vrot.slane %v5609, %v5636
  %v5638 = vcombine.low %v5616, %v5623
  %v5639 = vcombine.low %v5630, %v5637
  %v5641 = vunpack.c.l.s4 1966171168
  %v5642 = vunpack.c.0.s8 %v5641
  %v5643 = vlaneseq
  %v5644 = vshrl.u32 %v5643, 7
  %v5645 = vsub.s32 %v5642, %v5644
  %v5646 = vrot.slane %v5638, %v5645
  %v5648 = vunpack.c.l.s4 1966171168
  %v5649 = vunpack.c.0.s8 %v5648
  %v5650 = vlaneseq
  %v5651 = vshrl.u32 %v5650, 7
  %v5652 = vsub.s32 %v5649, %v5651
  %v5653 = vrot.slane %v5639, %v5652
  %v5654 = vcombine.low %v5646, %v5653
  %v5655 = vcombine.low %v2862, %v2866
  %v5656 = vcombine.low %v2870, %v2874
  %v5657 = vcombine.low %v2878, %v2882
  %v5658 = vcombine.low %v2886, %v2890
  %v5660 = vunpack.c.l.s4 1966171168
  %v5661 = vunpack.c.0.s8 %v5660
  %v5662 = vlaneseq
  %v5663 = vshrl.u32 %v5662, 7
  %v5664 = vsub.s32 %v5661, %v5663
  %v5665 = vrot.slane %v5655, %v5664
  %v5667 = vunpack.c.l.s4 1966171168
  %v5668 = vunpack.c.0.s8 %v5667
  %v5669 = vlaneseq
  %v5670 = vshrl.u32 %v5669, 7
  %v5671 = vsub.s32 %v5668, %v5670
  %v5672 = vrot.slane %v5656, %v5671
  %v5674 = vunpack.c.l.s4 1966171168
  %v5675 = vunpack.c.0.s8 %v5674
  %v5676 = vlaneseq
  %v5677 = vshrl.u32 %v5676, 7
  %v5678 = vsub.s32 %v5675, %v5677
  %v5679 = vrot.slane %v5657, %v5678
  %v5681 = vunpack.c.l.s4 1966171168
  %v5682 = vunpack.c.0.s8 %v5681
  %v5683 = vlaneseq
  %v5684 = vshrl.u32 %v5683, 7
  %v5685 = vsub.s32 %v5682, %v5684
  %v5686 = vrot.slane %v5658, %v5685
  %v5687 = vcombine.low %v5665, %v5672
  %v5688 = vcombine.low %v5679, %v5686
  %v5690 = vunpack.c.l.s4 1966171168
  %v5691 = vunpack.c.0.s8 %v5690
  %v5692 = vlaneseq
  %v5693 = vshrl.u32 %v5692, 7
  %v5694 = vsub.s32 %v5691, %v5693
  %v5695 = vrot.slane %v5687, %v5694
  %v5697 = vunpack.c.l.s4 1966171168
  %v5698 = vunpack.c.0.s8 %v5697
  %v5699 = vlaneseq
  %v5700 = vshrl.u32 %v5699, 7
  %v5701 = vsub.s32 %v5698, %v5700
  %v5702 = vrot.slane %v5688, %v5701
  %v5703 = vcombine.low %v5695, %v5702
  %v5704 = vcombine.low %v2894, %v2898
  %v5705 = vcombine.low %v2902, %v2906
  %v5706 = vcombine.low %v2910, %v2914
  %v5707 = vcombine.low %v2918, %v2922
  %v5709 = vunpack.c.l.s4 1966171168
  %v5710 = vunpack.c.0.s8 %v5709
  %v5711 = vlaneseq
  %v5712 = vshrl.u32 %v5711, 7
  %v5713 = vsub.s32 %v5710, %v5712
  %v5714 = vrot.slane %v5704, %v5713
  %v5716 = vunpack.c.l.s4 1966171168
  %v5717 = vunpack.c.0.s8 %v5716
  %v5718 = vlaneseq
  %v5719 = vshrl.u32 %v5718, 7
  %v5720 = vsub.s32 %v5717, %v5719
  %v5721 = vrot.slane %v5705, %v5720
  %v5723 = vunpack.c.l.s4 1966171168
  %v5724 = vunpack.c.0.s8 %v5723
  %v5725 = vlaneseq
  %v5726 = vshrl.u32 %v5725, 7
  %v5727 = vsub.s32 %v5724, %v5726
  %v5728 = vrot.slane %v5706, %v5727
  %v5730 = vunpack.c.l.s4 1966171168
  %v5731 = vunpack.c.0.s8 %v5730
  %v5732 = vlaneseq
  %v5733 = vshrl.u32 %v5732, 7
  %v5734 = vsub.s32 %v5731, %v5733
  %v5735 = vrot.slane %v5707, %v5734
  %v5736 = vcombine.low %v5714, %v5721
  %v5737 = vcombine.low %v5728, %v5735
  %v5739 = vunpack.c.l.s4 1966171168
  %v5740 = vunpack.c.0.s8 %v5739
  %v5741 = vlaneseq
  %v5742 = vshrl.u32 %v5741, 7
  %v5743 = vsub.s32 %v5740, %v5742
  %v5744 = vrot.slane %v5736, %v5743
  %v5746 = vunpack.c.l.s4 1966171168
  %v5747 = vunpack.c.0.s8 %v5746
  %v5748 = vlaneseq
  %v5749 = vshrl.u32 %v5748, 7
  %v5750 = vsub.s32 %v5747, %v5749
  %v5751 = vrot.slane %v5737, %v5750
  %v5752 = vcombine.low %v5744, %v5751
  %v5753 = vcombine.low %v2926, %v2930
  %v5754 = vcombine.low %v2934, %v2938
  %v5755 = vcombine.low %v2942, %v2946
  %v5756 = vcombine.low %v2950, %v2954
  %v5758 = vunpack.c.l.s4 1966171168
  %v5759 = vunpack.c.0.s8 %v5758
  %v5760 = vlaneseq
  %v5761 = vshrl.u32 %v5760, 7
  %v5762 = vsub.s32 %v5759, %v5761
  %v5763 = vrot.slane %v5753, %v5762
  %v5765 = vunpack.c.l.s4 1966171168
  %v5766 = vunpack.c.0.s8 %v5765
  %v5767 = vlaneseq
  %v5768 = vshrl.u32 %v5767, 7
  %v5769 = vsub.s32 %v5766, %v5768
  %v5770 = vrot.slane %v5754, %v5769
  %v5772 = vunpack.c.l.s4 1966171168
  %v5773 = vunpack.c.0.s8 %v5772
  %v5774 = vlaneseq
  %v5775 = vshrl.u32 %v5774, 7
  %v5776 = vsub.s32 %v5773, %v5775
  %v5777 = vrot.slane %v5755, %v5776
  %v5779 = vunpack.c.l.s4 1966171168
  %v5780 = vunpack.c.0.s8 %v5779
  %v5781 = vlaneseq
  %v5782 = vshrl.u32 %v5781, 7
  %v5783 = vsub.s32 %v5780, %v5782
  %v5784 = vrot.slane %v5756, %v5783
  %v5785 = vcombine.low %v5763, %v5770
  %v5786 = vcombine.low %v5777, %v5784
  %v5788 = vunpack.c.l.s4 1966171168
  %v5789 = vunpack.c.0.s8 %v5788
  %v5790 = vlaneseq
  %v5791 = vshrl.u32 %v5790, 7
  %v5792 = vsub.s32 %v5789, %v5791
  %v5793 = vrot.slane %v5785, %v5792
  %v5795 = vunpack.c.l.s4 1966171168
  %v5796 = vunpack.c.0.s8 %v5795
  %v5797 = vlaneseq
  %v5798 = vshrl.u32 %v5797, 7
  %v5799 = vsub.s32 %v5796, %v5798
  %v5800 = vrot.slane %v5786, %v5799
  %v5801 = vcombine.low %v5793, %v5800
  %v5802 = vcombine.low %v2958, %v2962
  %v5803 = vcombine.low %v2966, %v2970
  %v5804 = vcombine.low %v2974, %v2978
  %v5805 = vcombine.low %v2982, %v2986
  %v5807 = vunpack.c.l.s4 1966171168
  %v5808 = vunpack.c.0.s8 %v5807
  %v5809 = vlaneseq
  %v5810 = vshrl.u32 %v5809, 7
  %v5811 = vsub.s32 %v5808, %v5810
  %v5812 = vrot.slane %v5802, %v5811
  %v5814 = vunpack.c.l.s4 1966171168
  %v5815 = vunpack.c.0.s8 %v5814
  %v5816 = vlaneseq
  %v5817 = vshrl.u32 %v5816, 7
  %v5818 = vsub.s32 %v5815, %v5817
  %v5819 = vrot.slane %v5803, %v5818
  %v5821 = vunpack.c.l.s4 1966171168
  %v5822 = vunpack.c.0.s8 %v5821
  %v5823 = vlaneseq
  %v5824 = vshrl.u32 %v5823, 7
  %v5825 = vsub.s32 %v5822, %v5824
  %v5826 = vrot.slane %v5804, %v5825
  %v5828 = vunpack.c.l.s4 1966171168
  %v5829 = vunpack.c.0.s8 %v5828
  %v5830 = vlaneseq
  %v5831 = vshrl.u32 %v5830, 7
  %v5832 = vsub.s32 %v5829, %v5831
  %v5833 = vrot.slane %v5805, %v5832
  %v5834 = vcombine.low %v5812, %v5819
  %v5835 = vcombine.low %v5826, %v5833
  %v5837 = vunpack.c.l.s4 1966171168
  %v5838 = vunpack.c.0.s8 %v5837
  %v5839 = vlaneseq
  %v5840 = vshrl.u32 %v5839, 7
  %v5841 = vsub.s32 %v5838, %v5840
  %v5842 = vrot.slane %v5834, %v5841
  %v5844 = vunpack.c.l.s4 1966171168
  %v5845 = vunpack.c.0.s8 %v5844
  %v5846 = vlaneseq
  %v5847 = vshrl.u32 %v5846, 7
  %v5848 = vsub.s32 %v5845, %v5847
  %v5849 = vrot.slane %v5835, %v5848
  %v5850 = vcombine.low %v5842, %v5849
  %v5851 = vcombine.low %v2990, %v2994
  %v5852 = vcombine.low %v2998, %v3002
  %v5853 = vcombine.low %v3006, %v3010
  %v5854 = vcombine.low %v3014, %v3018
  %v5856 = vunpack.c.l.s4 1966171168
  %v5857 = vunpack.c.0.s8 %v5856
  %v5858 = vlaneseq
  %v5859 = vshrl.u32 %v5858, 7
  %v5860 = vsub.s32 %v5857, %v5859
  %v5861 = vrot.slane %v5851, %v5860
  %v5863 = vunpack.c.l.s4 1966171168
  %v5864 = vunpack.c.0.s8 %v5863
  %v5865 = vlaneseq
  %v5866 = vshrl.u32 %v5865, 7
  %v5867 = vsub.s32 %v5864, %v5866
  %v5868 = vrot.slane %v5852, %v5867
  %v5870 = vunpack.c.l.s4 1966171168
  %v5871 = vunpack.c.0.s8 %v5870
  %v5872 = vlaneseq
  %v5873 = vshrl.u32 %v5872, 7
  %v5874 = vsub.s32 %v5871, %v5873
  %v5875 = vrot.slane %v5853, %v5874
  %v5877 = vunpack.c.l.s4 1966171168
  %v5878 = vunpack.c.0.s8 %v5877
  %v5879 = vlaneseq
  %v5880 = vshrl.u32 %v5879, 7
  %v5881 = vsub.s32 %v5878, %v5880
  %v5882 = vrot.slane %v5854, %v5881
  %v5883 = vcombine.low %v5861, %v5868
  %v5884 = vcombine.low %v5875, %v5882
  %v5886 = vunpack.c.l.s4 1966171168
  %v5887 = vunpack.c.0.s8 %v5886
  %v5888 = vlaneseq
  %v5889 = vshrl.u32 %v5888, 7
  %v5890 = vsub.s32 %v5887, %v5889
  %v5891 = vrot.slane %v5883, %v5890
  %v5893 = vunpack.c.l.s4 1966171168
  %v5894 = vunpack.c.0.s8 %v5893
  %v5895 = vlaneseq
  %v5896 = vshrl.u32 %v5895, 7
  %v5897 = vsub.s32 %v5894, %v5896
  %v5898 = vrot.slane %v5884, %v5897
  %v5899 = vcombine.low %v5891, %v5898
  %v5900 = vcombine.low %v3022, %v3026
  %v5901 = vcombine.low %v3030, %v3034
  %v5902 = vcombine.low %v3038, %v3042
  %v5903 = vcombine.low %v3046, %v3050
  %v5905 = vunpack.c.l.s4 1966171168
  %v5906 = vunpack.c.0.s8 %v5905
  %v5907 = vlaneseq
  %v5908 = vshrl.u32 %v5907, 7
  %v5909 = vsub.s32 %v5906, %v5908
  %v5910 = vrot.slane %v5900, %v5909
  %v5912 = vunpack.c.l.s4 1966171168
  %v5913 = vunpack.c.0.s8 %v5912
  %v5914 = vlaneseq
  %v5915 = vshrl.u32 %v5914, 7
  %v5916 = vsub.s32 %v5913, %v5915
  %v5917 = vrot.slane %v5901, %v5916
  %v5919 = vunpack.c.l.s4 1966171168
  %v5920 = vunpack.c.0.s8 %v5919
  %v5921 = vlaneseq
  %v5922 = vshrl.u32 %v5921, 7
  %v5923 = vsub.s32 %v5920, %v5922
  %v5924 = vrot.slane %v5902, %v5923
  %v5926 = vunpack.c.l.s4 1966171168
  %v5927 = vunpack.c.0.s8 %v5926
  %v5928 = vlaneseq
  %v5929 = vshrl.u32 %v5928, 7
  %v5930 = vsub.s32 %v5927, %v5929
  %v5931 = vrot.slane %v5903, %v5930
  %v5932 = vcombine.low %v5910, %v5917
  %v5933 = vcombine.low %v5924, %v5931
  %v5935 = vunpack.c.l.s4 1966171168
  %v5936 = vunpack.c.0.s8 %v5935
  %v5937 = vlaneseq
  %v5938 = vshrl.u32 %v5937, 7
  %v5939 = vsub.s32 %v5936, %v5938
  %v5940 = vrot.slane %v5932, %v5939
  %v5942 = vunpack.c.l.s4 1966171168
  %v5943 = vunpack.c.0.s8 %v5942
  %v5944 = vlaneseq
  %v5945 = vshrl.u32 %v5944, 7
  %v5946 = vsub.s32 %v5943, %v5945
  %v5947 = vrot.slane %v5933, %v5946
  %v5948 = vcombine.low %v5940, %v5947
  %v5949 = vcombine.low %v3054, %v3058
  %v5950 = vcombine.low %v3062, %v3066
  %v5951 = vcombine.low %v3070, %v3074
  %v5952 = vcombine.low %v3078, %v3082
  %v5954 = vunpack.c.l.s4 1966171168
  %v5955 = vunpack.c.0.s8 %v5954
  %v5956 = vlaneseq
  %v5957 = vshrl.u32 %v5956, 7
  %v5958 = vsub.s32 %v5955, %v5957
  %v5959 = vrot.slane %v5949, %v5958
  %v5961 = vunpack.c.l.s4 1966171168
  %v5962 = vunpack.c.0.s8 %v5961
  %v5963 = vlaneseq
  %v5964 = vshrl.u32 %v5963, 7
  %v5965 = vsub.s32 %v5962, %v5964
  %v5966 = vrot.slane %v5950, %v5965
  %v5968 = vunpack.c.l.s4 1966171168
  %v5969 = vunpack.c.0.s8 %v5968
  %v5970 = vlaneseq
  %v5971 = vshrl.u32 %v5970, 7
  %v5972 = vsub.s32 %v5969, %v5971
  %v5973 = vrot.slane %v5951, %v5972
  %v5975 = vunpack.c.l.s4 1966171168
  %v5976 = vunpack.c.0.s8 %v5975
  %v5977 = vlaneseq
  %v5978 = vshrl.u32 %v5977, 7
  %v5979 = vsub.s32 %v5976, %v5978
  %v5980 = vrot.slane %v5952, %v5979
  %v5981 = vcombine.low %v5959, %v5966
  %v5982 = vcombine.low %v5973, %v5980
  %v5984 = vunpack.c.l.s4 1966171168
  %v5985 = vunpack.c.0.s8 %v5984
  %v5986 = vlaneseq
  %v5987 = vshrl.u32 %v5986, 7
  %v5988 = vsub.s32 %v5985, %v5987
  %v5989 = vrot.slane %v5981, %v5988
  %v5991 = vunpack.c.l.s4 1966171168
  %v5992 = vunpack.c.0.s8 %v5991
  %v5993 = vlaneseq
  %v5994 = vshrl.u32 %v5993, 7
  %v5995 = vsub.s32 %v5992, %v5994
  %v5996 = vrot.slane %v5982, %v5995
  %v5997 = vcombine.low %v5989, %v5996
  %v5998 = vcombine.low %v3086, %v3090
  %v5999 = vcombine.low %v3094, %v3098
  %v6000 = vcombine.low %v3102, %v3106
  %v6001 = vcombine.low %v3110, %v3114
  %v6003 = vunpack.c.l.s4 1966171168
  %v6004 = vunpack.c.0.s8 %v6003
  %v6005 = vlaneseq
  %v6006 = vshrl.u32 %v6005, 7
  %v6007 = vsub.s32 %v6004, %v6006
  %v6008 = vrot.slane %v5998, %v6007
  %v6010 = vunpack.c.l.s4 1966171168
  %v6011 = vunpack.c.0.s8 %v6010
  %v6012 = vlaneseq
  %v6013 = vshrl.u32 %v6012, 7
  %v6014 = vsub.s32 %v6011, %v6013
  %v6015 = vrot.slane %v5999, %v6014
  %v6017 = vunpack.c.l.s4 1966171168
  %v6018 = vunpack.c.0.s8 %v6017
  %v6019 = vlaneseq
  %v6020 = vshrl.u32 %v6019, 7
  %v6021 = vsub.s32 %v6018, %v6020
  %v6022 = vrot.slane %v6000, %v6021
  %v6024 = vunpack.c.l.s4 1966171168
  %v6025 = vunpack.c.0.s8 %v6024
  %v6026 = vlaneseq
  %v6027 = vshrl.u32 %v6026, 7
  %v6028 = vsub.s32 %v6025, %v6027
  %v6029 = vrot.slane %v6001, %v6028
  %v6030 = vcombine.low %v6008, %v6015
  %v6031 = vcombine.low %v6022, %v6029
  %v6033 = vunpack.c.l.s4 1966171168
  %v6034 = vunpack.c.0.s8 %v6033
  %v6035 = vlaneseq
  %v6036 = vshrl.u32 %v6035, 7
  %v6037 = vsub.s32 %v6034, %v6036
  %v6038 = vrot.slane %v6030, %v6037
  %v6040 = vunpack.c.l.s4 1966171168
  %v6041 = vunpack.c.0.s8 %v6040
  %v6042 = vlaneseq
  %v6043 = vshrl.u32 %v6042, 7
  %v6044 = vsub.s32 %v6041, %v6043
  %v6045 = vrot.slane %v6031, %v6044
  %v6046 = vcombine.low %v6038, %v6045
  %v6047 = vcombine.low %v3118, %v3122
  %v6048 = vcombine.low %v3126, %v3130
  %v6049 = vcombine.low %v3134, %v3138
  %v6050 = vcombine.low %v3142, %v3146
  %v6052 = vunpack.c.l.s4 1966171168
  %v6053 = vunpack.c.0.s8 %v6052
  %v6054 = vlaneseq
  %v6055 = vshrl.u32 %v6054, 7
  %v6056 = vsub.s32 %v6053, %v6055
  %v6057 = vrot.slane %v6047, %v6056
  %v6059 = vunpack.c.l.s4 1966171168
  %v6060 = vunpack.c.0.s8 %v6059
  %v6061 = vlaneseq
  %v6062 = vshrl.u32 %v6061, 7
  %v6063 = vsub.s32 %v6060, %v6062
  %v6064 = vrot.slane %v6048, %v6063
  %v6066 = vunpack.c.l.s4 1966171168
  %v6067 = vunpack.c.0.s8 %v6066
  %v6068 = vlaneseq
  %v6069 = vshrl.u32 %v6068, 7
  %v6070 = vsub.s32 %v6067, %v6069
  %v6071 = vrot.slane %v6049, %v6070
  %v6073 = vunpack.c.l.s4 1966171168
  %v6074 = vunpack.c.0.s8 %v6073
  %v6075 = vlaneseq
  %v6076 = vshrl.u32 %v6075, 7
  %v6077 = vsub.s32 %v6074, %v6076
  %v6078 = vrot.slane %v6050, %v6077
  %v6079 = vcombine.low %v6057, %v6064
  %v6080 = vcombine.low %v6071, %v6078
  %v6082 = vunpack.c.l.s4 1966171168
  %v6083 = vunpack.c.0.s8 %v6082
  %v6084 = vlaneseq
  %v6085 = vshrl.u32 %v6084, 7
  %v6086 = vsub.s32 %v6083, %v6085
  %v6087 = vrot.slane %v6079, %v6086
  %v6089 = vunpack.c.l.s4 1966171168
  %v6090 = vunpack.c.0.s8 %v6089
  %v6091 = vlaneseq
  %v6092 = vshrl.u32 %v6091, 7
  %v6093 = vsub.s32 %v6090, %v6092
  %v6094 = vrot.slane %v6080, %v6093
  %v6095 = vcombine.low %v6087, %v6094
  %v6096 = vcombine.low %v3150, %v3154
  %v6097 = vcombine.low %v3158, %v3162
  %v6098 = vcombine.low %v3166, %v3170
  %v6099 = vcombine.low %v3174, %v3178
  %v6101 = vunpack.c.l.s4 1966171168
  %v6102 = vunpack.c.0.s8 %v6101
  %v6103 = vlaneseq
  %v6104 = vshrl.u32 %v6103, 7
  %v6105 = vsub.s32 %v6102, %v6104
  %v6106 = vrot.slane %v6096, %v6105
  %v6108 = vunpack.c.l.s4 1966171168
  %v6109 = vunpack.c.0.s8 %v6108
  %v6110 = vlaneseq
  %v6111 = vshrl.u32 %v6110, 7
  %v6112 = vsub.s32 %v6109, %v6111
  %v6113 = vrot.slane %v6097, %v6112
  %v6115 = vunpack.c.l.s4 1966171168
  %v6116 = vunpack.c.0.s8 %v6115
  %v6117 = vlaneseq
  %v6118 = vshrl.u32 %v6117, 7
  %v6119 = vsub.s32 %v6116, %v6118
  %v6120 = vrot.slane %v6098, %v6119
  %v6122 = vunpack.c.l.s4 1966171168
  %v6123 = vunpack.c.0.s8 %v6122
  %v6124 = vlaneseq
  %v6125 = vshrl.u32 %v6124, 7
  %v6126 = vsub.s32 %v6123, %v6125
  %v6127 = vrot.slane %v6099, %v6126
  %v6128 = vcombine.low %v6106, %v6113
  %v6129 = vcombine.low %v6120, %v6127
  %v6131 = vunpack.c.l.s4 1966171168
  %v6132 = vunpack.c.0.s8 %v6131
  %v6133 = vlaneseq
  %v6134 = vshrl.u32 %v6133, 7
  %v6135 = vsub.s32 %v6132, %v6134
  %v6136 = vrot.slane %v6128, %v6135
  %v6138 = vunpack.c.l.s4 1966171168
  %v6139 = vunpack.c.0.s8 %v6138
  %v6140 = vlaneseq
  %v6141 = vshrl.u32 %v6140, 7
  %v6142 = vsub.s32 %v6139, %v6141
  %v6143 = vrot.slane %v6129, %v6142
  %v6144 = vcombine.low %v6136, %v6143
  %v6145 = vcombine.low %v3182, %v3186
  %v6146 = vcombine.low %v3190, %v3194
  %v6147 = vcombine.low %v3198, %v3202
  %v6148 = vcombine.low %v3206, %v3210
  %v6150 = vunpack.c.l.s4 1966171168
  %v6151 = vunpack.c.0.s8 %v6150
  %v6152 = vlaneseq
  %v6153 = vshrl.u32 %v6152, 7
  %v6154 = vsub.s32 %v6151, %v6153
  %v6155 = vrot.slane %v6145, %v6154
  %v6157 = vunpack.c.l.s4 1966171168
  %v6158 = vunpack.c.0.s8 %v6157
  %v6159 = vlaneseq
  %v6160 = vshrl.u32 %v6159, 7
  %v6161 = vsub.s32 %v6158, %v6160
  %v6162 = vrot.slane %v6146, %v6161
  %v6164 = vunpack.c.l.s4 1966171168
  %v6165 = vunpack.c.0.s8 %v6164
  %v6166 = vlaneseq
  %v6167 = vshrl.u32 %v6166, 7
  %v6168 = vsub.s32 %v6165, %v6167
  %v6169 = vrot.slane %v6147, %v6168
  %v6171 = vunpack.c.l.s4 1966171168
  %v6172 = vunpack.c.0.s8 %v6171
  %v6173 = vlaneseq
  %v6174 = vshrl.u32 %v6173, 7
  %v6175 = vsub.s32 %v6172, %v6174
  %v6176 = vrot.slane %v6148, %v6175
  %v6177 = vcombine.low %v6155, %v6162
  %v6178 = vcombine.low %v6169, %v6176
  %v6180 = vunpack.c.l.s4 1966171168
  %v6181 = vunpack.c.0.s8 %v6180
  %v6182 = vlaneseq
  %v6183 = vshrl.u32 %v6182, 7
  %v6184 = vsub.s32 %v6181, %v6183
  %v6185 = vrot.slane %v6177, %v6184
  %v6187 = vunpack.c.l.s4 1966171168
  %v6188 = vunpack.c.0.s8 %v6187
  %v6189 = vlaneseq
  %v6190 = vshrl.u32 %v6189, 7
  %v6191 = vsub.s32 %v6188, %v6190
  %v6192 = vrot.slane %v6178, %v6191
  %v6193 = vcombine.low %v6185, %v6192
  %v6194 = vcombine.low %v3214, %v3218
  %v6195 = vcombine.low %v3222, %v3226
  %v6196 = vcombine.low %v3230, %v3234
  %v6197 = vcombine.low %v3238, %v3242
  %v6199 = vunpack.c.l.s4 1966171168
  %v6200 = vunpack.c.0.s8 %v6199
  %v6201 = vlaneseq
  %v6202 = vshrl.u32 %v6201, 7
  %v6203 = vsub.s32 %v6200, %v6202
  %v6204 = vrot.slane %v6194, %v6203
  %v6206 = vunpack.c.l.s4 1966171168
  %v6207 = vunpack.c.0.s8 %v6206
  %v6208 = vlaneseq
  %v6209 = vshrl.u32 %v6208, 7
  %v6210 = vsub.s32 %v6207, %v6209
  %v6211 = vrot.slane %v6195, %v6210
  %v6213 = vunpack.c.l.s4 1966171168
  %v6214 = vunpack.c.0.s8 %v6213
  %v6215 = vlaneseq
  %v6216 = vshrl.u32 %v6215, 7
  %v6217 = vsub.s32 %v6214, %v6216
  %v6218 = vrot.slane %v6196, %v6217
  %v6220 = vunpack.c.l.s4 1966171168
  %v6221 = vunpack.c.0.s8 %v6220
  %v6222 = vlaneseq
  %v6223 = vshrl.u32 %v6222, 7
  %v6224 = vsub.s32 %v6221, %v6223
  %v6225 = vrot.slane %v6197, %v6224
  %v6226 = vcombine.low %v6204, %v6211
  %v6227 = vcombine.low %v6218, %v6225
  %v6229 = vunpack.c.l.s4 1966171168
  %v6230 = vunpack.c.0.s8 %v6229
  %v6231 = vlaneseq
  %v6232 = vshrl.u32 %v6231, 7
  %v6233 = vsub.s32 %v6230, %v6232
  %v6234 = vrot.slane %v6226, %v6233
  %v6236 = vunpack.c.l.s4 1966171168
  %v6237 = vunpack.c.0.s8 %v6236
  %v6238 = vlaneseq
  %v6239 = vshrl.u32 %v6238, 7
  %v6240 = vsub.s32 %v6237, %v6239
  %v6241 = vrot.slane %v6227, %v6240
  %v6242 = vcombine.low %v6234, %v6241
  %v6243 = vcombine.low %v3246, %v3250
  %v6244 = vcombine.low %v3254, %v3258
  %v6245 = vcombine.low %v3262, %v3266
  %v6246 = vcombine.low %v3270, %v3274
  %v6248 = vunpack.c.l.s4 1966171168
  %v6249 = vunpack.c.0.s8 %v6248
  %v6250 = vlaneseq
  %v6251 = vshrl.u32 %v6250, 7
  %v6252 = vsub.s32 %v6249, %v6251
  %v6253 = vrot.slane %v6243, %v6252
  %v6255 = vunpack.c.l.s4 1966171168
  %v6256 = vunpack.c.0.s8 %v6255
  %v6257 = vlaneseq
  %v6258 = vshrl.u32 %v6257, 7
  %v6259 = vsub.s32 %v6256, %v6258
  %v6260 = vrot.slane %v6244, %v6259
  %v6262 = vunpack.c.l.s4 1966171168
  %v6263 = vunpack.c.0.s8 %v6262
  %v6264 = vlaneseq
  %v6265 = vshrl.u32 %v6264, 7
  %v6266 = vsub.s32 %v6263, %v6265
  %v6267 = vrot.slane %v6245, %v6266
  %v6269 = vunpack.c.l.s4 1966171168
  %v6270 = vunpack.c.0.s8 %v6269
  %v6271 = vlaneseq
  %v6272 = vshrl.u32 %v6271, 7
  %v6273 = vsub.s32 %v6270, %v6272
  %v6274 = vrot.slane %v6246, %v6273
  %v6275 = vcombine.low %v6253, %v6260
  %v6276 = vcombine.low %v6267, %v6274
  %v6278 = vunpack.c.l.s4 1966171168
  %v6279 = vunpack.c.0.s8 %v6278
  %v6280 = vlaneseq
  %v6281 = vshrl.u32 %v6280, 7
  %v6282 = vsub.s32 %v6279, %v6281
  %v6283 = vrot.slane %v6275, %v6282
  %v6285 = vunpack.c.l.s4 1966171168
  %v6286 = vunpack.c.0.s8 %v6285
  %v6287 = vlaneseq
  %v6288 = vshrl.u32 %v6287, 7
  %v6289 = vsub.s32 %v6286, %v6288
  %v6290 = vrot.slane %v6276, %v6289
  %v6291 = vcombine.low %v6283, %v6290
  %v6292 = vcombine.low %v3278, %v3282
  %v6293 = vcombine.low %v3286, %v3290
  %v6294 = vcombine.low %v3294, %v3298
  %v6295 = vcombine.low %v3302, %v3306
  %v6297 = vunpack.c.l.s4 1966171168
  %v6298 = vunpack.c.0.s8 %v6297
  %v6299 = vlaneseq
  %v6300 = vshrl.u32 %v6299, 7
  %v6301 = vsub.s32 %v6298, %v6300
  %v6302 = vrot.slane %v6292, %v6301
  %v6304 = vunpack.c.l.s4 1966171168
  %v6305 = vunpack.c.0.s8 %v6304
  %v6306 = vlaneseq
  %v6307 = vshrl.u32 %v6306, 7
  %v6308 = vsub.s32 %v6305, %v6307
  %v6309 = vrot.slane %v6293, %v6308
  %v6311 = vunpack.c.l.s4 1966171168
  %v6312 = vunpack.c.0.s8 %v6311
  %v6313 = vlaneseq
  %v6314 = vshrl.u32 %v6313, 7
  %v6315 = vsub.s32 %v6312, %v6314
  %v6316 = vrot.slane %v6294, %v6315
  %v6318 = vunpack.c.l.s4 1966171168
  %v6319 = vunpack.c.0.s8 %v6318
  %v6320 = vlaneseq
  %v6321 = vshrl.u32 %v6320, 7
  %v6322 = vsub.s32 %v6319, %v6321
  %v6323 = vrot.slane %v6295, %v6322
  %v6324 = vcombine.low %v6302, %v6309
  %v6325 = vcombine.low %v6316, %v6323
  %v6327 = vunpack.c.l.s4 1966171168
  %v6328 = vunpack.c.0.s8 %v6327
  %v6329 = vlaneseq
  %v6330 = vshrl.u32 %v6329, 7
  %v6331 = vsub.s32 %v6328, %v6330
  %v6332 = vrot.slane %v6324, %v6331
  %v6334 = vunpack.c.l.s4 1966171168
  %v6335 = vunpack.c.0.s8 %v6334
  %v6336 = vlaneseq
  %v6337 = vshrl.u32 %v6336, 7
  %v6338 = vsub.s32 %v6335, %v6337
  %v6339 = vrot.slane %v6325, %v6338
  %v6340 = vcombine.low %v6332, %v6339
  %v6341 = vcombine.low %v3310, %v3314
  %v6342 = vcombine.low %v3318, %v3322
  %v6343 = vcombine.low %v3326, %v3330
  %v6344 = vcombine.low %v3334, %v3338
  %v6346 = vunpack.c.l.s4 1966171168
  %v6347 = vunpack.c.0.s8 %v6346
  %v6348 = vlaneseq
  %v6349 = vshrl.u32 %v6348, 7
  %v6350 = vsub.s32 %v6347, %v6349
  %v6351 = vrot.slane %v6341, %v6350
  %v6353 = vunpack.c.l.s4 1966171168
  %v6354 = vunpack.c.0.s8 %v6353
  %v6355 = vlaneseq
  %v6356 = vshrl.u32 %v6355, 7
  %v6357 = vsub.s32 %v6354, %v6356
  %v6358 = vrot.slane %v6342, %v6357
  %v6360 = vunpack.c.l.s4 1966171168
  %v6361 = vunpack.c.0.s8 %v6360
  %v6362 = vlaneseq
  %v6363 = vshrl.u32 %v6362, 7
  %v6364 = vsub.s32 %v6361, %v6363
  %v6365 = vrot.slane %v6343, %v6364
  %v6367 = vunpack.c.l.s4 1966171168
  %v6368 = vunpack.c.0.s8 %v6367
  %v6369 = vlaneseq
  %v6370 = vshrl.u32 %v6369, 7
  %v6371 = vsub.s32 %v6368, %v6370
  %v6372 = vrot.slane %v6344, %v6371
  %v6373 = vcombine.low %v6351, %v6358
  %v6374 = vcombine.low %v6365, %v6372
  %v6376 = vunpack.c.l.s4 1966171168
  %v6377 = vunpack.c.0.s8 %v6376
  %v6378 = vlaneseq
  %v6379 = vshrl.u32 %v6378, 7
  %v6380 = vsub.s32 %v6377, %v6379
  %v6381 = vrot.slane %v6373, %v6380
  %v6383 = vunpack.c.l.s4 1966171168
  %v6384 = vunpack.c.0.s8 %v6383
  %v6385 = vlaneseq
  %v6386 = vshrl.u32 %v6385, 7
  %v6387 = vsub.s32 %v6384, %v6386
  %v6388 = vrot.slane %v6374, %v6387
  %v6389 = vcombine.low %v6381, %v6388
  %v6390 = vcombine.low %v3342, %v3346
  %v6391 = vcombine.low %v3350, %v3354
  %v6392 = vcombine.low %v3358, %v3362
  %v6393 = vcombine.low %v3366, %v3370
  %v6395 = vunpack.c.l.s4 1966171168
  %v6396 = vunpack.c.0.s8 %v6395
  %v6397 = vlaneseq
  %v6398 = vshrl.u32 %v6397, 7
  %v6399 = vsub.s32 %v6396, %v6398
  %v6400 = vrot.slane %v6390, %v6399
  %v6402 = vunpack.c.l.s4 1966171168
  %v6403 = vunpack.c.0.s8 %v6402
  %v6404 = vlaneseq
  %v6405 = vshrl.u32 %v6404, 7
  %v6406 = vsub.s32 %v6403, %v6405
  %v6407 = vrot.slane %v6391, %v6406
  %v6409 = vunpack.c.l.s4 1966171168
  %v6410 = vunpack.c.0.s8 %v6409
  %v6411 = vlaneseq
  %v6412 = vshrl.u32 %v6411, 7
  %v6413 = vsub.s32 %v6410, %v6412
  %v6414 = vrot.slane %v6392, %v6413
  %v6416 = vunpack.c.l.s4 1966171168
  %v6417 = vunpack.c.0.s8 %v6416
  %v6418 = vlaneseq
  %v6419 = vshrl.u32 %v6418, 7
  %v6420 = vsub.s32 %v6417, %v6419
  %v6421 = vrot.slane %v6393, %v6420
  %v6422 = vcombine.low %v6400, %v6407
  %v6423 = vcombine.low %v6414, %v6421
  %v6425 = vunpack.c.l.s4 1966171168
  %v6426 = vunpack.c.0.s8 %v6425
  %v6427 = vlaneseq
  %v6428 = vshrl.u32 %v6427, 7
  %v6429 = vsub.s32 %v6426, %v6428
  %v6430 = vrot.slane %v6422, %v6429
  %v6432 = vunpack.c.l.s4 1966171168
  %v6433 = vunpack.c.0.s8 %v6432
  %v6434 = vlaneseq
  %v6435 = vshrl.u32 %v6434, 7
  %v6436 = vsub.s32 %v6433, %v6435
  %v6437 = vrot.slane %v6423, %v6436
  %v6438 = vcombine.low %v6430, %v6437
  %v6439 = vcombine.low %v3374, %v3378
  %v6440 = vcombine.low %v3382, %v3386
  %v6441 = vcombine.low %v3390, %v3394
  %v6442 = vcombine.low %v3398, %v3402
  %v6444 = vunpack.c.l.s4 1966171168
  %v6445 = vunpack.c.0.s8 %v6444
  %v6446 = vlaneseq
  %v6447 = vshrl.u32 %v6446, 7
  %v6448 = vsub.s32 %v6445, %v6447
  %v6449 = vrot.slane %v6439, %v6448
  %v6451 = vunpack.c.l.s4 1966171168
  %v6452 = vunpack.c.0.s8 %v6451
  %v6453 = vlaneseq
  %v6454 = vshrl.u32 %v6453, 7
  %v6455 = vsub.s32 %v6452, %v6454
  %v6456 = vrot.slane %v6440, %v6455
  %v6458 = vunpack.c.l.s4 1966171168
  %v6459 = vunpack.c.0.s8 %v6458
  %v6460 = vlaneseq
  %v6461 = vshrl.u32 %v6460, 7
  %v6462 = vsub.s32 %v6459, %v6461
  %v6463 = vrot.slane %v6441, %v6462
  %v6465 = vunpack.c.l.s4 1966171168
  %v6466 = vunpack.c.0.s8 %v6465
  %v6467 = vlaneseq
  %v6468 = vshrl.u32 %v6467, 7
  %v6469 = vsub.s32 %v6466, %v6468
  %v6470 = vrot.slane %v6442, %v6469
  %v6471 = vcombine.low %v6449, %v6456
  %v6472 = vcombine.low %v6463, %v6470
  %v6474 = vunpack.c.l.s4 1966171168
  %v6475 = vunpack.c.0.s8 %v6474
  %v6476 = vlaneseq
  %v6477 = vshrl.u32 %v6476, 7
  %v6478 = vsub.s32 %v6475, %v6477
  %v6479 = vrot.slane %v6471, %v6478
  %v6481 = vunpack.c.l.s4 1966171168
  %v6482 = vunpack.c.0.s8 %v6481
  %v6483 = vlaneseq
  %v6484 = vshrl.u32 %v6483, 7
  %v6485 = vsub.s32 %v6482, %v6484
  %v6486 = vrot.slane %v6472, %v6485
  %v6487 = vcombine.low %v6479, %v6486
  %v6488 = vcombine.low %v3406, %v3410
  %v6489 = vcombine.low %v3414, %v3418
  %v6490 = vcombine.low %v3422, %v3426
  %v6491 = vcombine.low %v3430, %v3434
  %v6493 = vunpack.c.l.s4 1966171168
  %v6494 = vunpack.c.0.s8 %v6493
  %v6495 = vlaneseq
  %v6496 = vshrl.u32 %v6495, 7
  %v6497 = vsub.s32 %v6494, %v6496
  %v6498 = vrot.slane %v6488, %v6497
  %v6500 = vunpack.c.l.s4 1966171168
  %v6501 = vunpack.c.0.s8 %v6500
  %v6502 = vlaneseq
  %v6503 = vshrl.u32 %v6502, 7
  %v6504 = vsub.s32 %v6501, %v6503
  %v6505 = vrot.slane %v6489, %v6504
  %v6507 = vunpack.c.l.s4 1966171168
  %v6508 = vunpack.c.0.s8 %v6507
  %v6509 = vlaneseq
  %v6510 = vshrl.u32 %v6509, 7
  %v6511 = vsub.s32 %v6508, %v6510
  %v6512 = vrot.slane %v6490, %v6511
  %v6514 = vunpack.c.l.s4 1966171168
  %v6515 = vunpack.c.0.s8 %v6514
  %v6516 = vlaneseq
  %v6517 = vshrl.u32 %v6516, 7
  %v6518 = vsub.s32 %v6515, %v6517
  %v6519 = vrot.slane %v6491, %v6518
  %v6520 = vcombine.low %v6498, %v6505
  %v6521 = vcombine.low %v6512, %v6519
  %v6523 = vunpack.c.l.s4 1966171168
  %v6524 = vunpack.c.0.s8 %v6523
  %v6525 = vlaneseq
  %v6526 = vshrl.u32 %v6525, 7
  %v6527 = vsub.s32 %v6524, %v6526
  %v6528 = vrot.slane %v6520, %v6527
  %v6530 = vunpack.c.l.s4 1966171168
  %v6531 = vunpack.c.0.s8 %v6530
  %v6532 = vlaneseq
  %v6533 = vshrl.u32 %v6532, 7
  %v6534 = vsub.s32 %v6531, %v6533
  %v6535 = vrot.slane %v6521, %v6534
  %v6536 = vcombine.low %v6528, %v6535
  %v6537 = vcombine.low %v3438, %v3442
  %v6538 = vcombine.low %v3446, %v3450
  %v6539 = vcombine.low %v3454, %v3458
  %v6540 = vcombine.low %v3462, %v3466
  %v6542 = vunpack.c.l.s4 1966171168
  %v6543 = vunpack.c.0.s8 %v6542
  %v6544 = vlaneseq
  %v6545 = vshrl.u32 %v6544, 7
  %v6546 = vsub.s32 %v6543, %v6545
  %v6547 = vrot.slane %v6537, %v6546
  %v6549 = vunpack.c.l.s4 1966171168
  %v6550 = vunpack.c.0.s8 %v6549
  %v6551 = vlaneseq
  %v6552 = vshrl.u32 %v6551, 7
  %v6553 = vsub.s32 %v6550, %v6552
  %v6554 = vrot.slane %v6538, %v6553
  %v6556 = vunpack.c.l.s4 1966171168
  %v6557 = vunpack.c.0.s8 %v6556
  %v6558 = vlaneseq
  %v6559 = vshrl.u32 %v6558, 7
  %v6560 = vsub.s32 %v6557, %v6559
  %v6561 = vrot.slane %v6539, %v6560
  %v6563 = vunpack.c.l.s4 1966171168
  %v6564 = vunpack.c.0.s8 %v6563
  %v6565 = vlaneseq
  %v6566 = vshrl.u32 %v6565, 7
  %v6567 = vsub.s32 %v6564, %v6566
  %v6568 = vrot.slane %v6540, %v6567
  %v6569 = vcombine.low %v6547, %v6554
  %v6570 = vcombine.low %v6561, %v6568
  %v6572 = vunpack.c.l.s4 1966171168
  %v6573 = vunpack.c.0.s8 %v6572
  %v6574 = vlaneseq
  %v6575 = vshrl.u32 %v6574, 7
  %v6576 = vsub.s32 %v6573, %v6575
  %v6577 = vrot.slane %v6569, %v6576
  %v6579 = vunpack.c.l.s4 1966171168
  %v6580 = vunpack.c.0.s8 %v6579
  %v6581 = vlaneseq
  %v6582 = vshrl.u32 %v6581, 7
  %v6583 = vsub.s32 %v6580, %v6582
  %v6584 = vrot.slane %v6570, %v6583
  %v6585 = vcombine.low %v6577, %v6584
  %v6586 = vcombine.low %v3470, %v3474
  %v6587 = vcombine.low %v3478, %v3482
  %v6588 = vcombine.low %v3486, %v3490
  %v6589 = vcombine.low %v3494, %v3498
  %v6591 = vunpack.c.l.s4 1966171168
  %v6592 = vunpack.c.0.s8 %v6591
  %v6593 = vlaneseq
  %v6594 = vshrl.u32 %v6593, 7
  %v6595 = vsub.s32 %v6592, %v6594
  %v6596 = vrot.slane %v6586, %v6595
  %v6598 = vunpack.c.l.s4 1966171168
  %v6599 = vunpack.c.0.s8 %v6598
  %v6600 = vlaneseq
  %v6601 = vshrl.u32 %v6600, 7
  %v6602 = vsub.s32 %v6599, %v6601
  %v6603 = vrot.slane %v6587, %v6602
  %v6605 = vunpack.c.l.s4 1966171168
  %v6606 = vunpack.c.0.s8 %v6605
  %v6607 = vlaneseq
  %v6608 = vshrl.u32 %v6607, 7
  %v6609 = vsub.s32 %v6606, %v6608
  %v6610 = vrot.slane %v6588, %v6609
  %v6612 = vunpack.c.l.s4 1966171168
  %v6613 = vunpack.c.0.s8 %v6612
  %v6614 = vlaneseq
  %v6615 = vshrl.u32 %v6614, 7
  %v6616 = vsub.s32 %v6613, %v6615
  %v6617 = vrot.slane %v6589, %v6616
  %v6618 = vcombine.low %v6596, %v6603
  %v6619 = vcombine.low %v6610, %v6617
  %v6621 = vunpack.c.l.s4 1966171168
  %v6622 = vunpack.c.0.s8 %v6621
  %v6623 = vlaneseq
  %v6624 = vshrl.u32 %v6623, 7
  %v6625 = vsub.s32 %v6622, %v6624
  %v6626 = vrot.slane %v6618, %v6625
  %v6628 = vunpack.c.l.s4 1966171168
  %v6629 = vunpack.c.0.s8 %v6628
  %v6630 = vlaneseq
  %v6631 = vshrl.u32 %v6630, 7
  %v6632 = vsub.s32 %v6629, %v6631
  %v6633 = vrot.slane %v6619, %v6632
  %v6634 = vcombine.low %v6626, %v6633
  %6635 = vset.pattern.permute.xlu0 0
  %6636 = vperm.xlu0 %6635, %v3547
  %v6637 = vpop.permute.xlu0 %6636
  %6638 = vset.pattern.permute.xlu0 0
  %6639 = vperm.xlu0 %6638, %v3596
  %v6640 = vpop.permute.xlu0 %6639
  %6641 = vset.pattern.permute.xlu0 0
  %6642 = vperm.xlu0 %6641, %v3645
  %v6643 = vpop.permute.xlu0 %6642
  %6644 = vset.pattern.permute.xlu0 0
  %6645 = vperm.xlu0 %6644, %v3694
  %v6646 = vpop.permute.xlu0 %6645
  %6647 = vset.pattern.permute.xlu0 0
  %6648 = vperm.xlu0 %6647, %v3743
  %v6649 = vpop.permute.xlu0 %6648
  %6650 = vset.pattern.permute.xlu0 0
  %6651 = vperm.xlu0 %6650, %v3792
  %v6652 = vpop.permute.xlu0 %6651
  %6653 = vset.pattern.permute.xlu0 0
  %6654 = vperm.xlu0 %6653, %v3841
  %v6655 = vpop.permute.xlu0 %6654
  %6656 = vset.pattern.permute.xlu0 0
  %6657 = vperm.xlu0 %6656, %v3890
  %v6658 = vpop.permute.xlu0 %6657
  %6659 = vset.pattern.permute.xlu0 0
  %6660 = vperm.xlu0 %6659, %v3939
  %v6661 = vpop.permute.xlu0 %6660
  %6662 = vset.pattern.permute.xlu0 0
  %6663 = vperm.xlu0 %6662, %v3988
  %v6664 = vpop.permute.xlu0 %6663
  %6665 = vset.pattern.permute.xlu0 0
  %6666 = vperm.xlu0 %6665, %v4037
  %v6667 = vpop.permute.xlu0 %6666
  %6668 = vset.pattern.permute.xlu0 0
  %6669 = vperm.xlu0 %6668, %v4086
  %v6670 = vpop.permute.xlu0 %6669
  %6671 = vset.pattern.permute.xlu0 0
  %6672 = vperm.xlu0 %6671, %v4135
  %v6673 = vpop.permute.xlu0 %6672
  %6674 = vset.pattern.permute.xlu0 0
  %6675 = vperm.xlu0 %6674, %v4184
  %v6676 = vpop.permute.xlu0 %6675
  %6677 = vset.pattern.permute.xlu0 0
  %6678 = vperm.xlu0 %6677, %v4233
  %v6679 = vpop.permute.xlu0 %6678
  %6680 = vset.pattern.permute.xlu0 0
  %6681 = vperm.xlu0 %6680, %v4282
  %v6682 = vpop.permute.xlu0 %6681
  %6683 = vset.pattern.permute.xlu0 0
  %6684 = vperm.xlu0 %6683, %v4331
  %v6685 = vpop.permute.xlu0 %6684
  %6686 = vset.pattern.permute.xlu0 0
  %6687 = vperm.xlu0 %6686, %v4380
  %v6688 = vpop.permute.xlu0 %6687
  %6689 = vset.pattern.permute.xlu0 0
  %6690 = vperm.xlu0 %6689, %v4429
  %v6691 = vpop.permute.xlu0 %6690
  %6692 = vset.pattern.permute.xlu0 0
  %6693 = vperm.xlu0 %6692, %v4478
  %v6694 = vpop.permute.xlu0 %6693
  %6695 = vset.pattern.permute.xlu0 0
  %6696 = vperm.xlu0 %6695, %v4527
  %v6697 = vpop.permute.xlu0 %6696
  %6698 = vset.pattern.permute.xlu0 0
  %6699 = vperm.xlu0 %6698, %v4576
  %v6700 = vpop.permute.xlu0 %6699
  %6701 = vset.pattern.permute.xlu0 0
  %6702 = vperm.xlu0 %6701, %v4625
  %v6703 = vpop.permute.xlu0 %6702
  %6704 = vset.pattern.permute.xlu0 0
  %6705 = vperm.xlu0 %6704, %v4674
  %v6706 = vpop.permute.xlu0 %6705
  %6707 = vset.pattern.permute.xlu0 0
  %6708 = vperm.xlu0 %6707, %v4723
  %v6709 = vpop.permute.xlu0 %6708
  %6710 = vset.pattern.permute.xlu0 0
  %6711 = vperm.xlu0 %6710, %v4772
  %v6712 = vpop.permute.xlu0 %6711
  %6713 = vset.pattern.permute.xlu0 0
  %6714 = vperm.xlu0 %6713, %v4821
  %v6715 = vpop.permute.xlu0 %6714
  %6716 = vset.pattern.permute.xlu0 0
  %6717 = vperm.xlu0 %6716, %v4870
  %v6718 = vpop.permute.xlu0 %6717
  %6719 = vset.pattern.permute.xlu0 0
  %6720 = vperm.xlu0 %6719, %v4919
  %v6721 = vpop.permute.xlu0 %6720
  %6722 = vset.pattern.permute.xlu0 0
  %6723 = vperm.xlu0 %6722, %v4968
  %v6724 = vpop.permute.xlu0 %6723
  %6725 = vset.pattern.permute.xlu0 0
  %6726 = vperm.xlu0 %6725, %v5017
  %v6727 = vpop.permute.xlu0 %6726
  %6728 = vset.pattern.permute.xlu0 0
  %6729 = vperm.xlu0 %6728, %v5066
  %v6730 = vpop.permute.xlu0 %6729
  %6731 = vset.pattern.permute.xlu0 0
  %6732 = vperm.xlu0 %6731, %v5115
  %v6733 = vpop.permute.xlu0 %6732
  %6734 = vset.pattern.permute.xlu0 0
  %6735 = vperm.xlu0 %6734, %v5164
  %v6736 = vpop.permute.xlu0 %6735
  %6737 = vset.pattern.permute.xlu0 0
  %6738 = vperm.xlu0 %6737, %v5213
  %v6739 = vpop.permute.xlu0 %6738
  %6740 = vset.pattern.permute.xlu0 0
  %6741 = vperm.xlu0 %6740, %v5262
  %v6742 = vpop.permute.xlu0 %6741
  %6743 = vset.pattern.permute.xlu0 0
  %6744 = vperm.xlu0 %6743, %v5311
  %v6745 = vpop.permute.xlu0 %6744
  %6746 = vset.pattern.permute.xlu0 0
  %6747 = vperm.xlu0 %6746, %v5360
  %v6748 = vpop.permute.xlu0 %6747
  %6749 = vset.pattern.permute.xlu0 0
  %6750 = vperm.xlu0 %6749, %v5409
  %v6751 = vpop.permute.xlu0 %6750
  %6752 = vset.pattern.permute.xlu0 0
  %6753 = vperm.xlu0 %6752, %v5458
  %v6754 = vpop.permute.xlu0 %6753
  %6755 = vset.pattern.permute.xlu0 0
  %6756 = vperm.xlu0 %6755, %v5507
  %v6757 = vpop.permute.xlu0 %6756
  %6758 = vset.pattern.permute.xlu0 0
  %6759 = vperm.xlu0 %6758, %v5556
  %v6760 = vpop.permute.xlu0 %6759
  %6761 = vset.pattern.permute.xlu0 0
  %6762 = vperm.xlu0 %6761, %v5605
  %v6763 = vpop.permute.xlu0 %6762
  %6764 = vset.pattern.permute.xlu0 0
  %6765 = vperm.xlu0 %6764, %v5654
  %v6766 = vpop.permute.xlu0 %6765
  %6767 = vset.pattern.permute.xlu0 0
  %6768 = vperm.xlu0 %6767, %v5703
  %v6769 = vpop.permute.xlu0 %6768
  %6770 = vset.pattern.permute.xlu0 0
  %6771 = vperm.xlu0 %6770, %v5752
  %v6772 = vpop.permute.xlu0 %6771
  %6773 = vset.pattern.permute.xlu0 0
  %6774 = vperm.xlu0 %6773, %v5801
  %v6775 = vpop.permute.xlu0 %6774
  %6776 = vset.pattern.permute.xlu0 0
  %6777 = vperm.xlu0 %6776, %v5850
  %v6778 = vpop.permute.xlu0 %6777
  %6779 = vset.pattern.permute.xlu0 0
  %6780 = vperm.xlu0 %6779, %v5899
  %v6781 = vpop.permute.xlu0 %6780
  %6782 = vset.pattern.permute.xlu0 0
  %6783 = vperm.xlu0 %6782, %v5948
  %v6784 = vpop.permute.xlu0 %6783
  %6785 = vset.pattern.permute.xlu0 0
  %6786 = vperm.xlu0 %6785, %v5997
  %v6787 = vpop.permute.xlu0 %6786
  %6788 = vset.pattern.permute.xlu0 0
  %6789 = vperm.xlu0 %6788, %v6046
  %v6790 = vpop.permute.xlu0 %6789
  %6791 = vset.pattern.permute.xlu0 0
  %6792 = vperm.xlu0 %6791, %v6095
  %v6793 = vpop.permute.xlu0 %6792
  %6794 = vset.pattern.permute.xlu0 0
  %6795 = vperm.xlu0 %6794, %v6144
  %v6796 = vpop.permute.xlu0 %6795
  %6797 = vset.pattern.permute.xlu0 0
  %6798 = vperm.xlu0 %6797, %v6193
  %v6799 = vpop.permute.xlu0 %6798
  %6800 = vset.pattern.permute.xlu0 0
  %6801 = vperm.xlu0 %6800, %v6242
  %v6802 = vpop.permute.xlu0 %6801
  %6803 = vset.pattern.permute.xlu0 0
  %6804 = vperm.xlu0 %6803, %v6291
  %v6805 = vpop.permute.xlu0 %6804
  %6806 = vset.pattern.permute.xlu0 0
  %6807 = vperm.xlu0 %6806, %v6340
  %v6808 = vpop.permute.xlu0 %6807
  %6809 = vset.pattern.permute.xlu0 0
  %6810 = vperm.xlu0 %6809, %v6389
  %v6811 = vpop.permute.xlu0 %6810
  %6812 = vset.pattern.permute.xlu0 0
  %6813 = vperm.xlu0 %6812, %v6438
  %v6814 = vpop.permute.xlu0 %6813
  %6815 = vset.pattern.permute.xlu0 0
  %6816 = vperm.xlu0 %6815, %v6487
  %v6817 = vpop.permute.xlu0 %6816
  %6818 = vset.pattern.permute.xlu0 0
  %6819 = vperm.xlu0 %6818, %v6536
  %v6820 = vpop.permute.xlu0 %6819
  %6821 = vset.pattern.permute.xlu0 0
  %6822 = vperm.xlu0 %6821, %v6585
  %v6823 = vpop.permute.xlu0 %6822
  %6824 = vset.pattern.permute.xlu0 0
  %6825 = vperm.xlu0 %6824, %v6634
  %v6826 = vpop.permute.xlu0 %6825
  %v6827 = vlaneseq
  %v6828 = vand.u32 %v6827, 127
  %v6829 = vlaneseq
  %v6830 = vshrl.u32 %v6829, 7
  %v6831 = vsub.s32 %v6828, %v6830
  %v6832 = vrot.slane %v6637, %v6831
  %v6833 = vadd.s32 %v6828, 4294967288
  %v6834 = vlaneseq
  %v6835 = vshrl.u32 %v6834, 7
  %v6836 = vsub.s32 %v6833, %v6835
  %v6837 = vrot.slane %v6640, %v6836
  %vm6838 = vcmask 130112
  %v6839 = vsel %vm6838, %v6837, %v6832
  %v6840 = vadd.s32 %v6828, 4294967280
  %v6841 = vlaneseq
  %v6842 = vshrl.u32 %v6841, 7
  %v6843 = vsub.s32 %v6840, %v6842
  %v6844 = vrot.slane %v6643, %v6843
  %vm6845 = vcmask 195712
  %v6846 = vsel %vm6845, %v6844, %v6839
  %v6847 = vadd.s32 %v6828, 4294967272
  %v6848 = vlaneseq
  %v6849 = vshrl.u32 %v6848, 7
  %v6850 = vsub.s32 %v6847, %v6849
  %v6851 = vrot.slane %v6646, %v6850
  %vm6852 = vcmask 261312
  %v6853 = vsel %vm6852, %v6851, %v6846
  %v6854 = vadd.s32 %v6828, 4294967264
  %v6855 = vlaneseq
  %v6856 = vshrl.u32 %v6855, 7
  %v6857 = vsub.s32 %v6854, %v6856
  %v6858 = vrot.slane %v6649, %v6857
  %vm6859 = vcmask 326912
  %v6860 = vsel %vm6859, %v6858, %v6853
  %v6861 = vadd.s32 %v6828, 4294967256
  %v6862 = vlaneseq
  %v6863 = vshrl.u32 %v6862, 7
  %v6864 = vsub.s32 %v6861, %v6863
  %v6865 = vrot.slane %v6652, %v6864
  %vm6866 = vcmask 392512
  %v6867 = vsel %vm6866, %v6865, %v6860
  %v6868 = vadd.s32 %v6828, 4294967248
  %v6869 = vlaneseq
  %v6870 = vshrl.u32 %v6869, 7
  %v6871 = vsub.s32 %v6868, %v6870
  %v6872 = vrot.slane %v6655, %v6871
  %vm6873 = vcmask 458112
  %v6874 = vsel %vm6873, %v6872, %v6867
  %v6875 = vadd.s32 %v6828, 4294967240
  %v6876 = vlaneseq
  %v6877 = vshrl.u32 %v6876, 7
  %v6878 = vsub.s32 %v6875, %v6877
  %v6879 = vrot.slane %v6658, %v6878
  %vm6880 = vcmask 523712
  %v6881 = vsel %vm6880, %v6879, %v6874
  %v6882 = vadd.s32 %v6828, 4294967232
  %v6883 = vlaneseq
  %v6884 = vshrl.u32 %v6883, 7
  %v6885 = vsub.s32 %v6882, %v6884
  %v6886 = vrot.slane %v6661, %v6885
  %vm6887 = vcmask 589312
  %v6888 = vsel %vm6887, %v6886, %v6881
  %v6889 = vadd.s32 %v6828, 4294967224
  %v6890 = vlaneseq
  %v6891 = vshrl.u32 %v6890, 7
  %v6892 = vsub.s32 %v6889, %v6891
  %v6893 = vrot.slane %v6664, %v6892
  %vm6894 = vcmask 654912
  %v6895 = vsel %vm6894, %v6893, %v6888
  %v6896 = vadd.s32 %v6828, 4294967216
  %v6897 = vlaneseq
  %v6898 = vshrl.u32 %v6897, 7
  %v6899 = vsub.s32 %v6896, %v6898
  %v6900 = vrot.slane %v6667, %v6899
  %vm6901 = vcmask 720512
  %v6902 = vsel %vm6901, %v6900, %v6895
  %v6903 = vadd.s32 %v6828, 4294967208
  %v6904 = vlaneseq
  %v6905 = vshrl.u32 %v6904, 7
  %v6906 = vsub.s32 %v6903, %v6905
  %v6907 = vrot.slane %v6670, %v6906
  %vm6908 = vcmask 786112
  %v6909 = vsel %vm6908, %v6907, %v6902
  %v6910 = vadd.s32 %v6828, 4294967200
  %v6911 = vlaneseq
  %v6912 = vshrl.u32 %v6911, 7
  %v6913 = vsub.s32 %v6910, %v6912
  %v6914 = vrot.slane %v6673, %v6913
  %vm6915 = vcmask 851712
  %v6916 = vsel %vm6915, %v6914, %v6909
  %v6917 = vadd.s32 %v6828, 4294967192
  %v6918 = vlaneseq
  %v6919 = vshrl.u32 %v6918, 7
  %v6920 = vsub.s32 %v6917, %v6919
  %v6921 = vrot.slane %v6676, %v6920
  %vm6922 = vcmask 917312
  %v6923 = vsel %vm6922, %v6921, %v6916
  %v6924 = vadd.s32 %v6828, 4294967184
  %v6925 = vlaneseq
  %v6926 = vshrl.u32 %v6925, 7
  %v6927 = vsub.s32 %v6924, %v6926
  %v6928 = vrot.slane %v6679, %v6927
  %vm6929 = vcmask 982912
  %v6930 = vsel %vm6929, %v6928, %v6923
  %v6931 = vadd.s32 %v6828, 4294967176
  %v6932 = vlaneseq
  %v6933 = vshrl.u32 %v6932, 7
  %v6934 = vsub.s32 %v6931, %v6933
  %v6935 = vrot.slane %v6682, %v6934
  %vm6936 = vcmask 1048512
  %v6937 = vsel %vm6936, %v6935, %v6930
  %v6938 = vlaneseq
  %v6939 = vshrl.u32 %v6938, 7
  %v6940 = vsub.s32 %v6828, %v6939
  %v6941 = vrot.slane %v6685, %v6940
  %v6942 = vlaneseq
  %v6943 = vshrl.u32 %v6942, 7
  %v6944 = vsub.s32 %v6833, %v6943
  %v6945 = vrot.slane %v6688, %v6944
  %v6946 = vsel %vm6838, %v6945, %v6941
  %v6947 = vlaneseq
  %v6948 = vshrl.u32 %v6947, 7
  %v6949 = vsub.s32 %v6840, %v6948
  %v6950 = vrot.slane %v6691, %v6949
  %v6951 = vsel %vm6845, %v6950, %v6946
  %v6952 = vlaneseq
  %v6953 = vshrl.u32 %v6952, 7
  %v6954 = vsub.s32 %v6847, %v6953
  %v6955 = vrot.slane %v6694, %v6954
  %v6956 = vsel %vm6852, %v6955, %v6951
  %v6957 = vlaneseq
  %v6958 = vshrl.u32 %v6957, 7
  %v6959 = vsub.s32 %v6854, %v6958
  %v6960 = vrot.slane %v6697, %v6959
  %v6961 = vsel %vm6859, %v6960, %v6956
  %v6962 = vlaneseq
  %v6963 = vshrl.u32 %v6962, 7
  %v6964 = vsub.s32 %v6861, %v6963
  %v6965 = vrot.slane %v6700, %v6964
  %v6966 = vsel %vm6866, %v6965, %v6961
  %v6967 = vlaneseq
  %v6968 = vshrl.u32 %v6967, 7
  %v6969 = vsub.s32 %v6868, %v6968
  %v6970 = vrot.slane %v6703, %v6969
  %v6971 = vsel %vm6873, %v6970, %v6966
  %v6972 = vlaneseq
  %v6973 = vshrl.u32 %v6972, 7
  %v6974 = vsub.s32 %v6875, %v6973
  %v6975 = vrot.slane %v6706, %v6974
  %v6976 = vsel %vm6880, %v6975, %v6971
  %v6977 = vlaneseq
  %v6978 = vshrl.u32 %v6977, 7
  %v6979 = vsub.s32 %v6882, %v6978
  %v6980 = vrot.slane %v6709, %v6979
  %v6981 = vsel %vm6887, %v6980, %v6976
  %v6982 = vlaneseq
  %v6983 = vshrl.u32 %v6982, 7
  %v6984 = vsub.s32 %v6889, %v6983
  %v6985 = vrot.slane %v6712, %v6984
  %v6986 = vsel %vm6894, %v6985, %v6981
  %v6987 = vlaneseq
  %v6988 = vshrl.u32 %v6987, 7
  %v6989 = vsub.s32 %v6896, %v6988
  %v6990 = vrot.slane %v6715, %v6989
  %v6991 = vsel %vm6901, %v6990, %v6986
  %v6992 = vlaneseq
  %v6993 = vshrl.u32 %v6992, 7
  %v6994 = vsub.s32 %v6903, %v6993
  %v6995 = vrot.slane %v6718, %v6994
  %v6996 = vsel %vm6908, %v6995, %v6991
  %v6997 = vlaneseq
  %v6998 = vshrl.u32 %v6997, 7
  %v6999 = vsub.s32 %v6910, %v6998
  %v7000 = vrot.slane %v6721, %v6999
  %v7001 = vsel %vm6915, %v7000, %v6996
  %v7002 = vlaneseq
  %v7003 = vshrl.u32 %v7002, 7
  %v7004 = vsub.s32 %v6917, %v7003
  %v7005 = vrot.slane %v6724, %v7004
  %v7006 = vsel %vm6922, %v7005, %v7001
  %v7007 = vlaneseq
  %v7008 = vshrl.u32 %v7007, 7
  %v7009 = vsub.s32 %v6924, %v7008
  %v7010 = vrot.slane %v6727, %v7009
  %v7011 = vsel %vm6929, %v7010, %v7006
  %v7012 = vlaneseq
  %v7013 = vshrl.u32 %v7012, 7
  %v7014 = vsub.s32 %v6931, %v7013
  %v7015 = vrot.slane %v6730, %v7014
  %v7016 = vsel %vm6936, %v7015, %v7011
  %v7017 = vlaneseq
  %v7018 = vshrl.u32 %v7017, 7
  %v7019 = vsub.s32 %v6828, %v7018
  %v7020 = vrot.slane %v6733, %v7019
  %v7021 = vlaneseq
  %v7022 = vshrl.u32 %v7021, 7
  %v7023 = vsub.s32 %v6833, %v7022
  %v7024 = vrot.slane %v6736, %v7023
  %v7025 = vsel %vm6838, %v7024, %v7020
  %v7026 = vlaneseq
  %v7027 = vshrl.u32 %v7026, 7
  %v7028 = vsub.s32 %v6840, %v7027
  %v7029 = vrot.slane %v6739, %v7028
  %v7030 = vsel %vm6845, %v7029, %v7025
  %v7031 = vlaneseq
  %v7032 = vshrl.u32 %v7031, 7
  %v7033 = vsub.s32 %v6847, %v7032
  %v7034 = vrot.slane %v6742, %v7033
  %v7035 = vsel %vm6852, %v7034, %v7030
  %v7036 = vlaneseq
  %v7037 = vshrl.u32 %v7036, 7
  %v7038 = vsub.s32 %v6854, %v7037
  %v7039 = vrot.slane %v6745, %v7038
  %v7040 = vsel %vm6859, %v7039, %v7035
  %v7041 = vlaneseq
  %v7042 = vshrl.u32 %v7041, 7
  %v7043 = vsub.s32 %v6861, %v7042
  %v7044 = vrot.slane %v6748, %v7043
  %v7045 = vsel %vm6866, %v7044, %v7040
  %v7046 = vlaneseq
  %v7047 = vshrl.u32 %v7046, 7
  %v7048 = vsub.s32 %v6868, %v7047
  %v7049 = vrot.slane %v6751, %v7048
  %v7050 = vsel %vm6873, %v7049, %v7045
  %v7051 = vlaneseq
  %v7052 = vshrl.u32 %v7051, 7
  %v7053 = vsub.s32 %v6875, %v7052
  %v7054 = vrot.slane %v6754, %v7053
  %v7055 = vsel %vm6880, %v7054, %v7050
  %v7056 = vlaneseq
  %v7057 = vshrl.u32 %v7056, 7
  %v7058 = vsub.s32 %v6882, %v7057
  %v7059 = vrot.slane %v6757, %v7058
  %v7060 = vsel %vm6887, %v7059, %v7055
  %v7061 = vlaneseq
  %v7062 = vshrl.u32 %v7061, 7
  %v7063 = vsub.s32 %v6889, %v7062
  %v7064 = vrot.slane %v6760, %v7063
  %v7065 = vsel %vm6894, %v7064, %v7060
  %v7066 = vlaneseq
  %v7067 = vshrl.u32 %v7066, 7
  %v7068 = vsub.s32 %v6896, %v7067
  %v7069 = vrot.slane %v6763, %v7068
  %v7070 = vsel %vm6901, %v7069, %v7065
  %v7071 = vlaneseq
  %v7072 = vshrl.u32 %v7071, 7
  %v7073 = vsub.s32 %v6903, %v7072
  %v7074 = vrot.slane %v6766, %v7073
  %v7075 = vsel %vm6908, %v7074, %v7070
  %v7076 = vlaneseq
  %v7077 = vshrl.u32 %v7076, 7
  %v7078 = vsub.s32 %v6910, %v7077
  %v7079 = vrot.slane %v6769, %v7078
  %v7080 = vsel %vm6915, %v7079, %v7075
  %v7081 = vlaneseq
  %v7082 = vshrl.u32 %v7081, 7
  %v7083 = vsub.s32 %v6917, %v7082
  %v7084 = vrot.slane %v6772, %v7083
  %v7085 = vsel %vm6922, %v7084, %v7080
  %v7086 = vlaneseq
  %v7087 = vshrl.u32 %v7086, 7
  %v7088 = vsub.s32 %v6924, %v7087
  %v7089 = vrot.slane %v6775, %v7088
  %v7090 = vsel %vm6929, %v7089, %v7085
  %v7091 = vlaneseq
  %v7092 = vshrl.u32 %v7091, 7
  %v7093 = vsub.s32 %v6931, %v7092
  %v7094 = vrot.slane %v6778, %v7093
  %v7095 = vsel %vm6936, %v7094, %v7090
  %v7096 = vlaneseq
  %v7097 = vshrl.u32 %v7096, 7
  %v7098 = vsub.s32 %v6828, %v7097
  %v7099 = vrot.slane %v6781, %v7098
  %v7100 = vlaneseq
  %v7101 = vshrl.u32 %v7100, 7
  %v7102 = vsub.s32 %v6833, %v7101
  %v7103 = vrot.slane %v6784, %v7102
  %v7104 = vsel %vm6838, %v7103, %v7099
  %v7105 = vlaneseq
  %v7106 = vshrl.u32 %v7105, 7
  %v7107 = vsub.s32 %v6840, %v7106
  %v7108 = vrot.slane %v6787, %v7107
  %v7109 = vsel %vm6845, %v7108, %v7104
  %v7110 = vlaneseq
  %v7111 = vshrl.u32 %v7110, 7
  %v7112 = vsub.s32 %v6847, %v7111
  %v7113 = vrot.slane %v6790, %v7112
  %v7114 = vsel %vm6852, %v7113, %v7109
  %v7115 = vlaneseq
  %v7116 = vshrl.u32 %v7115, 7
  %v7117 = vsub.s32 %v6854, %v7116
  %v7118 = vrot.slane %v6793, %v7117
  %v7119 = vsel %vm6859, %v7118, %v7114
  %v7120 = vlaneseq
  %v7121 = vshrl.u32 %v7120, 7
  %v7122 = vsub.s32 %v6861, %v7121
  %v7123 = vrot.slane %v6796, %v7122
  %v7124 = vsel %vm6866, %v7123, %v7119
  %v7125 = vlaneseq
  %v7126 = vshrl.u32 %v7125, 7
  %v7127 = vsub.s32 %v6868, %v7126
  %v7128 = vrot.slane %v6799, %v7127
  %v7129 = vsel %vm6873, %v7128, %v7124
  %v7130 = vlaneseq
  %v7131 = vshrl.u32 %v7130, 7
  %v7132 = vsub.s32 %v6875, %v7131
  %v7133 = vrot.slane %v6802, %v7132
  %v7134 = vsel %vm6880, %v7133, %v7129
  %v7135 = vlaneseq
  %v7136 = vshrl.u32 %v7135, 7
  %v7137 = vsub.s32 %v6882, %v7136
  %v7138 = vrot.slane %v6805, %v7137
  %v7139 = vsel %vm6887, %v7138, %v7134
  %v7140 = vlaneseq
  %v7141 = vshrl.u32 %v7140, 7
  %v7142 = vsub.s32 %v6889, %v7141
  %v7143 = vrot.slane %v6808, %v7142
  %v7144 = vsel %vm6894, %v7143, %v7139
  %v7145 = vlaneseq
  %v7146 = vshrl.u32 %v7145, 7
  %v7147 = vsub.s32 %v6896, %v7146
  %v7148 = vrot.slane %v6811, %v7147
  %v7149 = vsel %vm6901, %v7148, %v7144
  %v7150 = vlaneseq
  %v7151 = vshrl.u32 %v7150, 7
  %v7152 = vsub.s32 %v6903, %v7151
  %v7153 = vrot.slane %v6814, %v7152
  %v7154 = vsel %vm6908, %v7153, %v7149
  %v7155 = vlaneseq
  %v7156 = vshrl.u32 %v7155, 7
  %v7157 = vsub.s32 %v6910, %v7156
  %v7158 = vrot.slane %v6817, %v7157
  %v7159 = vsel %vm6915, %v7158, %v7154
  %v7160 = vlaneseq
  %v7161 = vshrl.u32 %v7160, 7
  %v7162 = vsub.s32 %v6917, %v7161
  %v7163 = vrot.slane %v6820, %v7162
  %v7164 = vsel %vm6922, %v7163, %v7159
  %v7165 = vlaneseq
  %v7166 = vshrl.u32 %v7165, 7
  %v7167 = vsub.s32 %v6924, %v7166
  %v7168 = vrot.slane %v6823, %v7167
  %v7169 = vsel %vm6929, %v7168, %v7164
  %v7170 = vlaneseq
  %v7171 = vshrl.u32 %v7170, 7
  %v7172 = vsub.s32 %v6931, %v7171
  %v7173 = vrot.slane %v6826, %v7172
  %v7174 = vsel %vm6936, %v7173, %v7169
  %v7175 = vcombine.low %v6937, %v7016
  %v7176 = vcombine.low %v7095, %v7174
  %v7178 = vunpack.c.l.s4 1966171168
  %v7179 = vunpack.c.0.s8 %v7178
  %v7180 = vlaneseq
  %v7181 = vshrl.u32 %v7180, 7
  %v7182 = vsub.s32 %v7179, %v7181
  %v7183 = vrot.slane %v7175, %v7182
  %v7185 = vunpack.c.l.s4 1966171168
  %v7186 = vunpack.c.0.s8 %v7185
  %v7187 = vlaneseq
  %v7188 = vshrl.u32 %v7187, 7
  %v7189 = vsub.s32 %v7186, %v7188
  %v7190 = vrot.slane %v7176, %v7189
  %v7191 = vcombine.low %v7183, %v7190
  %v7193 = vunpack.c.l.s4 1966171168
  %v7194 = vunpack.c.0.s8 %v7193
  %v7195 = vlaneseq
  %v7196 = vshrl.u32 %v7195, 7
  %v7197 = vsub.s32 %v7194, %v7196
  %v7198 = vrot.slane %v7191, %v7197
  %v7200 = vlaneseq
  %vm7201 = vcmp.ge.s32.totalorder %v7200, 0
  %vm7202 = vcmp.lt.s32.totalorder %v7200, 512
  %vm7203 = vmand %vm7201, %vm7202
  %7204 = vst.msk [vmem:[%s5] sm:$0xf] %vm7203, %v7198
  // Predicated region
  $region22: #{standard_nn_forward.1} parent=0 // pred_check
    _
  $region23: #{standard_nn_forward.1} parent=0 // pred_check_branch
    %7206 = sbr.rel (0) target = $region25
  $region24: #{standard_nn_forward.1} parent=0 // pred_region
    _
  $region25: #{standard_nn_forward.1} parent=0 // pred_fallthru
    _
  // Predicated region
  $region26: #{standard_nn_forward.1} parent=0 // pred_check
    _
  $region27: #{standard_nn_forward.1} parent=0 // pred_check_branch
    %7208 = sbr.rel (0) target = $region29
  $region28: #{standard_nn_forward.1} parent=0 // pred_region
    _
  $region29: #{standard_nn_forward.1} parent=0 // pred_fallthru
    _

</llo_original>
